<compile_context>
chip_gen: v5e
topology: v5e:2x2
jax: 0.10.0
libtpu: 0.0.40
codegen_flags: <defaults>
</compile_context>

<pallas_src>
import functools
import math

import jax
import jax.numpy as jnp
from jax.experimental import pallas as pl
from jax.experimental.pallas import tpu as pltpu


def _hard_sigmoid(x):
    # torch: max(min(x * 0.2 + 0.5, 1.0), 0.0)
    return jnp.maximum(jnp.minimum(x * 0.2 + 0.5, 1.0), 0.0)


def _convlstm_kernel(z_ref, c_ref, w_ref, b_ref, peep_ref,
                     h_out_ref, c_out_ref, *,
                     H, W, kh, kw, Chid, B):
    """One batch tile.

    z_ref   : (B, Hp, Wp, CzP)      zero-padded [x | h | 0] slab, CzP % 128 == 0
    c_ref   : (B, HW, Chid)         c_{t-1}
    w_ref   : (kh*kw, CzP, 4*Chid)  per-tap packed weights, gate order [i|f|c|o]
    b_ref   : (1, 4*Chid)
    peep_ref: (3, HW, Chid)         stacked [Wci, Wcf, Wco]
    outputs : (B, HW, Chid)         h_t, c_t
    """
    HW = H * W
    Cg = 4 * Chid
    CzP = z_ref.shape[-1]

    # ---- fused 4-gate "convolution": kh*kw shifted lane-dense MXU matmuls ----
    # Each tap is a (B*HW, 128) x (128, 4*Chid) contraction accumulated in f32;
    # no im2col matrix is ever materialized (review item 2).
    acc = None
    for idx in range(kh * kw):
        dy, dx = divmod(idx, kw)
        zt = z_ref[:, dy:dy + H, dx:dx + W, :].reshape(B * HW, CzP)
        t = jnp.dot(zt, w_ref[idx], preferred_element_type=jnp.float32)
        acc = t if acc is None else acc + t
    pre = (acc + b_ref[...]).reshape(B, HW, Cg)               # f32

    # ---- gates & state update (gating_mode='mul') ---------------------------
    c_prev = c_ref[...].astype(jnp.float32)                   # (B, HW, Chid)
    wci = peep_ref[0][None]                                   # (1, HW, Chid)
    wcf = peep_ref[1][None]
    wco = peep_ref[2][None]

    p_i = pre[..., 0 * Chid:1 * Chid]
    p_f = pre[..., 1 * Chid:2 * Chid]
    p_c = pre[..., 2 * Chid:3 * Chid]
    p_o = pre[..., 3 * Chid:4 * Chid]

    i = _hard_sigmoid(p_i + wci * c_prev)
    f = _hard_sigmoid(p_f + wcf * c_prev)
    c_cand = jnp.tanh(p_c)
    c_new = f * c_prev + i * c_cand
    o = _hard_sigmoid(p_o + wco * c_new)
    h_new = o * jnp.tanh(c_new)

    h_out_ref[...] = h_new.astype(h_out_ref.dtype)
    c_out_ref[...] = c_new.astype(c_out_ref.dtype)


def convlstm_cell_pallas(x, h_prev, c_prev, params, kernel_size, *,
                         matmul_dtype=jnp.float32):
    """x: (N,H,W,Cin); h_prev,c_prev: (N,H,W,Chid). Returns (Ht, Ct) in NHWC."""
    N, H, W, Cin = x.shape
    Chid = h_prev.shape[-1]
    kh, kw = kernel_size
    # TODO(synk): padding=k//2 matches PyTorch / lax 'SAME' only for odd kernels.
    ph, pw = kh // 2, kw // 2
    Cz = Cin + Chid
    Cg = 4 * Chid
    HW = H * W
    Hp, Wp = H + 2 * ph, W + 2 * pw

    # Lane-dense channel padding for the MXU K dim (review item 1).
    CzP = ((Cz + 127) // 128) * 128

    # Batch tile: keep the matmul M dim filled (<= ~2048 rows) but prefer a
    # grid with >= 2 steps so v7x's second TensorCore is used (review item 4).
    B_TILE, best = 1, None
    for cand in range(N, 0, -1):
        if N % cand or cand * HW > 2048:
            continue
        if best is None:
            best = cand
        if N // cand >= 2:
            best = cand
            break
    if best is not None:
        B_TILE = best
    grid = (N // B_TILE,)

    # ---- lane-dense operand prep (wrapper side; plain XLA ops) ---------------
    # Padded, channel-concatenated slab z = [x | h | 0]: (N, Hp, Wp, 128).
    z = jnp.concatenate([x, h_prev], axis=-1)
    z = jnp.pad(z, ((0, 0), (ph, ph), (pw, pw), (0, CzP - Cz)))
    z = z.astype(matmul_dtype)

    c_flat = c_prev.reshape(N, HW, Chid)

    # Packed per-tap weight (kh*kw, CzP, 4*Chid); zero rows for padded channels.
    w = params["w"].reshape(kh * kw, Cz, Cg)
    w = jnp.pad(w, ((0, 0), (0, CzP - Cz), (0, 0))).astype(matmul_dtype)
    b = params["b"].astype(jnp.float32)                        # (1, 4*Chid)
    peep = jnp.stack([params["wci"], params["wcf"], params["wco"]]
                     ).reshape(3, HW, Chid).astype(jnp.float32)

    kernel = functools.partial(_convlstm_kernel, H=H, W=W, kh=kh, kw=kw,
                               Chid=Chid, B=B_TILE)

    h_new, c_new = pl.pallas_call(
        kernel,
        out_shape=(jax.ShapeDtypeStruct((N, HW, Chid), x.dtype),
                   jax.ShapeDtypeStruct((N, HW, Chid), x.dtype)),
        grid_spec=pltpu.PrefetchScalarGridSpec(
            num_scalar_prefetch=0,
            grid=grid,
            in_specs=[
                pl.BlockSpec((B_TILE, Hp, Wp, CzP), lambda g: (g, 0, 0, 0)),
                pl.BlockSpec((B_TILE, HW, Chid), lambda g: (g, 0, 0)),
                pl.BlockSpec((kh * kw, CzP, Cg), lambda g: (0, 0, 0)),
                pl.BlockSpec((1, Cg), lambda g: (0, 0)),
                pl.BlockSpec((3, HW, Chid), lambda g: (0, 0, 0)),
            ],
            out_specs=[
                pl.BlockSpec((B_TILE, HW, Chid), lambda g: (g, 0, 0)),
                pl.BlockSpec((B_TILE, HW, Chid), lambda g: (g, 0, 0)),
            ]),
        compiler_params=pltpu.CompilerParams(
            dimension_semantics=("parallel",),
            vmem_limit_bytes=32 * 1024 * 1024),
    )(z, c_flat, w, b, peep)

    return (h_new.reshape(N, H, W, Chid), c_new.reshape(N, H, W, Chid))


def init_params(key, input_dim, hidden_dim, input_size, kernel_size):
    """Deterministic synthetic init matching the PyTorch module's shapes.

    8 Conv2d layers (Wxi,Whi,Wxf,Whf,Wxo,Who,Wxc,Whc) with bias, fused into a
    single packed weight (kh*kw*(Cin+Chid), 4*Chid) with gate order [i,f,c,o];
    peepholes Wci/Wcf/Wco = ones; tied biases bi/bf/bc/bo = zeros.
    """
    H, W = input_size
    kh, kw = kernel_size
    Cz = input_dim + hidden_dim
    keys = jax.random.split(key, 16)

    def conv_w(k, cin):
        scale = 1.0 / math.sqrt(cin * kh * kw)
        return jax.random.uniform(k, (kh, kw, cin, hidden_dim),
                                  jnp.float32, -scale, scale)

    def conv_b(k, cin):
        scale = 1.0 / math.sqrt(cin * kh * kw)
        return jax.random.uniform(k, (hidden_dim,), jnp.float32, -scale, scale)

    gate_w, gate_b = [], []
    # gate order: i, f, c, o (each gate: Wx* on input channels, Wh* on hidden)
    for g in range(4):
        wx = conv_w(keys[4 * g + 0], input_dim)
        wh = conv_w(keys[4 * g + 1], hidden_dim)
        bx = conv_b(keys[4 * g + 2], input_dim)
        bh = conv_b(keys[4 * g + 3], hidden_dim)
        tied = jnp.zeros((hidden_dim,), jnp.float32)   # bi/bf/bc/bo (zeros)
        gate_w.append(jnp.concatenate([wx, wh], axis=2))   # (kh,kw,Cz,Chid)
        gate_b.append(bx + bh + tied)

    w = jnp.concatenate(gate_w, axis=-1)                     # (kh,kw,Cz,4*Chid)
    w = w.reshape(kh * kw * Cz, 4 * hidden_dim)              # tap-major, z-chan
    b = jnp.concatenate(gate_b, axis=0).reshape(1, 4 * hidden_dim)

    ones_peep = jnp.ones((H, W, hidden_dim), jnp.float32)    # torch.ones(Chid,H,W)
    return {"w": w, "b": b, "wci": ones_peep, "wcf": ones_peep, "wco": ones_peep}


def convlstm_ref(x, h_prev, c_prev, params, kernel_size):
    """Plain-JAX reference (same math as the PyTorch forward)."""
    kh, kw = kernel_size
    Chid = c_prev.shape[-1]
    z = jnp.concatenate([x, h_prev], axis=-1)
    Cz = z.shape[-1]
    Cg = params["w"].shape[-1]
    w = params["w"].reshape(kh, kw, Cz, Cg)
    pre = jax.lax.conv_general_dilated(
        z, w, window_strides=(1, 1), padding="SAME",
        dimension_numbers=("NHWC", "HWIO", "NHWC"))
    pre = pre + params["b"].reshape(1, 1, 1, Cg)
    p_i, p_f, p_c, p_o = [pre[..., g * Chid:(g + 1) * Chid] for g in range(4)]
    i = _hard_sigmoid(p_i + params["wci"][None] * c_prev)
    f = _hard_sigmoid(p_f + params["wcf"][None] * c_prev)
    c_cand = jnp.tanh(p_c)
    c_new = f * c_prev + i * c_cand
    o = _hard_sigmoid(p_o + params["wco"][None] * c_new)
    h_new = o * jnp.tanh(c_new)
    return h_new, c_new


if __name__ == "__main__":
    # Small shapes consistent with the module: batch=2, input_dim=4,
    # spatial=16x16, hidden_dim=32, kernel_size=(3,3).
    N, Cin, H, W, Chid = 2, 4, 16, 16, 32
    kernel_size = (3, 3)

    key = jax.random.PRNGKey(0)
    kp, kx, kh_, kc = jax.random.split(key, 4)
    params = init_params(kp, Cin, Chid, (H, W), kernel_size)

    # PyTorch inputs are NCHW -> transpose to NHWC for the kernel.
    x_nchw = jax.random.normal(kx, (N, Cin, H, W), jnp.float32)
    h_nchw = jax.random.normal(kh_, (N, Chid, H, W), jnp.float32) * 0.1
    c_nchw = jax.random.normal(kc, (N, Chid, H, W), jnp.float32) * 0.1

    x = jnp.transpose(x_nchw, (0, 2, 3, 1))
    h_prev = jnp.transpose(h_nchw, (0, 2, 3, 1))
    c_prev = jnp.transpose(c_nchw, (0, 2, 3, 1))

    h_gold, c_gold = convlstm_ref(x, h_prev, c_prev, params, kernel_size)

    # f32 MXU-operand path: tight self-check.
    h_new, c_new = convlstm_cell_pallas(x, h_prev, c_prev, params, kernel_size)
    jax.block_until_ready((h_new, c_new))
    assert jnp.allclose(h_new, h_gold, atol=1e-4, rtol=1e-4)
    assert jnp.allclose(c_new, c_gold, atol=1e-4, rtol=1e-4)

    # bf16 MXU-operand path (2x MXU rate on v5e/v6e/v7x; f32 accumulation and
    # f32 gate math are retained) — loose tolerance per the review note.
    h_bf, c_bf = convlstm_cell_pallas(x, h_prev, c_prev, params, kernel_size,
                                      matmul_dtype=jnp.bfloat16)
    jax.block_until_ready((h_bf, c_bf))
    assert jnp.allclose(h_bf, h_gold, atol=5e-2, rtol=5e-2)
    assert jnp.allclose(c_bf, c_gold, atol=5e-2, rtol=5e-2)

    print("KERNEL_OK")
</pallas_src>

<mosaic_0001>
module attributes {stable_mosaic.version = 11 : i64} {
  func.func @_convlstm_kernel(%arg0: i32, %arg1: memref<1x18x18x128xf32, #tpu.memory_space<vmem>>, %arg2: memref<1x256x32xf32, #tpu.memory_space<vmem>>, %arg3: memref<9x128x128xf32, #tpu.memory_space<vmem>>, %arg4: memref<1x128xf32, #tpu.memory_space<vmem>>, %arg5: memref<3x256x32xf32, #tpu.memory_space<vmem>>, %arg6: memref<1x256x32xf32, #tpu.memory_space<vmem>>, %arg7: memref<1x256x32xf32, #tpu.memory_space<vmem>>) attributes {dimension_semantics = [#tpu.dimension_semantics<parallel>], iteration_bounds = array<i64: 2>, scalar_prefetch = 0 : i64, scratch_operands = 0 : i64, tpu.core_type = #tpu.core_type<tc>, window_params = [{transform_indices = @transform_0, window_bounds = array<i64: 1, 18, 18, 128>}, {transform_indices = @transform_1, window_bounds = array<i64: 1, 256, 32>}, {pipeline_mode = #tpu.pipeline_mode<synchronous>, transform_indices = @transform_2, window_bounds = array<i64: 9, 128, 128>}, {pipeline_mode = #tpu.pipeline_mode<synchronous>, transform_indices = @transform_3, window_bounds = array<i64: 1, 128>}, {pipeline_mode = #tpu.pipeline_mode<synchronous>, transform_indices = @transform_4, window_bounds = array<i64: 3, 256, 32>}, {transform_indices = @transform_5, window_bounds = array<i64: 1, 256, 32>}, {transform_indices = @transform_6, window_bounds = array<i64: 1, 256, 32>}]} {
    %c0 = arith.constant 0 : index
    %c0_0 = arith.constant 0 : index
    %c0_1 = arith.constant 0 : index
    %c0_2 = arith.constant 0 : index
    %0 = vector.load %arg1[%c0, %c0_0, %c0_1, %c0_2] : memref<1x18x18x128xf32, #tpu.memory_space<vmem>>, vector<1x16x16x128xf32>
    %1 = vector.shape_cast %0 : vector<1x16x16x128xf32> to vector<256x128xf32>
    %c0_3 = arith.constant 0 : index
    %c0_4 = arith.constant 0 : index
    %c0_5 = arith.constant 0 : index
    %2 = vector.load %arg3[%c0_3, %c0_4, %c0_5] : memref<9x128x128xf32, #tpu.memory_space<vmem>>, vector<1x128x128xf32>
    %3 = vector.shape_cast %2 : vector<1x128x128xf32> to vector<128x128xf32>
    %cst = arith.constant dense<0.000000e+00> : vector<256x128xf32>
    %4 = tpu.matmul %1, %3, %cst {dimension_numbers = #tpu.dot_dimension_numbers<[1], [0], [0], [1], [0, 0, 1, 1], [], []>} : vector<256x128xf32>, vector<128x128xf32>, vector<256x128xf32> -> vector<256x128xf32>
    %c0_6 = arith.constant 0 : index
    %c0_7 = arith.constant 0 : index
    %c1 = arith.constant 1 : index
    %c0_8 = arith.constant 0 : index
    %5 = vector.load %arg1[%c0_6, %c0_7, %c1, %c0_8] : memref<1x18x18x128xf32, #tpu.memory_space<vmem>>, vector<1x16x16x128xf32>
    %6 = vector.shape_cast %5 : vector<1x16x16x128xf32> to vector<256x128xf32>
    %c1_9 = arith.constant 1 : index
    %c0_10 = arith.constant 0 : index
    %c0_11 = arith.constant 0 : index
    %7 = vector.load %arg3[%c1_9, %c0_10, %c0_11] : memref<9x128x128xf32, #tpu.memory_space<vmem>>, vector<1x128x128xf32>
    %8 = vector.shape_cast %7 : vector<1x128x128xf32> to vector<128x128xf32>
    %cst_12 = arith.constant dense<0.000000e+00> : vector<256x128xf32>
    %9 = tpu.matmul %6, %8, %cst_12 {dimension_numbers = #tpu.dot_dimension_numbers<[1], [0], [0], [1], [0, 0, 1, 1], [], []>} : vector<256x128xf32>, vector<128x128xf32>, vector<256x128xf32> -> vector<256x128xf32>
    %10 = arith.addf %4, %9 : vector<256x128xf32>
    %c0_13 = arith.constant 0 : index
    %c0_14 = arith.constant 0 : index
    %c2 = arith.constant 2 : index
    %c0_15 = arith.constant 0 : index
    %11 = vector.load %arg1[%c0_13, %c0_14, %c2, %c0_15] : memref<1x18x18x128xf32, #tpu.memory_space<vmem>>, vector<1x16x16x128xf32>
    %12 = vector.shape_cast %11 : vector<1x16x16x128xf32> to vector<256x128xf32>
    %c2_16 = arith.constant 2 : index
    %c0_17 = arith.constant 0 : index
    %c0_18 = arith.constant 0 : index
    %13 = vector.load %arg3[%c2_16, %c0_17, %c0_18] : memref<9x128x128xf32, #tpu.memory_space<vmem>>, vector<1x128x128xf32>
    %14 = vector.shape_cast %13 : vector<1x128x128xf32> to vector<128x128xf32>
    %cst_19 = arith.constant dense<0.000000e+00> : vector<256x128xf32>
    %15 = tpu.matmul %12, %14, %cst_19 {dimension_numbers = #tpu.dot_dimension_numbers<[1], [0], [0], [1], [0, 0, 1, 1], [], []>} : vector<256x128xf32>, vector<128x128xf32>, vector<256x128xf32> -> vector<256x128xf32>
    %16 = arith.addf %10, %15 : vector<256x128xf32>
    %c0_20 = arith.constant 0 : index
    %c1_21 = arith.constant 1 : index
    %c0_22 = arith.constant 0 : index
    %c0_23 = arith.constant 0 : index
    %17 = vector.load %arg1[%c0_20, %c1_21, %c0_22, %c0_23] : memref<1x18x18x128xf32, #tpu.memory_space<vmem>>, vector<1x16x16x128xf32>
    %18 = vector.shape_cast %17 : vector<1x16x16x128xf32> to vector<256x128xf32>
    %c3 = arith.constant 3 : index
    %c0_24 = arith.constant 0 : index
    %c0_25 = arith.constant 0 : index
    %19 = vector.load %arg3[%c3, %c0_24, %c0_25] : memref<9x128x128xf32, #tpu.memory_space<vmem>>, vector<1x128x128xf32>
    %20 = vector.shape_cast %19 : vector<1x128x128xf32> to vector<128x128xf32>
    %cst_26 = arith.constant dense<0.000000e+00> : vector<256x128xf32>
    %21 = tpu.matmul %18, %20, %cst_26 {dimension_numbers = #tpu.dot_dimension_numbers<[1], [0], [0], [1], [0, 0, 1, 1], [], []>} : vector<256x128xf32>, vector<128x128xf32>, vector<256x128xf32> -> vector<256x128xf32>
    %22 = arith.addf %16, %21 : vector<256x128xf32>
    %c0_27 = arith.constant 0 : index
    %c1_28 = arith.constant 1 : index
    %c1_29 = arith.constant 1 : index
    %c0_30 = arith.constant 0 : index
    %23 = vector.load %arg1[%c0_27, %c1_28, %c1_29, %c0_30] : memref<1x18x18x128xf32, #tpu.memory_space<vmem>>, vector<1x16x16x128xf32>
    %24 = vector.shape_cast %23 : vector<1x16x16x128xf32> to vector<256x128xf32>
    %c4 = arith.constant 4 : index
    %c0_31 = arith.constant 0 : index
    %c0_32 = arith.constant 0 : index
    %25 = vector.load %arg3[%c4, %c0_31, %c0_32] : memref<9x128x128xf32, #tpu.memory_space<vmem>>, vector<1x128x128xf32>
    %26 = vector.shape_cast %25 : vector<1x128x128xf32> to vector<128x128xf32>
    %cst_33 = arith.constant dense<0.000000e+00> : vector<256x128xf32>
    %27 = tpu.matmul %24, %26, %cst_33 {dimension_numbers = #tpu.dot_dimension_numbers<[1], [0], [0], [1], [0, 0, 1, 1], [], []>} : vector<256x128xf32>, vector<128x128xf32>, vector<256x128xf32> -> vector<256x128xf32>
    %28 = arith.addf %22, %27 : vector<256x128xf32>
    %c0_34 = arith.constant 0 : index
    %c1_35 = arith.constant 1 : index
    %c2_36 = arith.constant 2 : index
    %c0_37 = arith.constant 0 : index
    %29 = vector.load %arg1[%c0_34, %c1_35, %c2_36, %c0_37] : memref<1x18x18x128xf32, #tpu.memory_space<vmem>>, vector<1x16x16x128xf32>
    %30 = vector.shape_cast %29 : vector<1x16x16x128xf32> to vector<256x128xf32>
    %c5 = arith.constant 5 : index
    %c0_38 = arith.constant 0 : index
    %c0_39 = arith.constant 0 : index
    %31 = vector.load %arg3[%c5, %c0_38, %c0_39] : memref<9x128x128xf32, #tpu.memory_space<vmem>>, vector<1x128x128xf32>
    %32 = vector.shape_cast %31 : vector<1x128x128xf32> to vector<128x128xf32>
    %cst_40 = arith.constant dense<0.000000e+00> : vector<256x128xf32>
    %33 = tpu.matmul %30, %32, %cst_40 {dimension_numbers = #tpu.dot_dimension_numbers<[1], [0], [0], [1], [0, 0, 1, 1], [], []>} : vector<256x128xf32>, vector<128x128xf32>, vector<256x128xf32> -> vector<256x128xf32>
    %34 = arith.addf %28, %33 : vector<256x128xf32>
    %c0_41 = arith.constant 0 : index
    %c2_42 = arith.constant 2 : index
    %c0_43 = arith.constant 0 : index
    %c0_44 = arith.constant 0 : index
    %35 = vector.load %arg1[%c0_41, %c2_42, %c0_43, %c0_44] : memref<1x18x18x128xf32, #tpu.memory_space<vmem>>, vector<1x16x16x128xf32>
    %36 = vector.shape_cast %35 : vector<1x16x16x128xf32> to vector<256x128xf32>
    %c6 = arith.constant 6 : index
    %c0_45 = arith.constant 0 : index
    %c0_46 = arith.constant 0 : index
    %37 = vector.load %arg3[%c6, %c0_45, %c0_46] : memref<9x128x128xf32, #tpu.memory_space<vmem>>, vector<1x128x128xf32>
    %38 = vector.shape_cast %37 : vector<1x128x128xf32> to vector<128x128xf32>
    %cst_47 = arith.constant dense<0.000000e+00> : vector<256x128xf32>
    %39 = tpu.matmul %36, %38, %cst_47 {dimension_numbers = #tpu.dot_dimension_numbers<[1], [0], [0], [1], [0, 0, 1, 1], [], []>} : vector<256x128xf32>, vector<128x128xf32>, vector<256x128xf32> -> vector<256x128xf32>
    %40 = arith.addf %34, %39 : vector<256x128xf32>
    %c0_48 = arith.constant 0 : index
    %c2_49 = arith.constant 2 : index
    %c1_50 = arith.constant 1 : index
    %c0_51 = arith.constant 0 : index
    %41 = vector.load %arg1[%c0_48, %c2_49, %c1_50, %c0_51] : memref<1x18x18x128xf32, #tpu.memory_space<vmem>>, vector<1x16x16x128xf32>
    %42 = vector.shape_cast %41 : vector<1x16x16x128xf32> to vector<256x128xf32>
    %c7 = arith.constant 7 : index
    %c0_52 = arith.constant 0 : index
    %c0_53 = arith.constant 0 : index
    %43 = vector.load %arg3[%c7, %c0_52, %c0_53] : memref<9x128x128xf32, #tpu.memory_space<vmem>>, vector<1x128x128xf32>
    %44 = vector.shape_cast %43 : vector<1x128x128xf32> to vector<128x128xf32>
    %cst_54 = arith.constant dense<0.000000e+00> : vector<256x128xf32>
    %45 = tpu.matmul %42, %44, %cst_54 {dimension_numbers = #tpu.dot_dimension_numbers<[1], [0], [0], [1], [0, 0, 1, 1], [], []>} : vector<256x128xf32>, vector<128x128xf32>, vector<256x128xf32> -> vector<256x128xf32>
    %46 = arith.addf %40, %45 : vector<256x128xf32>
    %c0_55 = arith.constant 0 : index
    %c2_56 = arith.constant 2 : index
    %c2_57 = arith.constant 2 : index
    %c0_58 = arith.constant 0 : index
    %47 = vector.load %arg1[%c0_55, %c2_56, %c2_57, %c0_58] : memref<1x18x18x128xf32, #tpu.memory_space<vmem>>, vector<1x16x16x128xf32>
    %48 = vector.shape_cast %47 : vector<1x16x16x128xf32> to vector<256x128xf32>
    %c8 = arith.constant 8 : index
    %c0_59 = arith.constant 0 : index
    %c0_60 = arith.constant 0 : index
    %49 = vector.load %arg3[%c8, %c0_59, %c0_60] : memref<9x128x128xf32, #tpu.memory_space<vmem>>, vector<1x128x128xf32>
    %50 = vector.shape_cast %49 : vector<1x128x128xf32> to vector<128x128xf32>
    %cst_61 = arith.constant dense<0.000000e+00> : vector<256x128xf32>
    %51 = tpu.matmul %48, %50, %cst_61 {dimension_numbers = #tpu.dot_dimension_numbers<[1], [0], [0], [1], [0, 0, 1, 1], [], []>} : vector<256x128xf32>, vector<128x128xf32>, vector<256x128xf32> -> vector<256x128xf32>
    %52 = arith.addf %46, %51 : vector<256x128xf32>
    %c0_62 = arith.constant 0 : index
    %c0_63 = arith.constant 0 : index
    %53 = vector.load %arg4[%c0_62, %c0_63] : memref<1x128xf32, #tpu.memory_space<vmem>>, vector<1x128xf32>
    %54 = vector.broadcast %53 : vector<1x128xf32> to vector<256x128xf32>
    %55 = arith.addf %52, %54 : vector<256x128xf32>
    %56 = vector.shape_cast %55 : vector<256x128xf32> to vector<1x256x128xf32>
    %c0_64 = arith.constant 0 : index
    %c0_65 = arith.constant 0 : index
    %c0_66 = arith.constant 0 : index
    %57 = vector.load %arg2[%c0_64, %c0_65, %c0_66] : memref<1x256x32xf32, #tpu.memory_space<vmem>>, vector<1x256x32xf32>
    %c0_67 = arith.constant 0 : index
    %c0_68 = arith.constant 0 : index
    %c0_69 = arith.constant 0 : index
    %58 = vector.load %arg5[%c0_67, %c0_68, %c0_69] : memref<3x256x32xf32, #tpu.memory_space<vmem>>, vector<1x256x32xf32>
    %59 = vector.shape_cast %58 : vector<1x256x32xf32> to vector<256x32xf32>
    %60 = vector.shape_cast %59 : vector<256x32xf32> to vector<1x256x32xf32>
    %c1_70 = arith.constant 1 : index
    %c0_71 = arith.constant 0 : index
    %c0_72 = arith.constant 0 : index
    %61 = vector.load %arg5[%c1_70, %c0_71, %c0_72] : memref<3x256x32xf32, #tpu.memory_space<vmem>>, vector<1x256x32xf32>
    %62 = vector.shape_cast %61 : vector<1x256x32xf32> to vector<256x32xf32>
    %63 = vector.shape_cast %62 : vector<256x32xf32> to vector<1x256x32xf32>
    %c2_73 = arith.constant 2 : index
    %c0_74 = arith.constant 0 : index
    %c0_75 = arith.constant 0 : index
    %64 = vector.load %arg5[%c2_73, %c0_74, %c0_75] : memref<3x256x32xf32, #tpu.memory_space<vmem>>, vector<1x256x32xf32>
    %65 = vector.shape_cast %64 : vector<1x256x32xf32> to vector<256x32xf32>
    %66 = vector.shape_cast %65 : vector<256x32xf32> to vector<1x256x32xf32>
    %67 = vector.extract_strided_slice %56 {offsets = [0, 0, 0], sizes = [1, 256, 32], strides = [1, 1, 1]} : vector<1x256x128xf32> to vector<1x256x32xf32>
    %68 = vector.extract_strided_slice %56 {offsets = [0, 0, 32], sizes = [1, 256, 32], strides = [1, 1, 1]} : vector<1x256x128xf32> to vector<1x256x32xf32>
    %69 = vector.extract_strided_slice %56 {offsets = [0, 0, 64], sizes = [1, 256, 32], strides = [1, 1, 1]} : vector<1x256x128xf32> to vector<1x256x32xf32>
    %70 = vector.extract_strided_slice %56 {offsets = [0, 0, 96], sizes = [1, 256, 32], strides = [1, 1, 1]} : vector<1x256x128xf32> to vector<1x256x32xf32>
    %71 = arith.mulf %60, %57 : vector<1x256x32xf32>
    %72 = arith.addf %67, %71 : vector<1x256x32xf32>
    %cst_76 = arith.constant 2.000000e-01 : f32
    %73 = vector.broadcast %cst_76 : f32 to vector<1x256x32xf32>
    %74 = arith.mulf %72, %73 : vector<1x256x32xf32>
    %cst_77 = arith.constant 5.000000e-01 : f32
    %75 = vector.broadcast %cst_77 : f32 to vector<1x256x32xf32>
    %76 = arith.addf %74, %75 : vector<1x256x32xf32>
    %cst_78 = arith.constant 1.000000e+00 : f32
    %77 = vector.broadcast %cst_78 : f32 to vector<1x256x32xf32>
    %78 = arith.minimumf %76, %77 : vector<1x256x32xf32>
    %cst_79 = arith.constant 0.000000e+00 : f32
    %79 = vector.broadcast %cst_79 : f32 to vector<1x256x32xf32>
    %80 = arith.maximumf %78, %79 : vector<1x256x32xf32>
    %81 = arith.mulf %63, %57 : vector<1x256x32xf32>
    %82 = arith.addf %68, %81 : vector<1x256x32xf32>
    %cst_80 = arith.constant 2.000000e-01 : f32
    %83 = vector.broadcast %cst_80 : f32 to vector<1x256x32xf32>
    %84 = arith.mulf %82, %83 : vector<1x256x32xf32>
    %cst_81 = arith.constant 5.000000e-01 : f32
    %85 = vector.broadcast %cst_81 : f32 to vector<1x256x32xf32>
    %86 = arith.addf %84, %85 : vector<1x256x32xf32>
    %cst_82 = arith.constant 1.000000e+00 : f32
    %87 = vector.broadcast %cst_82 : f32 to vector<1x256x32xf32>
    %88 = arith.minimumf %86, %87 : vector<1x256x32xf32>
    %cst_83 = arith.constant 0.000000e+00 : f32
    %89 = vector.broadcast %cst_83 : f32 to vector<1x256x32xf32>
    %90 = arith.maximumf %88, %89 : vector<1x256x32xf32>
    %91 = math.tanh %69 : vector<1x256x32xf32>
    %92 = arith.mulf %90, %57 : vector<1x256x32xf32>
    %93 = arith.mulf %80, %91 : vector<1x256x32xf32>
    %94 = arith.addf %92, %93 : vector<1x256x32xf32>
    %95 = arith.mulf %66, %94 : vector<1x256x32xf32>
    %96 = arith.addf %70, %95 : vector<1x256x32xf32>
    %cst_84 = arith.constant 2.000000e-01 : f32
    %97 = vector.broadcast %cst_84 : f32 to vector<1x256x32xf32>
    %98 = arith.mulf %96, %97 : vector<1x256x32xf32>
    %cst_85 = arith.constant 5.000000e-01 : f32
    %99 = vector.broadcast %cst_85 : f32 to vector<1x256x32xf32>
    %100 = arith.addf %98, %99 : vector<1x256x32xf32>
    %cst_86 = arith.constant 1.000000e+00 : f32
    %101 = vector.broadcast %cst_86 : f32 to vector<1x256x32xf32>
    %102 = arith.minimumf %100, %101 : vector<1x256x32xf32>
    %cst_87 = arith.constant 0.000000e+00 : f32
    %103 = vector.broadcast %cst_87 : f32 to vector<1x256x32xf32>
    %104 = arith.maximumf %102, %103 : vector<1x256x32xf32>
    %105 = math.tanh %94 : vector<1x256x32xf32>
    %106 = arith.mulf %104, %105 : vector<1x256x32xf32>
    %c0_88 = arith.constant 0 : index
    %c0_89 = arith.constant 0 : index
    %c0_90 = arith.constant 0 : index
    %107 = vector.load %arg6[%c0_88, %c0_89, %c0_90] : memref<1x256x32xf32, #tpu.memory_space<vmem>>, vector<1x256x32xf32>
    tpu.vector_store %arg6[%c0_88, %c0_89, %c0_90], %106 {strides = array<i32>} : memref<1x256x32xf32, #tpu.memory_space<vmem>>, vector<1x256x32xf32>,
    %c0_91 = arith.constant 0 : index
    %c0_92 = arith.constant 0 : index
    %c0_93 = arith.constant 0 : index
    %108 = vector.load %arg7[%c0_91, %c0_92, %c0_93] : memref<1x256x32xf32, #tpu.memory_space<vmem>>, vector<1x256x32xf32>
    tpu.vector_store %arg7[%c0_91, %c0_92, %c0_93], %94 {strides = array<i32>} : memref<1x256x32xf32, #tpu.memory_space<vmem>>, vector<1x256x32xf32>,
    return
  }
  func.func @transform_0(%arg0: i32) -> (i32, i32, i32, i32) {
    %c0_i32 = arith.constant 0 : i32
    %c0_i32_0 = arith.constant 0 : i32
    %c0_i32_1 = arith.constant 0 : i32
    %c0_i32_2 = arith.constant 0 : i32
    return %arg0, %c0_i32, %c0_i32_0, %c0_i32_1 : i32, i32, i32, i32
  }
  func.func @transform_1(%arg0: i32) -> (i32, i32, i32) {
    %c0_i32 = arith.constant 0 : i32
    %c0_i32_0 = arith.constant 0 : i32
    %c0_i32_1 = arith.constant 0 : i32
    return %arg0, %c0_i32, %c0_i32_0 : i32, i32, i32
  }
  func.func @transform_2(%arg0: i32) -> (i32, i32, i32) {
    %c0_i32 = arith.constant 0 : i32
    %c0_i32_0 = arith.constant 0 : i32
    %c0_i32_1 = arith.constant 0 : i32
    %c0_i32_2 = arith.constant 0 : i32
    return %c0_i32, %c0_i32_0, %c0_i32_1 : i32, i32, i32
  }
  func.func @transform_3(%arg0: i32) -> (i32, i32) {
    %c0_i32 = arith.constant 0 : i32
    %c0_i32_0 = arith.constant 0 : i32
    %c0_i32_1 = arith.constant 0 : i32
    return %c0_i32, %c0_i32_0 : i32, i32
  }
  func.func @transform_4(%arg0: i32) -> (i32, i32, i32) {
    %c0_i32 = arith.constant 0 : i32
    %c0_i32_0 = arith.constant 0 : i32
    %c0_i32_1 = arith.constant 0 : i32
    %c0_i32_2 = arith.constant 0 : i32
    return %c0_i32, %c0_i32_0, %c0_i32_1 : i32, i32, i32
  }
  func.func @transform_5(%arg0: i32) -> (i32, i32, i32) {
    %c0_i32 = arith.constant 0 : i32
    %c0_i32_0 = arith.constant 0 : i32
    %c0_i32_1 = arith.constant 0 : i32
    return %arg0, %c0_i32, %c0_i32_0 : i32, i32, i32
  }
  func.func @transform_6(%arg0: i32) -> (i32, i32, i32) {
    %c0_i32 = arith.constant 0 : i32
    %c0_i32_0 = arith.constant 0 : i32
    %c0_i32_1 = arith.constant 0 : i32
    return %arg0, %c0_i32, %c0_i32_0 : i32, i32, i32
  }
}

</mosaic_0001>

<llo_original>
// kernel: tpu_custom_call.1
$region0: #{tpu_custom_call.1}
  #allocation0 [shape = 'u32[]', space=smem, size = 0x4, offset = 0x4, fixed_abs, tag = 'smem constant byte address 0x4 - core index']
  #allocation1 [shape = 'u32[72,128]{1,0:T(1,128)}', space=vmem, size = 0x9000, scoped, tag = 'internal scratch']
  %s0 = inlined_call_operand.vmem [shape: f32[2,18,18,128], index: 0, kind: input, shape index: {}]
  %s1 = inlined_call_operand.vmem [shape: f32[2,256,32], index: 1, kind: input, shape index: {}]
  %s2 = inlined_call_operand.vmem [shape: f32[9,128,128], index: 2, kind: input, shape index: {}]
  %s3 = inlined_call_operand.vmem [shape: f32[1,128], index: 3, kind: input, shape index: {}]
  %s4 = inlined_call_operand.vmem [shape: f32[3,256,32], index: 4, kind: input, shape index: {}]
  %s5 = inlined_call_operand.vmem [shape: f32[2,256,32], index: 5, kind: output, shape index: {0}]
  %s6 = inlined_call_operand.vmem [shape: f32[2,256,32], index: 6, kind: output, shape index: {1}]
  %7 = xla_tuple %s5, %s6
  %s8 = sld [smem:[#allocation0]]
  $region61: #{tpu_custom_call.1} parent=0
    _
  %s10 = ssub.s32 1, %s8
  %s11 = scalar_select 0, %s10, %s8
  loop: start=0, step=1, limit=4
  $region2: #{tpu_custom_call.1} parent=0 // loop_pre_header
    _
  $region3: #{tpu_custom_call.1} parent=0 // loop_header
    %s13 = sphi 0, %s17
    %p14 = scmp.ge.s32.totalorder %s13, 4
    %s23 = sphi 0, %s25
    %s26 = sphi 0, %s23
    %s27 = sphi 0, %s26
    %s43 = sphi 0, %s27
    %s49 = sphi 0, %s51
    %s52 = sphi 0, %s49
    %s53 = sphi 0, %s52
    %s69 = sphi 0, %s53
    %s73 = sphi 0, %s73
    %s75 = sphi 0, %s73
    %s76 = sphi 0, %s75
    %s90 = sphi 0, %s76
    %s94 = sphi 0, %s94
    %s96 = sphi 0, %s94
    %s97 = sphi 0, %s96
    %s111 = sphi 0, %s97
    %s115 = sphi 0, %s115
    %s117 = sphi 0, %s115
    %s118 = sphi 0, %s117
    %s132 = sphi 0, %s118
    %s138 = sphi 0, %s140
    %s141 = sphi 0, %s138
    %s142 = sphi 0, %s141
    %s158 = sphi 0, %s142
    %s164 = sphi 0, %s166
    %s167 = sphi 0, %s164
    %s168 = sphi 0, %s167
    %s184 = sphi 0, %s168
  $region4: #{tpu_custom_call.1} parent=0 // loop_header_branch
    %16 = sbr.rel (%p14) target = $region8
  $region5: #{tpu_custom_call.1} parent=0 // loop_body
    %s18 = ssub.s32 %s13, 1
    %s19 = ssub.s32 %s13, 2
    %s20 = sadd.s32 %s13, 1
    %s21 = ssub.s32 %s13, %s20
    %p22 = scmp.eq.s32.totalorder %s21, 0
    %s24 = sadd.s32 %s23, 1
    %s25 = scalar_select %p22, %s23, %s24
    %p28 = pneg %p22
    %p29 = scmp.eq.s32.totalorder %s13, 1
    %p30 = por %p28, %p29
    %p31 = scmp.ne.s32.totalorder %s23, %s26
    %p32 = scmp.eq.s32.totalorder %s13, 0
    %p33 = por %p31, %p32
    %p34 = scmp.ne.s32.totalorder %s23, %s26
    %p35 = scmp.eq.s32.totalorder %s18, 1
    %p36 = por %p34, %p35
    %p37 = scmp.ne.s32.totalorder %s26, %s27
    %p38 = scmp.eq.s32.totalorder %s18, 0
    %p39 = por %p37, %p38
    %p40 = scmp.ne.s32.totalorder %s26, %s27
    %p41 = scmp.eq.s32.totalorder %s19, 1
    %p42 = por %p40, %p41
    %p44 = scmp.ne.s32.totalorder %s27, %s43
    %p45 = scmp.eq.s32.totalorder %s19, 0
    %p46 = por %p44, %p45
    %s47 = ssub.s32 %s13, %s20
    %p48 = scmp.eq.s32.totalorder %s47, 0
    %s50 = sadd.s32 %s49, 1
    %s51 = scalar_select %p48, %s49, %s50
    %p54 = pneg %p48
    %p55 = scmp.eq.s32.totalorder %s13, 1
    %p56 = por %p54, %p55
    %p57 = scmp.ne.s32.totalorder %s49, %s52
    %p58 = scmp.eq.s32.totalorder %s13, 0
    %p59 = por %p57, %p58
    %p60 = scmp.ne.s32.totalorder %s49, %s52
    %p61 = scmp.eq.s32.totalorder %s18, 1
    %p62 = por %p60, %p61
    %p63 = scmp.ne.s32.totalorder %s52, %s53
    %p64 = scmp.eq.s32.totalorder %s18, 0
    %p65 = por %p63, %p64
    %p66 = scmp.ne.s32.totalorder %s52, %s53
    %p67 = scmp.eq.s32.totalorder %s19, 1
    %p68 = por %p66, %p67
    %p70 = scmp.ne.s32.totalorder %s53, %s69
    %p71 = scmp.eq.s32.totalorder %s19, 0
    %p72 = por %p70, %p71
    %s74 = sadd.s32 %s73, 1
    %p77 = scmp.eq.s32.totalorder %s13, 1
    %p78 = scmp.ne.s32.totalorder %s73, %s75
    %p79 = scmp.eq.s32.totalorder %s13, 0
    %p80 = por %p78, %p79
    %p81 = scmp.ne.s32.totalorder %s73, %s75
    %p82 = scmp.eq.s32.totalorder %s18, 1
    %p83 = por %p81, %p82
    %p84 = scmp.ne.s32.totalorder %s75, %s76
    %p85 = scmp.eq.s32.totalorder %s18, 0
    %p86 = por %p84, %p85
    %p87 = scmp.ne.s32.totalorder %s75, %s76
    %p88 = scmp.eq.s32.totalorder %s19, 1
    %p89 = por %p87, %p88
    %p91 = scmp.ne.s32.totalorder %s76, %s90
    %p92 = scmp.eq.s32.totalorder %s19, 0
    %p93 = por %p91, %p92
    %s95 = sadd.s32 %s94, 1
    %p98 = scmp.eq.s32.totalorder %s13, 1
    %p99 = scmp.ne.s32.totalorder %s94, %s96
    %p100 = scmp.eq.s32.totalorder %s13, 0
    %p101 = por %p99, %p100
    %p102 = scmp.ne.s32.totalorder %s94, %s96
    %p103 = scmp.eq.s32.totalorder %s18, 1
    %p104 = por %p102, %p103
    %p105 = scmp.ne.s32.totalorder %s96, %s97
    %p106 = scmp.eq.s32.totalorder %s18, 0
    %p107 = por %p105, %p106
    %p108 = scmp.ne.s32.totalorder %s96, %s97
    %p109 = scmp.eq.s32.totalorder %s19, 1
    %p110 = por %p108, %p109
    %p112 = scmp.ne.s32.totalorder %s97, %s111
    %p113 = scmp.eq.s32.totalorder %s19, 0
    %p114 = por %p112, %p113
    %s116 = sadd.s32 %s115, 1
    %p119 = scmp.eq.s32.totalorder %s13, 1
    %p120 = scmp.ne.s32.totalorder %s115, %s117
    %p121 = scmp.eq.s32.totalorder %s13, 0
    %p122 = por %p120, %p121
    %p123 = scmp.ne.s32.totalorder %s115, %s117
    %p124 = scmp.eq.s32.totalorder %s18, 1
    %p125 = por %p123, %p124
    %p126 = scmp.ne.s32.totalorder %s117, %s118
    %p127 = scmp.eq.s32.totalorder %s18, 0
    %p128 = por %p126, %p127
    %p129 = scmp.ne.s32.totalorder %s117, %s118
    %p130 = scmp.eq.s32.totalorder %s19, 1
    %p131 = por %p129, %p130
    %p133 = scmp.ne.s32.totalorder %s118, %s132
    %p134 = scmp.eq.s32.totalorder %s19, 0
    %p135 = por %p133, %p134
    %s136 = ssub.s32 %s13, %s20
    %p137 = scmp.eq.s32.totalorder %s136, 0
    %s139 = sadd.s32 %s138, 1
    %s140 = scalar_select %p137, %s138, %s139
    %p143 = pneg %p137
    %p144 = scmp.eq.s32.totalorder %s13, 1
    %p145 = por %p143, %p144
    %p146 = scmp.ne.s32.totalorder %s138, %s141
    %p147 = scmp.eq.s32.totalorder %s13, 0
    %p148 = por %p146, %p147
    %p149 = scmp.ne.s32.totalorder %s138, %s141
    %p150 = scmp.eq.s32.totalorder %s18, 1
    %p151 = por %p149, %p150
    %p152 = scmp.ne.s32.totalorder %s141, %s142
    %p153 = scmp.eq.s32.totalorder %s18, 0
    %p154 = por %p152, %p153
    %p155 = scmp.ne.s32.totalorder %s141, %s142
    %p156 = scmp.eq.s32.totalorder %s19, 1
    %p157 = por %p155, %p156
    %p159 = scmp.ne.s32.totalorder %s142, %s158
    %p160 = scmp.eq.s32.totalorder %s19, 0
    %p161 = por %p159, %p160
    %s162 = ssub.s32 %s13, %s20
    %p163 = scmp.eq.s32.totalorder %s162, 0
    %s165 = sadd.s32 %s164, 1
    %s166 = scalar_select %p163, %s164, %s165
    %p169 = pneg %p163
    %p170 = scmp.eq.s32.totalorder %s13, 1
    %p171 = por %p169, %p170
    %p172 = scmp.ne.s32.totalorder %s164, %s167
    %p173 = scmp.eq.s32.totalorder %s13, 0
    %p174 = por %p172, %p173
    %p175 = scmp.ne.s32.totalorder %s164, %s167
    %p176 = scmp.eq.s32.totalorder %s18, 1
    %p177 = por %p175, %p176
    %p178 = scmp.ne.s32.totalorder %s167, %s168
    %p179 = scmp.eq.s32.totalorder %s18, 0
    %p180 = por %p178, %p179
    %p181 = scmp.ne.s32.totalorder %s167, %s168
    %p182 = scmp.eq.s32.totalorder %s19, 1
    %p183 = por %p181, %p182
    %p185 = scmp.ne.s32.totalorder %s168, %s184
    %p186 = scmp.eq.s32.totalorder %s19, 0
    %p187 = por %p185, %p186
    %p188 = scmp.le.s32.totalorder 1, %s13
    %p189 = scmp.lt.s32.totalorder %s13, 3
    %p190 = pnand %p188, %p189
    %p191 = pneg %p190
    // Predicated region
    $region9: #{tpu_custom_call.1} parent=5 // pred_check
      _
    $region10: #{tpu_custom_call.1} parent=5 // pred_check_branch
      %193 = sbr.rel (%p190) target = $region12
    $region11: #{tpu_custom_call.1} parent=5 // pred_region
      %s194 = ssub.s32 %s13, 1
      // Predicated region
      $region13: #{tpu_custom_call.1} parent=11 // pred_check
        %p195 = pneg %p86
      $region14: #{tpu_custom_call.1} parent=11 // pred_check_branch
        %197 = sbr.rel (%p195) target = $region16
      $region15: #{tpu_custom_call.1} parent=11 // pred_region
        _
      $region16: #{tpu_custom_call.1} parent=11 // pred_fallthru
        _
      // Predicated region
      $region17: #{tpu_custom_call.1} parent=11 // pred_check
        %p198 = pneg %p107
      $region18: #{tpu_custom_call.1} parent=11 // pred_check_branch
        %200 = sbr.rel (%p198) target = $region20
      $region19: #{tpu_custom_call.1} parent=11 // pred_region
        _
      $region20: #{tpu_custom_call.1} parent=11 // pred_fallthru
        _
      // Predicated region
      $region21: #{tpu_custom_call.1} parent=11 // pred_check
        %p201 = pneg %p128
      $region22: #{tpu_custom_call.1} parent=11 // pred_check_branch
        %203 = sbr.rel (%p201) target = $region24
      $region23: #{tpu_custom_call.1} parent=11 // pred_region
        _
      $region24: #{tpu_custom_call.1} parent=11 // pred_fallthru
        _
    $region12: #{tpu_custom_call.1} parent=5 // pred_fallthru
      _
    %p204 = scmp.lt.s32.totalorder %s13, 2
    // Predicated region
    $region25: #{tpu_custom_call.1} parent=5 // pred_check
      %p205 = pneg %p204
    $region26: #{tpu_custom_call.1} parent=5 // pred_check_branch
      %207 = sbr.rel (%p205) target = $region28
    $region27: #{tpu_custom_call.1} parent=5 // pred_region
      // Predicated region
      $region29: #{tpu_custom_call.1} parent=27 // pred_check
        %p208 = pneg %p33
      $region30: #{tpu_custom_call.1} parent=27 // pred_check_branch
        %210 = sbr.rel (%p208) target = $region32
      $region31: #{tpu_custom_call.1} parent=27 // pred_region
        %p211 = scmp.lt.s32.totalorder %s13, 1
        %s212 = scalar_select %p211, %s13, 1
        %s213 = smul.addr %s212, 54
        %s214 = smul.addr %s213, 8
        %s215 = scalar_lea.vmem %s0, %s214
      $region32: #{tpu_custom_call.1} parent=27 // pred_fallthru
        _
      // Predicated region
      $region33: #{tpu_custom_call.1} parent=27 // pred_check
        %p216 = pneg %p59
      $region34: #{tpu_custom_call.1} parent=27 // pred_check_branch
        %218 = sbr.rel (%p216) target = $region36
      $region35: #{tpu_custom_call.1} parent=27 // pred_region
        %p219 = scmp.lt.s32.totalorder %s13, 1
        %s220 = scalar_select %p219, %s13, 1
        %s221 = smul.addr %s220, 32
        %s222 = smul.addr %s221, 8
        %s223 = scalar_lea.vmem %s1, %s222
      $region36: #{tpu_custom_call.1} parent=27 // pred_fallthru
        _
    $region28: #{tpu_custom_call.1} parent=5 // pred_fallthru
      _
    %p224 = scmp.le.s32.totalorder 1, %s13
    %p225 = scmp.lt.s32.totalorder %s13, 3
    %p226 = pnand %p224, %p225
    %p227 = pneg %p226
    // Predicated region
    $region37: #{tpu_custom_call.1} parent=5 // pred_check
      _
    $region38: #{tpu_custom_call.1} parent=5 // pred_check_branch
      %229 = sbr.rel (%p226) target = $region40
    $region39: #{tpu_custom_call.1} parent=5 // pred_region
      %s230 = ssub.s32 %s13, 1
      %p231 = scmp.lt.s32.totalorder %s18, 1
      %s232 = scalar_select %p231, %s18, 1
      %s233 = smul.addr %s232, 54
      %s234 = smul.addr %s233, 8
      %s235 = scalar_lea.vmem %s0, %s234
      %p236 = pneg %p39
      %p237 = pneg %p36
      %p238 = scmp.lt.s32.totalorder %s18, 1
      %s239 = scalar_select %p238, %s18, 1
      %s240 = smul.addr %s239, 32
      %s241 = smul.addr %s240, 8
      %s242 = scalar_lea.vmem %s1, %s241
      %p243 = pneg %p65
      %p244 = pneg %p62
      %p245 = pneg %p86
      %p246 = pneg %p83
      %p247 = pneg %p107
      %p248 = pneg %p104
      %p249 = pneg %p128
      %p250 = pneg %p125
      %p251 = pneg %p154
      %p252 = pneg %p151
      %p253 = scmp.lt.s32.totalorder %s18, 1
      %s254 = scalar_select %p253, %s18, 1
      %s255 = smul.addr %s254, 32
      %s256 = smul.addr %s255, 8
      %s257 = scalar_lea.vmem %s5, %s256
      %p258 = pneg %p180
      %p259 = pneg %p177
      %p260 = scmp.lt.s32.totalorder %s18, 1
      %s261 = scalar_select %p260, %s18, 1
      %s262 = smul.addr %s261, 32
      %s263 = smul.addr %s262, 8
      %s264 = scalar_lea.vmem %s6, %s263
      %p265 = scmp.lt.s32.totalorder %s18, 1
      %s266 = scalar_select %p265, %s18, 1
      %s267 = smul.addr %s266, 54
      %s268 = smul.addr %s267, 8
      %s269 = scalar_lea.vmem %s0, %s268
      %p270 = scmp.lt.s32.totalorder %s18, 1
      %s271 = scalar_select %p270, %s18, 1
      %s272 = smul.addr %s271, 32
      %s273 = smul.addr %s272, 8
      %s274 = scalar_lea.vmem %s1, %s273
      %p275 = scmp.lt.s32.totalorder %s18, 1
      %s276 = scalar_select %p275, %s18, 1
      %s277 = smul.addr %s276, 32
      %s278 = smul.addr %s277, 8
      %s279 = scalar_lea.vmem %s5, %s278
      %p280 = scmp.lt.s32.totalorder %s18, 1
      %s281 = scalar_select %p280, %s18, 1
      %s282 = smul.addr %s281, 32
      %s283 = smul.addr %s282, 8
      %s284 = scalar_lea.vmem %s6, %s283
      %v285 = vld [vmem:[%s269] sm:$0xff]
      %v286 = vld [vmem:[%s269 + $0x8] sm:$0xff]
      %v287 = vld [vmem:[%s269 + $0x18] sm:$0xff]
      %v288 = vld [vmem:[%s269 + $0x20] sm:$0xff]
      %v289 = vld [vmem:[%s269 + $0x30] sm:$0xff]
      %v290 = vld [vmem:[%s269 + $0x38] sm:$0xff]
      %v291 = vld [vmem:[%s269 + $0x48] sm:$0xff]
      %v292 = vld [vmem:[%s269 + $0x50] sm:$0xff]
      %v293 = vld [vmem:[%s269 + $0x60] sm:$0xff]
      %v294 = vld [vmem:[%s269 + $0x68] sm:$0xff]
      %v295 = vld [vmem:[%s269 + $0x78] sm:$0xff]
      %v296 = vld [vmem:[%s269 + $0x80] sm:$0xff]
      %v297 = vld [vmem:[%s269 + $0x90] sm:$0xff]
      %v298 = vld [vmem:[%s269 + $0x98] sm:$0xff]
      %v299 = vld [vmem:[%s269 + $0xa8] sm:$0xff]
      %v300 = vld [vmem:[%s269 + $0xb0] sm:$0xff]
      %v301 = vld [vmem:[%s269 + $0xc0] sm:$0xff]
      %v302 = vld [vmem:[%s269 + $0xc8] sm:$0xff]
      %v303 = vld [vmem:[%s269 + $0xd8] sm:$0xff]
      %v304 = vld [vmem:[%s269 + $0xe0] sm:$0xff]
      %v305 = vld [vmem:[%s269 + $0xf0] sm:$0xff]
      %v306 = vld [vmem:[%s269 + $0xf8] sm:$0xff]
      %v307 = vld [vmem:[%s269 + $0x108] sm:$0xff]
      %v308 = vld [vmem:[%s269 + $0x110] sm:$0xff]
      %v309 = vld [vmem:[%s269 + $0x120] sm:$0xff]
      %v310 = vld [vmem:[%s269 + $0x128] sm:$0xff]
      %v311 = vld [vmem:[%s269 + $0x138] sm:$0xff]
      %v312 = vld [vmem:[%s269 + $0x140] sm:$0xff]
      %v313 = vld [vmem:[%s269 + $0x150] sm:$0xff]
      %v314 = vld [vmem:[%s269 + $0x158] sm:$0xff]
      %v315 = vld [vmem:[%s269 + $0x168] sm:$0xff]
      %v316 = vld [vmem:[%s269 + $0x170] sm:$0xff]
      %v317 = vld [vmem:[%s2] sm:$0xff]
      %v318 = vld [vmem:[%s2 + $0x8] sm:$0xff]
      %v319 = vld [vmem:[%s2 + $0x10] sm:$0xff]
      %v320 = vld [vmem:[%s2 + $0x18] sm:$0xff]
      %v321 = vld [vmem:[%s2 + $0x20] sm:$0xff]
      %v322 = vld [vmem:[%s2 + $0x28] sm:$0xff]
      %v323 = vld [vmem:[%s2 + $0x30] sm:$0xff]
      %v324 = vld [vmem:[%s2 + $0x38] sm:$0xff]
      %v325 = vld [vmem:[%s2 + $0x40] sm:$0xff]
      %v326 = vld [vmem:[%s2 + $0x48] sm:$0xff]
      %v327 = vld [vmem:[%s2 + $0x50] sm:$0xff]
      %v328 = vld [vmem:[%s2 + $0x58] sm:$0xff]
      %v329 = vld [vmem:[%s2 + $0x60] sm:$0xff]
      %v330 = vld [vmem:[%s2 + $0x68] sm:$0xff]
      %v331 = vld [vmem:[%s2 + $0x70] sm:$0xff]
      %v332 = vld [vmem:[%s2 + $0x78] sm:$0xff]
      %v333 = vld [vmem:[%s269 + $0x1] sm:$0xff]
      %v334 = vld [vmem:[%s269 + $0x9] sm:$0xff]
      %v335 = vld [vmem:[%s269 + $0x19] sm:$0xff]
      %v336 = vld [vmem:[%s269 + $0x21] sm:$0xff]
      %v337 = vld [vmem:[%s269 + $0x31] sm:$0xff]
      %v338 = vld [vmem:[%s269 + $0x39] sm:$0xff]
      %v339 = vld [vmem:[%s269 + $0x49] sm:$0xff]
      %v340 = vld [vmem:[%s269 + $0x51] sm:$0xff]
      %v341 = vld [vmem:[%s269 + $0x61] sm:$0xff]
      %v342 = vld [vmem:[%s269 + $0x69] sm:$0xff]
      %v343 = vld [vmem:[%s269 + $0x79] sm:$0xff]
      %v344 = vld [vmem:[%s269 + $0x81] sm:$0xff]
      %v345 = vld [vmem:[%s269 + $0x91] sm:$0xff]
      %v346 = vld [vmem:[%s269 + $0x99] sm:$0xff]
      %v347 = vld [vmem:[%s269 + $0xa9] sm:$0xff]
      %v348 = vld [vmem:[%s269 + $0xb1] sm:$0xff]
      %v349 = vld [vmem:[%s269 + $0xc1] sm:$0xff]
      %v350 = vld [vmem:[%s269 + $0xc9] sm:$0xff]
      %v351 = vld [vmem:[%s269 + $0xd9] sm:$0xff]
      %v352 = vld [vmem:[%s269 + $0xe1] sm:$0xff]
      %v353 = vld [vmem:[%s269 + $0xf1] sm:$0xff]
      %v354 = vld [vmem:[%s269 + $0xf9] sm:$0xff]
      %v355 = vld [vmem:[%s269 + $0x109] sm:$0xff]
      %v356 = vld [vmem:[%s269 + $0x111] sm:$0xff]
      %v357 = vld [vmem:[%s269 + $0x121] sm:$0xff]
      %v358 = vld [vmem:[%s269 + $0x129] sm:$0xff]
      %v359 = vld [vmem:[%s269 + $0x139] sm:$0xff]
      %v360 = vld [vmem:[%s269 + $0x141] sm:$0xff]
      %v361 = vld [vmem:[%s269 + $0x151] sm:$0xff]
      %v362 = vld [vmem:[%s269 + $0x159] sm:$0xff]
      %v363 = vld [vmem:[%s269 + $0x169] sm:$0xff]
      %v364 = vld [vmem:[%s269 + $0x171] sm:$0xff]
      %s365 = scalar_lea.vmem %s2, 128
      %v366 = vld [vmem:[%s365] sm:$0xff]
      %v367 = vld [vmem:[%s365 + $0x8] sm:$0xff]
      %v368 = vld [vmem:[%s365 + $0x10] sm:$0xff]
      %v369 = vld [vmem:[%s365 + $0x18] sm:$0xff]
      %v370 = vld [vmem:[%s365 + $0x20] sm:$0xff]
      %v371 = vld [vmem:[%s365 + $0x28] sm:$0xff]
      %v372 = vld [vmem:[%s365 + $0x30] sm:$0xff]
      %v373 = vld [vmem:[%s365 + $0x38] sm:$0xff]
      %v374 = vld [vmem:[%s365 + $0x40] sm:$0xff]
      %v375 = vld [vmem:[%s365 + $0x48] sm:$0xff]
      %v376 = vld [vmem:[%s365 + $0x50] sm:$0xff]
      %v377 = vld [vmem:[%s365 + $0x58] sm:$0xff]
      %v378 = vld [vmem:[%s365 + $0x60] sm:$0xff]
      %v379 = vld [vmem:[%s365 + $0x68] sm:$0xff]
      %v380 = vld [vmem:[%s365 + $0x70] sm:$0xff]
      %v381 = vld [vmem:[%s365 + $0x78] sm:$0xff]
      %382 = vmatpush.msra.mxu0 %v381
      %383 = vmatpush.msra.mxu0 %v380
      %384 = vmatpush.msra.mxu0 %v379
      %385 = vmatpush.msra.mxu0 %v378
      %386 = vmatpush.msra.mxu0 %v377
      %387 = vmatpush.msra.mxu0 %v376
      %388 = vmatpush.msra.mxu0 %v375
      %389 = vmatpush.msra.mxu0 %v374
      %390 = vmatpush.msra.mxu0 %v373
      %391 = vmatpush.msra.mxu0 %v372
      %392 = vmatpush.msra.mxu0 %v371
      %393 = vmatpush.msra.mxu0 %v370
      %394 = vmatpush.msra.mxu0 %v369
      %395 = vmatpush.msra.mxu0 %v368
      %396 = vmatpush.msra.mxu0 %v367
      %397 = vmatpush.msra.mxu0 %v366
      %398 = vmatmul.f32.gmra.mxu0 %v333
      %v399 = vpop.f32.mrf.mxu0
      %v400 = vadd.f32 0.0, %v399
      %401 = vmatmul.f32.gmra.mxu0 %v334
      %v402 = vpop.f32.mrf.mxu0
      %v403 = vadd.f32 0.0, %v402
      %404 = vmatmul.f32.gmra.mxu0 %v335
      %v405 = vpop.f32.mrf.mxu0
      %v406 = vadd.f32 0.0, %v405
      %407 = vmatmul.f32.gmra.mxu0 %v336
      %v408 = vpop.f32.mrf.mxu0
      %v409 = vadd.f32 0.0, %v408
      %410 = vmatmul.f32.gmra.mxu0 %v337
      %v411 = vpop.f32.mrf.mxu0
      %v412 = vadd.f32 0.0, %v411
      %413 = vmatmul.f32.gmra.mxu0 %v338
      %v414 = vpop.f32.mrf.mxu0
      %v415 = vadd.f32 0.0, %v414
      %416 = vmatmul.f32.gmra.mxu0 %v339
      %v417 = vpop.f32.mrf.mxu0
      %v418 = vadd.f32 0.0, %v417
      %419 = vmatmul.f32.gmra.mxu0 %v340
      %v420 = vpop.f32.mrf.mxu0
      %v421 = vadd.f32 0.0, %v420
      %422 = vmatmul.f32.gmra.mxu0 %v341
      %v423 = vpop.f32.mrf.mxu0
      %v424 = vadd.f32 0.0, %v423
      %425 = vmatmul.f32.gmra.mxu0 %v342
      %v426 = vpop.f32.mrf.mxu0
      %v427 = vadd.f32 0.0, %v426
      %428 = vmatmul.f32.gmra.mxu0 %v343
      %v429 = vpop.f32.mrf.mxu0
      %v430 = vadd.f32 0.0, %v429
      %431 = vmatmul.f32.gmra.mxu0 %v344
      %v432 = vpop.f32.mrf.mxu0
      %v433 = vadd.f32 0.0, %v432
      %434 = vmatmul.f32.gmra.mxu0 %v345
      %v435 = vpop.f32.mrf.mxu0
      %v436 = vadd.f32 0.0, %v435
      %437 = vmatmul.f32.gmra.mxu0 %v346
      %v438 = vpop.f32.mrf.mxu0
      %v439 = vadd.f32 0.0, %v438
      %440 = vmatmul.f32.gmra.mxu0 %v347
      %v441 = vpop.f32.mrf.mxu0
      %v442 = vadd.f32 0.0, %v441
      %443 = vmatmul.f32.gmra.mxu0 %v348
      %v444 = vpop.f32.mrf.mxu0
      %v445 = vadd.f32 0.0, %v444
      %446 = vmatmul.f32.gmra.mxu0 %v349
      %v447 = vpop.f32.mrf.mxu0
      %v448 = vadd.f32 0.0, %v447
      %449 = vmatmul.f32.gmra.mxu0 %v350
      %v450 = vpop.f32.mrf.mxu0
      %v451 = vadd.f32 0.0, %v450
      %452 = vmatmul.f32.gmra.mxu0 %v351
      %v453 = vpop.f32.mrf.mxu0
      %v454 = vadd.f32 0.0, %v453
      %455 = vmatmul.f32.gmra.mxu0 %v352
      %v456 = vpop.f32.mrf.mxu0
      %v457 = vadd.f32 0.0, %v456
      %458 = vmatmul.f32.gmra.mxu0 %v353
      %v459 = vpop.f32.mrf.mxu0
      %v460 = vadd.f32 0.0, %v459
      %461 = vmatmul.f32.gmra.mxu0 %v354
      %v462 = vpop.f32.mrf.mxu0
      %v463 = vadd.f32 0.0, %v462
      %464 = vmatmul.f32.gmra.mxu0 %v355
      %v465 = vpop.f32.mrf.mxu0
      %v466 = vadd.f32 0.0, %v465
      %467 = vmatmul.f32.gmra.mxu0 %v356
      %v468 = vpop.f32.mrf.mxu0
      %v469 = vadd.f32 0.0, %v468
      %470 = vmatmul.f32.gmra.mxu0 %v357
      %v471 = vpop.f32.mrf.mxu0
      %v472 = vadd.f32 0.0, %v471
      %473 = vmatmul.f32.gmra.mxu0 %v358
      %v474 = vpop.f32.mrf.mxu0
      %v475 = vadd.f32 0.0, %v474
      %476 = vmatmul.f32.gmra.mxu0 %v359
      %v477 = vpop.f32.mrf.mxu0
      %v478 = vadd.f32 0.0, %v477
      %479 = vmatmul.f32.gmra.mxu0 %v360
      %v480 = vpop.f32.mrf.mxu0
      %v481 = vadd.f32 0.0, %v480
      %482 = vmatmul.f32.gmra.mxu0 %v361
      %v483 = vpop.f32.mrf.mxu0
      %v484 = vadd.f32 0.0, %v483
      %485 = vmatmul.f32.gmra.mxu0 %v362
      %v486 = vpop.f32.mrf.mxu0
      %v487 = vadd.f32 0.0, %v486
      %488 = vmatmul.f32.gmra.mxu0 %v363
      %v489 = vpop.f32.mrf.mxu0
      %v490 = vadd.f32 0.0, %v489
      %491 = vmatmul.f32.gmra.mxu0 %v364
      %v492 = vpop.f32.mrf.mxu0
      %v493 = vadd.f32 0.0, %v492
      %494 = vdwg.mxu0
      %495 = vmatpush.msra.mxu0 %v332
      %496 = vmatpush.msra.mxu0 %v331
      %497 = vmatpush.msra.mxu0 %v330
      %498 = vmatpush.msra.mxu0 %v329
      %499 = vmatpush.msra.mxu0 %v328
      %500 = vmatpush.msra.mxu0 %v327
      %501 = vmatpush.msra.mxu0 %v326
      %502 = vmatpush.msra.mxu0 %v325
      %503 = vmatpush.msra.mxu0 %v324
      %504 = vmatpush.msra.mxu0 %v323
      %505 = vmatpush.msra.mxu0 %v322
      %506 = vmatpush.msra.mxu0 %v321
      %507 = vmatpush.msra.mxu0 %v320
      %508 = vmatpush.msra.mxu0 %v319
      %509 = vmatpush.msra.mxu0 %v318
      %510 = vmatpush.msra.mxu0 %v317
      %511 = vmatmul.f32.gmra.mxu0 %v285
      %v512 = vpop.f32.mrf.mxu0
      %v513 = vadd.f32 %v400, %v512
      %514 = vmatmul.f32.gmra.mxu0 %v286
      %v515 = vpop.f32.mrf.mxu0
      %v516 = vadd.f32 %v403, %v515
      %517 = vmatmul.f32.gmra.mxu0 %v287
      %v518 = vpop.f32.mrf.mxu0
      %v519 = vadd.f32 %v406, %v518
      %520 = vmatmul.f32.gmra.mxu0 %v288
      %v521 = vpop.f32.mrf.mxu0
      %v522 = vadd.f32 %v409, %v521
      %523 = vmatmul.f32.gmra.mxu0 %v289
      %v524 = vpop.f32.mrf.mxu0
      %v525 = vadd.f32 %v412, %v524
      %526 = vmatmul.f32.gmra.mxu0 %v290
      %v527 = vpop.f32.mrf.mxu0
      %v528 = vadd.f32 %v415, %v527
      %529 = vmatmul.f32.gmra.mxu0 %v291
      %v530 = vpop.f32.mrf.mxu0
      %v531 = vadd.f32 %v418, %v530
      %532 = vmatmul.f32.gmra.mxu0 %v292
      %v533 = vpop.f32.mrf.mxu0
      %v534 = vadd.f32 %v421, %v533
      %535 = vmatmul.f32.gmra.mxu0 %v293
      %v536 = vpop.f32.mrf.mxu0
      %v537 = vadd.f32 %v424, %v536
      %538 = vmatmul.f32.gmra.mxu0 %v294
      %v539 = vpop.f32.mrf.mxu0
      %v540 = vadd.f32 %v427, %v539
      %541 = vmatmul.f32.gmra.mxu0 %v295
      %v542 = vpop.f32.mrf.mxu0
      %v543 = vadd.f32 %v430, %v542
      %544 = vmatmul.f32.gmra.mxu0 %v296
      %v545 = vpop.f32.mrf.mxu0
      %v546 = vadd.f32 %v433, %v545
      %547 = vmatmul.f32.gmra.mxu0 %v297
      %v548 = vpop.f32.mrf.mxu0
      %v549 = vadd.f32 %v436, %v548
      %550 = vmatmul.f32.gmra.mxu0 %v298
      %v551 = vpop.f32.mrf.mxu0
      %v552 = vadd.f32 %v439, %v551
      %553 = vmatmul.f32.gmra.mxu0 %v299
      %v554 = vpop.f32.mrf.mxu0
      %v555 = vadd.f32 %v442, %v554
      %556 = vmatmul.f32.gmra.mxu0 %v300
      %v557 = vpop.f32.mrf.mxu0
      %v558 = vadd.f32 %v445, %v557
      %559 = vmatmul.f32.gmra.mxu0 %v301
      %v560 = vpop.f32.mrf.mxu0
      %v561 = vadd.f32 %v448, %v560
      %562 = vmatmul.f32.gmra.mxu0 %v302
      %v563 = vpop.f32.mrf.mxu0
      %v564 = vadd.f32 %v451, %v563
      %565 = vmatmul.f32.gmra.mxu0 %v303
      %v566 = vpop.f32.mrf.mxu0
      %v567 = vadd.f32 %v454, %v566
      %568 = vmatmul.f32.gmra.mxu0 %v304
      %v569 = vpop.f32.mrf.mxu0
      %v570 = vadd.f32 %v457, %v569
      %571 = vmatmul.f32.gmra.mxu0 %v305
      %v572 = vpop.f32.mrf.mxu0
      %v573 = vadd.f32 %v460, %v572
      %574 = vmatmul.f32.gmra.mxu0 %v306
      %v575 = vpop.f32.mrf.mxu0
      %v576 = vadd.f32 %v463, %v575
      %577 = vmatmul.f32.gmra.mxu0 %v307
      %v578 = vpop.f32.mrf.mxu0
      %v579 = vadd.f32 %v466, %v578
      %580 = vmatmul.f32.gmra.mxu0 %v308
      %v581 = vpop.f32.mrf.mxu0
      %v582 = vadd.f32 %v469, %v581
      %583 = vmatmul.f32.gmra.mxu0 %v309
      %v584 = vpop.f32.mrf.mxu0
      %v585 = vadd.f32 %v472, %v584
      %586 = vmatmul.f32.gmra.mxu0 %v310
      %v587 = vpop.f32.mrf.mxu0
      %v588 = vadd.f32 %v475, %v587
      %589 = vmatmul.f32.gmra.mxu0 %v311
      %v590 = vpop.f32.mrf.mxu0
      %v591 = vadd.f32 %v478, %v590
      %592 = vmatmul.f32.gmra.mxu0 %v312
      %v593 = vpop.f32.mrf.mxu0
      %v594 = vadd.f32 %v481, %v593
      %595 = vmatmul.f32.gmra.mxu0 %v313
      %v596 = vpop.f32.mrf.mxu0
      %v597 = vadd.f32 %v484, %v596
      %598 = vmatmul.f32.gmra.mxu0 %v314
      %v599 = vpop.f32.mrf.mxu0
      %v600 = vadd.f32 %v487, %v599
      %601 = vmatmul.f32.gmra.mxu0 %v315
      %v602 = vpop.f32.mrf.mxu0
      %v603 = vadd.f32 %v490, %v602
      %604 = vmatmul.f32.gmra.mxu0 %v316
      %v605 = vpop.f32.mrf.mxu0
      %v606 = vadd.f32 %v493, %v605
      %607 = vdwg.mxu0
      %v608 = vld [vmem:[%s269 + $0x2] sm:$0xff]
      %v609 = vld [vmem:[%s269 + $0xa] sm:$0xff]
      %v610 = vld [vmem:[%s269 + $0x1a] sm:$0xff]
      %v611 = vld [vmem:[%s269 + $0x22] sm:$0xff]
      %v612 = vld [vmem:[%s269 + $0x32] sm:$0xff]
      %v613 = vld [vmem:[%s269 + $0x3a] sm:$0xff]
      %v614 = vld [vmem:[%s269 + $0x4a] sm:$0xff]
      %v615 = vld [vmem:[%s269 + $0x52] sm:$0xff]
      %v616 = vld [vmem:[%s269 + $0x62] sm:$0xff]
      %v617 = vld [vmem:[%s269 + $0x6a] sm:$0xff]
      %v618 = vld [vmem:[%s269 + $0x7a] sm:$0xff]
      %v619 = vld [vmem:[%s269 + $0x82] sm:$0xff]
      %v620 = vld [vmem:[%s269 + $0x92] sm:$0xff]
      %v621 = vld [vmem:[%s269 + $0x9a] sm:$0xff]
      %v622 = vld [vmem:[%s269 + $0xaa] sm:$0xff]
      %v623 = vld [vmem:[%s269 + $0xb2] sm:$0xff]
      %v624 = vld [vmem:[%s269 + $0xc2] sm:$0xff]
      %v625 = vld [vmem:[%s269 + $0xca] sm:$0xff]
      %v626 = vld [vmem:[%s269 + $0xda] sm:$0xff]
      %v627 = vld [vmem:[%s269 + $0xe2] sm:$0xff]
      %v628 = vld [vmem:[%s269 + $0xf2] sm:$0xff]
      %v629 = vld [vmem:[%s269 + $0xfa] sm:$0xff]
      %v630 = vld [vmem:[%s269 + $0x10a] sm:$0xff]
      %v631 = vld [vmem:[%s269 + $0x112] sm:$0xff]
      %v632 = vld [vmem:[%s269 + $0x122] sm:$0xff]
      %v633 = vld [vmem:[%s269 + $0x12a] sm:$0xff]
      %v634 = vld [vmem:[%s269 + $0x13a] sm:$0xff]
      %v635 = vld [vmem:[%s269 + $0x142] sm:$0xff]
      %v636 = vld [vmem:[%s269 + $0x152] sm:$0xff]
      %v637 = vld [vmem:[%s269 + $0x15a] sm:$0xff]
      %v638 = vld [vmem:[%s269 + $0x16a] sm:$0xff]
      %v639 = vld [vmem:[%s269 + $0x172] sm:$0xff]
      %s640 = scalar_lea.vmem %s2, 256
      %v641 = vld [vmem:[%s640] sm:$0xff]
      %v642 = vld [vmem:[%s640 + $0x8] sm:$0xff]
      %v643 = vld [vmem:[%s640 + $0x10] sm:$0xff]
      %v644 = vld [vmem:[%s640 + $0x18] sm:$0xff]
      %v645 = vld [vmem:[%s640 + $0x20] sm:$0xff]
      %v646 = vld [vmem:[%s640 + $0x28] sm:$0xff]
      %v647 = vld [vmem:[%s640 + $0x30] sm:$0xff]
      %v648 = vld [vmem:[%s640 + $0x38] sm:$0xff]
      %v649 = vld [vmem:[%s640 + $0x40] sm:$0xff]
      %v650 = vld [vmem:[%s640 + $0x48] sm:$0xff]
      %v651 = vld [vmem:[%s640 + $0x50] sm:$0xff]
      %v652 = vld [vmem:[%s640 + $0x58] sm:$0xff]
      %v653 = vld [vmem:[%s640 + $0x60] sm:$0xff]
      %v654 = vld [vmem:[%s640 + $0x68] sm:$0xff]
      %v655 = vld [vmem:[%s640 + $0x70] sm:$0xff]
      %v656 = vld [vmem:[%s640 + $0x78] sm:$0xff]
      %657 = vmatpush.msra.mxu0 %v656
      %658 = vmatpush.msra.mxu0 %v655
      %659 = vmatpush.msra.mxu0 %v654
      %660 = vmatpush.msra.mxu0 %v653
      %661 = vmatpush.msra.mxu0 %v652
      %662 = vmatpush.msra.mxu0 %v651
      %663 = vmatpush.msra.mxu0 %v650
      %664 = vmatpush.msra.mxu0 %v649
      %665 = vmatpush.msra.mxu0 %v648
      %666 = vmatpush.msra.mxu0 %v647
      %667 = vmatpush.msra.mxu0 %v646
      %668 = vmatpush.msra.mxu0 %v645
      %669 = vmatpush.msra.mxu0 %v644
      %670 = vmatpush.msra.mxu0 %v643
      %671 = vmatpush.msra.mxu0 %v642
      %672 = vmatpush.msra.mxu0 %v641
      %673 = vmatmul.f32.gmra.mxu0 %v608
      %v674 = vpop.f32.mrf.mxu0
      %v675 = vadd.f32 0.0, %v674
      %676 = vmatmul.f32.gmra.mxu0 %v609
      %v677 = vpop.f32.mrf.mxu0
      %v678 = vadd.f32 0.0, %v677
      %679 = vmatmul.f32.gmra.mxu0 %v610
      %v680 = vpop.f32.mrf.mxu0
      %v681 = vadd.f32 0.0, %v680
      %682 = vmatmul.f32.gmra.mxu0 %v611
      %v683 = vpop.f32.mrf.mxu0
      %v684 = vadd.f32 0.0, %v683
      %685 = vmatmul.f32.gmra.mxu0 %v612
      %v686 = vpop.f32.mrf.mxu0
      %v687 = vadd.f32 0.0, %v686
      %688 = vmatmul.f32.gmra.mxu0 %v613
      %v689 = vpop.f32.mrf.mxu0
      %v690 = vadd.f32 0.0, %v689
      %691 = vmatmul.f32.gmra.mxu0 %v614
      %v692 = vpop.f32.mrf.mxu0
      %v693 = vadd.f32 0.0, %v692
      %694 = vmatmul.f32.gmra.mxu0 %v615
      %v695 = vpop.f32.mrf.mxu0
      %v696 = vadd.f32 0.0, %v695
      %697 = vmatmul.f32.gmra.mxu0 %v616
      %v698 = vpop.f32.mrf.mxu0
      %v699 = vadd.f32 0.0, %v698
      %700 = vmatmul.f32.gmra.mxu0 %v617
      %v701 = vpop.f32.mrf.mxu0
      %v702 = vadd.f32 0.0, %v701
      %703 = vmatmul.f32.gmra.mxu0 %v618
      %v704 = vpop.f32.mrf.mxu0
      %v705 = vadd.f32 0.0, %v704
      %706 = vmatmul.f32.gmra.mxu0 %v619
      %v707 = vpop.f32.mrf.mxu0
      %v708 = vadd.f32 0.0, %v707
      %709 = vmatmul.f32.gmra.mxu0 %v620
      %v710 = vpop.f32.mrf.mxu0
      %v711 = vadd.f32 0.0, %v710
      %712 = vmatmul.f32.gmra.mxu0 %v621
      %v713 = vpop.f32.mrf.mxu0
      %v714 = vadd.f32 0.0, %v713
      %715 = vmatmul.f32.gmra.mxu0 %v622
      %v716 = vpop.f32.mrf.mxu0
      %v717 = vadd.f32 0.0, %v716
      %718 = vmatmul.f32.gmra.mxu0 %v623
      %v719 = vpop.f32.mrf.mxu0
      %v720 = vadd.f32 0.0, %v719
      %721 = vmatmul.f32.gmra.mxu0 %v624
      %v722 = vpop.f32.mrf.mxu0
      %v723 = vadd.f32 0.0, %v722
      %724 = vmatmul.f32.gmra.mxu0 %v625
      %v725 = vpop.f32.mrf.mxu0
      %v726 = vadd.f32 0.0, %v725
      %727 = vmatmul.f32.gmra.mxu0 %v626
      %v728 = vpop.f32.mrf.mxu0
      %v729 = vadd.f32 0.0, %v728
      %730 = vmatmul.f32.gmra.mxu0 %v627
      %v731 = vpop.f32.mrf.mxu0
      %v732 = vadd.f32 0.0, %v731
      %733 = vmatmul.f32.gmra.mxu0 %v628
      %v734 = vpop.f32.mrf.mxu0
      %v735 = vadd.f32 0.0, %v734
      %736 = vmatmul.f32.gmra.mxu0 %v629
      %v737 = vpop.f32.mrf.mxu0
      %v738 = vadd.f32 0.0, %v737
      %739 = vmatmul.f32.gmra.mxu0 %v630
      %v740 = vpop.f32.mrf.mxu0
      %v741 = vadd.f32 0.0, %v740
      %742 = vmatmul.f32.gmra.mxu0 %v631
      %v743 = vpop.f32.mrf.mxu0
      %v744 = vadd.f32 0.0, %v743
      %745 = vmatmul.f32.gmra.mxu0 %v632
      %v746 = vpop.f32.mrf.mxu0
      %v747 = vadd.f32 0.0, %v746
      %748 = vmatmul.f32.gmra.mxu0 %v633
      %v749 = vpop.f32.mrf.mxu0
      %v750 = vadd.f32 0.0, %v749
      %751 = vmatmul.f32.gmra.mxu0 %v634
      %v752 = vpop.f32.mrf.mxu0
      %v753 = vadd.f32 0.0, %v752
      %754 = vmatmul.f32.gmra.mxu0 %v635
      %v755 = vpop.f32.mrf.mxu0
      %v756 = vadd.f32 0.0, %v755
      %757 = vmatmul.f32.gmra.mxu0 %v636
      %v758 = vpop.f32.mrf.mxu0
      %v759 = vadd.f32 0.0, %v758
      %760 = vmatmul.f32.gmra.mxu0 %v637
      %v761 = vpop.f32.mrf.mxu0
      %v762 = vadd.f32 0.0, %v761
      %763 = vmatmul.f32.gmra.mxu0 %v638
      %v764 = vpop.f32.mrf.mxu0
      %v765 = vadd.f32 0.0, %v764
      %766 = vmatmul.f32.gmra.mxu0 %v639
      %v767 = vpop.f32.mrf.mxu0
      %v768 = vadd.f32 0.0, %v767
      %769 = vdwg.mxu0
      %v770 = vadd.f32 %v513, %v675
      %v771 = vadd.f32 %v516, %v678
      %v772 = vadd.f32 %v519, %v681
      %v773 = vadd.f32 %v522, %v684
      %v774 = vadd.f32 %v525, %v687
      %v775 = vadd.f32 %v528, %v690
      %v776 = vadd.f32 %v531, %v693
      %v777 = vadd.f32 %v534, %v696
      %v778 = vadd.f32 %v537, %v699
      %v779 = vadd.f32 %v540, %v702
      %v780 = vadd.f32 %v543, %v705
      %v781 = vadd.f32 %v546, %v708
      %v782 = vadd.f32 %v549, %v711
      %v783 = vadd.f32 %v552, %v714
      %v784 = vadd.f32 %v555, %v717
      %v785 = vadd.f32 %v558, %v720
      %v786 = vadd.f32 %v561, %v723
      %v787 = vadd.f32 %v564, %v726
      %v788 = vadd.f32 %v567, %v729
      %v789 = vadd.f32 %v570, %v732
      %v790 = vadd.f32 %v573, %v735
      %v791 = vadd.f32 %v576, %v738
      %v792 = vadd.f32 %v579, %v741
      %v793 = vadd.f32 %v582, %v744
      %v794 = vadd.f32 %v585, %v747
      %v795 = vadd.f32 %v588, %v750
      %v796 = vadd.f32 %v591, %v753
      %v797 = vadd.f32 %v594, %v756
      %v798 = vadd.f32 %v597, %v759
      %v799 = vadd.f32 %v600, %v762
      %v800 = vadd.f32 %v603, %v765
      %v801 = vadd.f32 %v606, %v768
      %s802 = scalar_lea.vmem %s269, 24
      %v803 = vld [vmem:[%s802] sm:$0xff]
      %v804 = vld [vmem:[%s802 + $0x8] sm:$0xff]
      %v805 = vld [vmem:[%s802 + $0x18] sm:$0xff]
      %v806 = vld [vmem:[%s802 + $0x20] sm:$0xff]
      %v807 = vld [vmem:[%s802 + $0x30] sm:$0xff]
      %v808 = vld [vmem:[%s802 + $0x38] sm:$0xff]
      %v809 = vld [vmem:[%s802 + $0x48] sm:$0xff]
      %v810 = vld [vmem:[%s802 + $0x50] sm:$0xff]
      %v811 = vld [vmem:[%s802 + $0x60] sm:$0xff]
      %v812 = vld [vmem:[%s802 + $0x68] sm:$0xff]
      %v813 = vld [vmem:[%s802 + $0x78] sm:$0xff]
      %v814 = vld [vmem:[%s802 + $0x80] sm:$0xff]
      %v815 = vld [vmem:[%s802 + $0x90] sm:$0xff]
      %v816 = vld [vmem:[%s802 + $0x98] sm:$0xff]
      %v817 = vld [vmem:[%s802 + $0xa8] sm:$0xff]
      %v818 = vld [vmem:[%s802 + $0xb0] sm:$0xff]
      %v819 = vld [vmem:[%s802 + $0xc0] sm:$0xff]
      %v820 = vld [vmem:[%s802 + $0xc8] sm:$0xff]
      %v821 = vld [vmem:[%s802 + $0xd8] sm:$0xff]
      %v822 = vld [vmem:[%s802 + $0xe0] sm:$0xff]
      %v823 = vld [vmem:[%s802 + $0xf0] sm:$0xff]
      %v824 = vld [vmem:[%s802 + $0xf8] sm:$0xff]
      %v825 = vld [vmem:[%s802 + $0x108] sm:$0xff]
      %v826 = vld [vmem:[%s802 + $0x110] sm:$0xff]
      %v827 = vld [vmem:[%s802 + $0x120] sm:$0xff]
      %v828 = vld [vmem:[%s802 + $0x128] sm:$0xff]
      %v829 = vld [vmem:[%s802 + $0x138] sm:$0xff]
      %v830 = vld [vmem:[%s802 + $0x140] sm:$0xff]
      %v831 = vld [vmem:[%s802 + $0x150] sm:$0xff]
      %v832 = vld [vmem:[%s802 + $0x158] sm:$0xff]
      %v833 = vld [vmem:[%s802 + $0x168] sm:$0xff]
      %v834 = vld [vmem:[%s802 + $0x170] sm:$0xff]
      %s835 = scalar_lea.vmem %s2, 384
      %v836 = vld [vmem:[%s835] sm:$0xff]
      %v837 = vld [vmem:[%s835 + $0x8] sm:$0xff]
      %v838 = vld [vmem:[%s835 + $0x10] sm:$0xff]
      %v839 = vld [vmem:[%s835 + $0x18] sm:$0xff]
      %v840 = vld [vmem:[%s835 + $0x20] sm:$0xff]
      %v841 = vld [vmem:[%s835 + $0x28] sm:$0xff]
      %v842 = vld [vmem:[%s835 + $0x30] sm:$0xff]
      %v843 = vld [vmem:[%s835 + $0x38] sm:$0xff]
      %v844 = vld [vmem:[%s835 + $0x40] sm:$0xff]
      %v845 = vld [vmem:[%s835 + $0x48] sm:$0xff]
      %v846 = vld [vmem:[%s835 + $0x50] sm:$0xff]
      %v847 = vld [vmem:[%s835 + $0x58] sm:$0xff]
      %v848 = vld [vmem:[%s835 + $0x60] sm:$0xff]
      %v849 = vld [vmem:[%s835 + $0x68] sm:$0xff]
      %v850 = vld [vmem:[%s835 + $0x70] sm:$0xff]
      %v851 = vld [vmem:[%s835 + $0x78] sm:$0xff]
      %852 = vmatpush.msra.mxu0 %v851
      %853 = vmatpush.msra.mxu0 %v850
      %854 = vmatpush.msra.mxu0 %v849
      %855 = vmatpush.msra.mxu0 %v848
      %856 = vmatpush.msra.mxu0 %v847
      %857 = vmatpush.msra.mxu0 %v846
      %858 = vmatpush.msra.mxu0 %v845
      %859 = vmatpush.msra.mxu0 %v844
      %860 = vmatpush.msra.mxu0 %v843
      %861 = vmatpush.msra.mxu0 %v842
      %862 = vmatpush.msra.mxu0 %v841
      %863 = vmatpush.msra.mxu0 %v840
      %864 = vmatpush.msra.mxu0 %v839
      %865 = vmatpush.msra.mxu0 %v838
      %866 = vmatpush.msra.mxu0 %v837
      %867 = vmatpush.msra.mxu0 %v836
      %868 = vmatmul.f32.gmra.mxu0 %v803
      %v869 = vpop.f32.mrf.mxu0
      %v870 = vadd.f32 0.0, %v869
      %871 = vmatmul.f32.gmra.mxu0 %v804
      %v872 = vpop.f32.mrf.mxu0
      %v873 = vadd.f32 0.0, %v872
      %874 = vmatmul.f32.gmra.mxu0 %v805
      %v875 = vpop.f32.mrf.mxu0
      %v876 = vadd.f32 0.0, %v875
      %877 = vmatmul.f32.gmra.mxu0 %v806
      %v878 = vpop.f32.mrf.mxu0
      %v879 = vadd.f32 0.0, %v878
      %880 = vmatmul.f32.gmra.mxu0 %v807
      %v881 = vpop.f32.mrf.mxu0
      %v882 = vadd.f32 0.0, %v881
      %883 = vmatmul.f32.gmra.mxu0 %v808
      %v884 = vpop.f32.mrf.mxu0
      %v885 = vadd.f32 0.0, %v884
      %886 = vmatmul.f32.gmra.mxu0 %v809
      %v887 = vpop.f32.mrf.mxu0
      %v888 = vadd.f32 0.0, %v887
      %889 = vmatmul.f32.gmra.mxu0 %v810
      %v890 = vpop.f32.mrf.mxu0
      %v891 = vadd.f32 0.0, %v890
      %892 = vmatmul.f32.gmra.mxu0 %v811
      %v893 = vpop.f32.mrf.mxu0
      %v894 = vadd.f32 0.0, %v893
      %895 = vmatmul.f32.gmra.mxu0 %v812
      %v896 = vpop.f32.mrf.mxu0
      %v897 = vadd.f32 0.0, %v896
      %898 = vmatmul.f32.gmra.mxu0 %v813
      %v899 = vpop.f32.mrf.mxu0
      %v900 = vadd.f32 0.0, %v899
      %901 = vmatmul.f32.gmra.mxu0 %v814
      %v902 = vpop.f32.mrf.mxu0
      %v903 = vadd.f32 0.0, %v902
      %904 = vmatmul.f32.gmra.mxu0 %v815
      %v905 = vpop.f32.mrf.mxu0
      %v906 = vadd.f32 0.0, %v905
      %907 = vmatmul.f32.gmra.mxu0 %v816
      %v908 = vpop.f32.mrf.mxu0
      %v909 = vadd.f32 0.0, %v908
      %910 = vmatmul.f32.gmra.mxu0 %v817
      %v911 = vpop.f32.mrf.mxu0
      %v912 = vadd.f32 0.0, %v911
      %913 = vmatmul.f32.gmra.mxu0 %v818
      %v914 = vpop.f32.mrf.mxu0
      %v915 = vadd.f32 0.0, %v914
      %916 = vmatmul.f32.gmra.mxu0 %v819
      %v917 = vpop.f32.mrf.mxu0
      %v918 = vadd.f32 0.0, %v917
      %919 = vmatmul.f32.gmra.mxu0 %v820
      %v920 = vpop.f32.mrf.mxu0
      %v921 = vadd.f32 0.0, %v920
      %922 = vmatmul.f32.gmra.mxu0 %v821
      %v923 = vpop.f32.mrf.mxu0
      %v924 = vadd.f32 0.0, %v923
      %925 = vmatmul.f32.gmra.mxu0 %v822
      %v926 = vpop.f32.mrf.mxu0
      %v927 = vadd.f32 0.0, %v926
      %928 = vmatmul.f32.gmra.mxu0 %v823
      %v929 = vpop.f32.mrf.mxu0
      %v930 = vadd.f32 0.0, %v929
      %931 = vmatmul.f32.gmra.mxu0 %v824
      %v932 = vpop.f32.mrf.mxu0
      %v933 = vadd.f32 0.0, %v932
      %934 = vmatmul.f32.gmra.mxu0 %v825
      %v935 = vpop.f32.mrf.mxu0
      %v936 = vadd.f32 0.0, %v935
      %937 = vmatmul.f32.gmra.mxu0 %v826
      %v938 = vpop.f32.mrf.mxu0
      %v939 = vadd.f32 0.0, %v938
      %940 = vmatmul.f32.gmra.mxu0 %v827
      %v941 = vpop.f32.mrf.mxu0
      %v942 = vadd.f32 0.0, %v941
      %943 = vmatmul.f32.gmra.mxu0 %v828
      %v944 = vpop.f32.mrf.mxu0
      %v945 = vadd.f32 0.0, %v944
      %946 = vmatmul.f32.gmra.mxu0 %v829
      %v947 = vpop.f32.mrf.mxu0
      %v948 = vadd.f32 0.0, %v947
      %949 = vmatmul.f32.gmra.mxu0 %v830
      %v950 = vpop.f32.mrf.mxu0
      %v951 = vadd.f32 0.0, %v950
      %952 = vmatmul.f32.gmra.mxu0 %v831
      %v953 = vpop.f32.mrf.mxu0
      %v954 = vadd.f32 0.0, %v953
      %955 = vmatmul.f32.gmra.mxu0 %v832
      %v956 = vpop.f32.mrf.mxu0
      %v957 = vadd.f32 0.0, %v956
      %958 = vmatmul.f32.gmra.mxu0 %v833
      %v959 = vpop.f32.mrf.mxu0
      %v960 = vadd.f32 0.0, %v959
      %961 = vmatmul.f32.gmra.mxu0 %v834
      %v962 = vpop.f32.mrf.mxu0
      %v963 = vadd.f32 0.0, %v962
      %964 = vdwg.mxu0
      %v965 = vadd.f32 %v770, %v870
      %v966 = vadd.f32 %v771, %v873
      %v967 = vadd.f32 %v772, %v876
      %v968 = vadd.f32 %v773, %v879
      %v969 = vadd.f32 %v774, %v882
      %v970 = vadd.f32 %v775, %v885
      %v971 = vadd.f32 %v776, %v888
      %v972 = vadd.f32 %v777, %v891
      %v973 = vadd.f32 %v778, %v894
      %v974 = vadd.f32 %v779, %v897
      %v975 = vadd.f32 %v780, %v900
      %v976 = vadd.f32 %v781, %v903
      %v977 = vadd.f32 %v782, %v906
      %v978 = vadd.f32 %v783, %v909
      %v979 = vadd.f32 %v784, %v912
      %v980 = vadd.f32 %v785, %v915
      %v981 = vadd.f32 %v786, %v918
      %v982 = vadd.f32 %v787, %v921
      %v983 = vadd.f32 %v788, %v924
      %v984 = vadd.f32 %v789, %v927
      %v985 = vadd.f32 %v790, %v930
      %v986 = vadd.f32 %v791, %v933
      %v987 = vadd.f32 %v792, %v936
      %v988 = vadd.f32 %v793, %v939
      %v989 = vadd.f32 %v794, %v942
      %v990 = vadd.f32 %v795, %v945
      %v991 = vadd.f32 %v796, %v948
      %v992 = vadd.f32 %v797, %v951
      %v993 = vadd.f32 %v798, %v954
      %v994 = vadd.f32 %v799, %v957
      %v995 = vadd.f32 %v800, %v960
      %v996 = vadd.f32 %v801, %v963
      %v997 = vld [vmem:[%s802 + $0x1] sm:$0xff]
      %v998 = vld [vmem:[%s802 + $0x9] sm:$0xff]
      %v999 = vld [vmem:[%s802 + $0x19] sm:$0xff]
      %v1000 = vld [vmem:[%s802 + $0x21] sm:$0xff]
      %v1001 = vld [vmem:[%s802 + $0x31] sm:$0xff]
      %v1002 = vld [vmem:[%s802 + $0x39] sm:$0xff]
      %v1003 = vld [vmem:[%s802 + $0x49] sm:$0xff]
      %v1004 = vld [vmem:[%s802 + $0x51] sm:$0xff]
      %v1005 = vld [vmem:[%s802 + $0x61] sm:$0xff]
      %v1006 = vld [vmem:[%s802 + $0x69] sm:$0xff]
      %v1007 = vld [vmem:[%s802 + $0x79] sm:$0xff]
      %v1008 = vld [vmem:[%s802 + $0x81] sm:$0xff]
      %v1009 = vld [vmem:[%s802 + $0x91] sm:$0xff]
      %v1010 = vld [vmem:[%s802 + $0x99] sm:$0xff]
      %v1011 = vld [vmem:[%s802 + $0xa9] sm:$0xff]
      %v1012 = vld [vmem:[%s802 + $0xb1] sm:$0xff]
      %v1013 = vld [vmem:[%s802 + $0xc1] sm:$0xff]
      %v1014 = vld [vmem:[%s802 + $0xc9] sm:$0xff]
      %v1015 = vld [vmem:[%s802 + $0xd9] sm:$0xff]
      %v1016 = vld [vmem:[%s802 + $0xe1] sm:$0xff]
      %v1017 = vld [vmem:[%s802 + $0xf1] sm:$0xff]
      %v1018 = vld [vmem:[%s802 + $0xf9] sm:$0xff]
      %v1019 = vld [vmem:[%s802 + $0x109] sm:$0xff]
      %v1020 = vld [vmem:[%s802 + $0x111] sm:$0xff]
      %v1021 = vld [vmem:[%s802 + $0x121] sm:$0xff]
      %v1022 = vld [vmem:[%s802 + $0x129] sm:$0xff]
      %v1023 = vld [vmem:[%s802 + $0x139] sm:$0xff]
      %v1024 = vld [vmem:[%s802 + $0x141] sm:$0xff]
      %v1025 = vld [vmem:[%s802 + $0x151] sm:$0xff]
      %v1026 = vld [vmem:[%s802 + $0x159] sm:$0xff]
      %v1027 = vld [vmem:[%s802 + $0x169] sm:$0xff]
      %v1028 = vld [vmem:[%s802 + $0x171] sm:$0xff]
      %s1029 = scalar_lea.vmem %s2, 512
      %v1030 = vld [vmem:[%s1029] sm:$0xff]
      %v1031 = vld [vmem:[%s1029 + $0x8] sm:$0xff]
      %v1032 = vld [vmem:[%s1029 + $0x10] sm:$0xff]
      %v1033 = vld [vmem:[%s1029 + $0x18] sm:$0xff]
      %v1034 = vld [vmem:[%s1029 + $0x20] sm:$0xff]
      %v1035 = vld [vmem:[%s1029 + $0x28] sm:$0xff]
      %v1036 = vld [vmem:[%s1029 + $0x30] sm:$0xff]
      %v1037 = vld [vmem:[%s1029 + $0x38] sm:$0xff]
      %v1038 = vld [vmem:[%s1029 + $0x40] sm:$0xff]
      %v1039 = vld [vmem:[%s1029 + $0x48] sm:$0xff]
      %v1040 = vld [vmem:[%s1029 + $0x50] sm:$0xff]
      %v1041 = vld [vmem:[%s1029 + $0x58] sm:$0xff]
      %v1042 = vld [vmem:[%s1029 + $0x60] sm:$0xff]
      %v1043 = vld [vmem:[%s1029 + $0x68] sm:$0xff]
      %v1044 = vld [vmem:[%s1029 + $0x70] sm:$0xff]
      %v1045 = vld [vmem:[%s1029 + $0x78] sm:$0xff]
      %1046 = vmatpush.msra.mxu0 %v1045
      %1047 = vmatpush.msra.mxu0 %v1044
      %1048 = vmatpush.msra.mxu0 %v1043
      %1049 = vmatpush.msra.mxu0 %v1042
      %1050 = vmatpush.msra.mxu0 %v1041
      %1051 = vmatpush.msra.mxu0 %v1040
      %1052 = vmatpush.msra.mxu0 %v1039
      %1053 = vmatpush.msra.mxu0 %v1038
      %1054 = vmatpush.msra.mxu0 %v1037
      %1055 = vmatpush.msra.mxu0 %v1036
      %1056 = vmatpush.msra.mxu0 %v1035
      %1057 = vmatpush.msra.mxu0 %v1034
      %1058 = vmatpush.msra.mxu0 %v1033
      %1059 = vmatpush.msra.mxu0 %v1032
      %1060 = vmatpush.msra.mxu0 %v1031
      %1061 = vmatpush.msra.mxu0 %v1030
      %1062 = vmatmul.f32.gmra.mxu0 %v997
      %v1063 = vpop.f32.mrf.mxu0
      %v1064 = vadd.f32 0.0, %v1063
      %1065 = vmatmul.f32.gmra.mxu0 %v998
      %v1066 = vpop.f32.mrf.mxu0
      %v1067 = vadd.f32 0.0, %v1066
      %1068 = vmatmul.f32.gmra.mxu0 %v999
      %v1069 = vpop.f32.mrf.mxu0
      %v1070 = vadd.f32 0.0, %v1069
      %1071 = vmatmul.f32.gmra.mxu0 %v1000
      %v1072 = vpop.f32.mrf.mxu0
      %v1073 = vadd.f32 0.0, %v1072
      %1074 = vmatmul.f32.gmra.mxu0 %v1001
      %v1075 = vpop.f32.mrf.mxu0
      %v1076 = vadd.f32 0.0, %v1075
      %1077 = vmatmul.f32.gmra.mxu0 %v1002
      %v1078 = vpop.f32.mrf.mxu0
      %v1079 = vadd.f32 0.0, %v1078
      %1080 = vmatmul.f32.gmra.mxu0 %v1003
      %v1081 = vpop.f32.mrf.mxu0
      %v1082 = vadd.f32 0.0, %v1081
      %1083 = vmatmul.f32.gmra.mxu0 %v1004
      %v1084 = vpop.f32.mrf.mxu0
      %v1085 = vadd.f32 0.0, %v1084
      %1086 = vmatmul.f32.gmra.mxu0 %v1005
      %v1087 = vpop.f32.mrf.mxu0
      %v1088 = vadd.f32 0.0, %v1087
      %1089 = vmatmul.f32.gmra.mxu0 %v1006
      %v1090 = vpop.f32.mrf.mxu0
      %v1091 = vadd.f32 0.0, %v1090
      %1092 = vmatmul.f32.gmra.mxu0 %v1007
      %v1093 = vpop.f32.mrf.mxu0
      %v1094 = vadd.f32 0.0, %v1093
      %1095 = vmatmul.f32.gmra.mxu0 %v1008
      %v1096 = vpop.f32.mrf.mxu0
      %v1097 = vadd.f32 0.0, %v1096
      %1098 = vmatmul.f32.gmra.mxu0 %v1009
      %v1099 = vpop.f32.mrf.mxu0
      %v1100 = vadd.f32 0.0, %v1099
      %1101 = vmatmul.f32.gmra.mxu0 %v1010
      %v1102 = vpop.f32.mrf.mxu0
      %v1103 = vadd.f32 0.0, %v1102
      %1104 = vmatmul.f32.gmra.mxu0 %v1011
      %v1105 = vpop.f32.mrf.mxu0
      %v1106 = vadd.f32 0.0, %v1105
      %1107 = vmatmul.f32.gmra.mxu0 %v1012
      %v1108 = vpop.f32.mrf.mxu0
      %v1109 = vadd.f32 0.0, %v1108
      %1110 = vmatmul.f32.gmra.mxu0 %v1013
      %v1111 = vpop.f32.mrf.mxu0
      %v1112 = vadd.f32 0.0, %v1111
      %1113 = vmatmul.f32.gmra.mxu0 %v1014
      %v1114 = vpop.f32.mrf.mxu0
      %v1115 = vadd.f32 0.0, %v1114
      %1116 = vmatmul.f32.gmra.mxu0 %v1015
      %v1117 = vpop.f32.mrf.mxu0
      %v1118 = vadd.f32 0.0, %v1117
      %1119 = vmatmul.f32.gmra.mxu0 %v1016
      %v1120 = vpop.f32.mrf.mxu0
      %v1121 = vadd.f32 0.0, %v1120
      %1122 = vmatmul.f32.gmra.mxu0 %v1017
      %v1123 = vpop.f32.mrf.mxu0
      %v1124 = vadd.f32 0.0, %v1123
      %1125 = vmatmul.f32.gmra.mxu0 %v1018
      %v1126 = vpop.f32.mrf.mxu0
      %v1127 = vadd.f32 0.0, %v1126
      %1128 = vmatmul.f32.gmra.mxu0 %v1019
      %v1129 = vpop.f32.mrf.mxu0
      %v1130 = vadd.f32 0.0, %v1129
      %1131 = vmatmul.f32.gmra.mxu0 %v1020
      %v1132 = vpop.f32.mrf.mxu0
      %v1133 = vadd.f32 0.0, %v1132
      %1134 = vmatmul.f32.gmra.mxu0 %v1021
      %v1135 = vpop.f32.mrf.mxu0
      %v1136 = vadd.f32 0.0, %v1135
      %1137 = vmatmul.f32.gmra.mxu0 %v1022
      %v1138 = vpop.f32.mrf.mxu0
      %v1139 = vadd.f32 0.0, %v1138
      %1140 = vmatmul.f32.gmra.mxu0 %v1023
      %v1141 = vpop.f32.mrf.mxu0
      %v1142 = vadd.f32 0.0, %v1141
      %1143 = vmatmul.f32.gmra.mxu0 %v1024
      %v1144 = vpop.f32.mrf.mxu0
      %v1145 = vadd.f32 0.0, %v1144
      %1146 = vmatmul.f32.gmra.mxu0 %v1025
      %v1147 = vpop.f32.mrf.mxu0
      %v1148 = vadd.f32 0.0, %v1147
      %1149 = vmatmul.f32.gmra.mxu0 %v1026
      %v1150 = vpop.f32.mrf.mxu0
      %v1151 = vadd.f32 0.0, %v1150
      %1152 = vmatmul.f32.gmra.mxu0 %v1027
      %v1153 = vpop.f32.mrf.mxu0
      %v1154 = vadd.f32 0.0, %v1153
      %1155 = vmatmul.f32.gmra.mxu0 %v1028
      %v1156 = vpop.f32.mrf.mxu0
      %v1157 = vadd.f32 0.0, %v1156
      %1158 = vdwg.mxu0
      %v1159 = vadd.f32 %v965, %v1064
      %v1160 = vadd.f32 %v966, %v1067
      %v1161 = vadd.f32 %v967, %v1070
      %v1162 = vadd.f32 %v968, %v1073
      %v1163 = vadd.f32 %v969, %v1076
      %v1164 = vadd.f32 %v970, %v1079
      %v1165 = vadd.f32 %v971, %v1082
      %v1166 = vadd.f32 %v972, %v1085
      %v1167 = vadd.f32 %v973, %v1088
      %v1168 = vadd.f32 %v974, %v1091
      %v1169 = vadd.f32 %v975, %v1094
      %v1170 = vadd.f32 %v976, %v1097
      %v1171 = vadd.f32 %v977, %v1100
      %v1172 = vadd.f32 %v978, %v1103
      %v1173 = vadd.f32 %v979, %v1106
      %v1174 = vadd.f32 %v980, %v1109
      %v1175 = vadd.f32 %v981, %v1112
      %v1176 = vadd.f32 %v982, %v1115
      %v1177 = vadd.f32 %v983, %v1118
      %v1178 = vadd.f32 %v984, %v1121
      %v1179 = vadd.f32 %v985, %v1124
      %v1180 = vadd.f32 %v986, %v1127
      %v1181 = vadd.f32 %v987, %v1130
      %v1182 = vadd.f32 %v988, %v1133
      %v1183 = vadd.f32 %v989, %v1136
      %v1184 = vadd.f32 %v990, %v1139
      %v1185 = vadd.f32 %v991, %v1142
      %v1186 = vadd.f32 %v992, %v1145
      %v1187 = vadd.f32 %v993, %v1148
      %v1188 = vadd.f32 %v994, %v1151
      %v1189 = vadd.f32 %v995, %v1154
      %v1190 = vadd.f32 %v996, %v1157
      %v1191 = vld [vmem:[%s802 + $0x2] sm:$0xff]
      %v1192 = vld [vmem:[%s802 + $0xa] sm:$0xff]
      %v1193 = vld [vmem:[%s802 + $0x1a] sm:$0xff]
      %v1194 = vld [vmem:[%s802 + $0x22] sm:$0xff]
      %v1195 = vld [vmem:[%s802 + $0x32] sm:$0xff]
      %v1196 = vld [vmem:[%s802 + $0x3a] sm:$0xff]
      %v1197 = vld [vmem:[%s802 + $0x4a] sm:$0xff]
      %v1198 = vld [vmem:[%s802 + $0x52] sm:$0xff]
      %v1199 = vld [vmem:[%s802 + $0x62] sm:$0xff]
      %v1200 = vld [vmem:[%s802 + $0x6a] sm:$0xff]
      %v1201 = vld [vmem:[%s802 + $0x7a] sm:$0xff]
      %v1202 = vld [vmem:[%s802 + $0x82] sm:$0xff]
      %v1203 = vld [vmem:[%s802 + $0x92] sm:$0xff]
      %v1204 = vld [vmem:[%s802 + $0x9a] sm:$0xff]
      %v1205 = vld [vmem:[%s802 + $0xaa] sm:$0xff]
      %v1206 = vld [vmem:[%s802 + $0xb2] sm:$0xff]
      %v1207 = vld [vmem:[%s802 + $0xc2] sm:$0xff]
      %v1208 = vld [vmem:[%s802 + $0xca] sm:$0xff]
      %v1209 = vld [vmem:[%s802 + $0xda] sm:$0xff]
      %v1210 = vld [vmem:[%s802 + $0xe2] sm:$0xff]
      %v1211 = vld [vmem:[%s802 + $0xf2] sm:$0xff]
      %v1212 = vld [vmem:[%s802 + $0xfa] sm:$0xff]
      %v1213 = vld [vmem:[%s802 + $0x10a] sm:$0xff]
      %v1214 = vld [vmem:[%s802 + $0x112] sm:$0xff]
      %v1215 = vld [vmem:[%s802 + $0x122] sm:$0xff]
      %v1216 = vld [vmem:[%s802 + $0x12a] sm:$0xff]
      %v1217 = vld [vmem:[%s802 + $0x13a] sm:$0xff]
      %v1218 = vld [vmem:[%s802 + $0x142] sm:$0xff]
      %v1219 = vld [vmem:[%s802 + $0x152] sm:$0xff]
      %v1220 = vld [vmem:[%s802 + $0x15a] sm:$0xff]
      %v1221 = vld [vmem:[%s802 + $0x16a] sm:$0xff]
      %v1222 = vld [vmem:[%s802 + $0x172] sm:$0xff]
      %s1223 = scalar_lea.vmem %s2, 640
      %v1224 = vld [vmem:[%s1223] sm:$0xff]
      %v1225 = vld [vmem:[%s1223 + $0x8] sm:$0xff]
      %v1226 = vld [vmem:[%s1223 + $0x10] sm:$0xff]
      %v1227 = vld [vmem:[%s1223 + $0x18] sm:$0xff]
      %v1228 = vld [vmem:[%s1223 + $0x20] sm:$0xff]
      %v1229 = vld [vmem:[%s1223 + $0x28] sm:$0xff]
      %v1230 = vld [vmem:[%s1223 + $0x30] sm:$0xff]
      %v1231 = vld [vmem:[%s1223 + $0x38] sm:$0xff]
      %v1232 = vld [vmem:[%s1223 + $0x40] sm:$0xff]
      %v1233 = vld [vmem:[%s1223 + $0x48] sm:$0xff]
      %v1234 = vld [vmem:[%s1223 + $0x50] sm:$0xff]
      %v1235 = vld [vmem:[%s1223 + $0x58] sm:$0xff]
      %v1236 = vld [vmem:[%s1223 + $0x60] sm:$0xff]
      %v1237 = vld [vmem:[%s1223 + $0x68] sm:$0xff]
      %v1238 = vld [vmem:[%s1223 + $0x70] sm:$0xff]
      %v1239 = vld [vmem:[%s1223 + $0x78] sm:$0xff]
      %1240 = vmatpush.msra.mxu0 %v1239
      %1241 = vmatpush.msra.mxu0 %v1238
      %1242 = vmatpush.msra.mxu0 %v1237
      %1243 = vmatpush.msra.mxu0 %v1236
      %1244 = vmatpush.msra.mxu0 %v1235
      %1245 = vmatpush.msra.mxu0 %v1234
      %1246 = vmatpush.msra.mxu0 %v1233
      %1247 = vmatpush.msra.mxu0 %v1232
      %1248 = vmatpush.msra.mxu0 %v1231
      %1249 = vmatpush.msra.mxu0 %v1230
      %1250 = vmatpush.msra.mxu0 %v1229
      %1251 = vmatpush.msra.mxu0 %v1228
      %1252 = vmatpush.msra.mxu0 %v1227
      %1253 = vmatpush.msra.mxu0 %v1226
      %1254 = vmatpush.msra.mxu0 %v1225
      %1255 = vmatpush.msra.mxu0 %v1224
      %1256 = vmatmul.f32.gmra.mxu0 %v1191
      %v1257 = vpop.f32.mrf.mxu0
      %v1258 = vadd.f32 0.0, %v1257
      %1259 = vmatmul.f32.gmra.mxu0 %v1192
      %v1260 = vpop.f32.mrf.mxu0
      %v1261 = vadd.f32 0.0, %v1260
      %1262 = vmatmul.f32.gmra.mxu0 %v1193
      %v1263 = vpop.f32.mrf.mxu0
      %v1264 = vadd.f32 0.0, %v1263
      %1265 = vmatmul.f32.gmra.mxu0 %v1194
      %v1266 = vpop.f32.mrf.mxu0
      %v1267 = vadd.f32 0.0, %v1266
      %1268 = vmatmul.f32.gmra.mxu0 %v1195
      %v1269 = vpop.f32.mrf.mxu0
      %v1270 = vadd.f32 0.0, %v1269
      %1271 = vmatmul.f32.gmra.mxu0 %v1196
      %v1272 = vpop.f32.mrf.mxu0
      %v1273 = vadd.f32 0.0, %v1272
      %1274 = vmatmul.f32.gmra.mxu0 %v1197
      %v1275 = vpop.f32.mrf.mxu0
      %v1276 = vadd.f32 0.0, %v1275
      %1277 = vmatmul.f32.gmra.mxu0 %v1198
      %v1278 = vpop.f32.mrf.mxu0
      %v1279 = vadd.f32 0.0, %v1278
      %1280 = vmatmul.f32.gmra.mxu0 %v1199
      %v1281 = vpop.f32.mrf.mxu0
      %v1282 = vadd.f32 0.0, %v1281
      %1283 = vmatmul.f32.gmra.mxu0 %v1200
      %v1284 = vpop.f32.mrf.mxu0
      %v1285 = vadd.f32 0.0, %v1284
      %1286 = vmatmul.f32.gmra.mxu0 %v1201
      %v1287 = vpop.f32.mrf.mxu0
      %v1288 = vadd.f32 0.0, %v1287
      %1289 = vmatmul.f32.gmra.mxu0 %v1202
      %v1290 = vpop.f32.mrf.mxu0
      %v1291 = vadd.f32 0.0, %v1290
      %1292 = vmatmul.f32.gmra.mxu0 %v1203
      %v1293 = vpop.f32.mrf.mxu0
      %v1294 = vadd.f32 0.0, %v1293
      %1295 = vmatmul.f32.gmra.mxu0 %v1204
      %v1296 = vpop.f32.mrf.mxu0
      %v1297 = vadd.f32 0.0, %v1296
      %1298 = vmatmul.f32.gmra.mxu0 %v1205
      %v1299 = vpop.f32.mrf.mxu0
      %v1300 = vadd.f32 0.0, %v1299
      %1301 = vmatmul.f32.gmra.mxu0 %v1206
      %v1302 = vpop.f32.mrf.mxu0
      %v1303 = vadd.f32 0.0, %v1302
      %1304 = vmatmul.f32.gmra.mxu0 %v1207
      %v1305 = vpop.f32.mrf.mxu0
      %v1306 = vadd.f32 0.0, %v1305
      %1307 = vmatmul.f32.gmra.mxu0 %v1208
      %v1308 = vpop.f32.mrf.mxu0
      %v1309 = vadd.f32 0.0, %v1308
      %1310 = vmatmul.f32.gmra.mxu0 %v1209
      %v1311 = vpop.f32.mrf.mxu0
      %v1312 = vadd.f32 0.0, %v1311
      %1313 = vmatmul.f32.gmra.mxu0 %v1210
      %v1314 = vpop.f32.mrf.mxu0
      %v1315 = vadd.f32 0.0, %v1314
      %1316 = vmatmul.f32.gmra.mxu0 %v1211
      %v1317 = vpop.f32.mrf.mxu0
      %v1318 = vadd.f32 0.0, %v1317
      %1319 = vmatmul.f32.gmra.mxu0 %v1212
      %v1320 = vpop.f32.mrf.mxu0
      %v1321 = vadd.f32 0.0, %v1320
      %1322 = vmatmul.f32.gmra.mxu0 %v1213
      %v1323 = vpop.f32.mrf.mxu0
      %v1324 = vadd.f32 0.0, %v1323
      %1325 = vmatmul.f32.gmra.mxu0 %v1214
      %v1326 = vpop.f32.mrf.mxu0
      %v1327 = vadd.f32 0.0, %v1326
      %1328 = vmatmul.f32.gmra.mxu0 %v1215
      %v1329 = vpop.f32.mrf.mxu0
      %v1330 = vadd.f32 0.0, %v1329
      %1331 = vmatmul.f32.gmra.mxu0 %v1216
      %v1332 = vpop.f32.mrf.mxu0
      %v1333 = vadd.f32 0.0, %v1332
      %1334 = vmatmul.f32.gmra.mxu0 %v1217
      %v1335 = vpop.f32.mrf.mxu0
      %v1336 = vadd.f32 0.0, %v1335
      %1337 = vmatmul.f32.gmra.mxu0 %v1218
      %v1338 = vpop.f32.mrf.mxu0
      %v1339 = vadd.f32 0.0, %v1338
      %1340 = vmatmul.f32.gmra.mxu0 %v1219
      %v1341 = vpop.f32.mrf.mxu0
      %v1342 = vadd.f32 0.0, %v1341
      %1343 = vmatmul.f32.gmra.mxu0 %v1220
      %v1344 = vpop.f32.mrf.mxu0
      %v1345 = vadd.f32 0.0, %v1344
      %1346 = vmatmul.f32.gmra.mxu0 %v1221
      %v1347 = vpop.f32.mrf.mxu0
      %v1348 = vadd.f32 0.0, %v1347
      %1349 = vmatmul.f32.gmra.mxu0 %v1222
      %v1350 = vpop.f32.mrf.mxu0
      %v1351 = vadd.f32 0.0, %v1350
      %1352 = vdwg.mxu0
      %v1353 = vadd.f32 %v1159, %v1258
      %v1354 = vadd.f32 %v1160, %v1261
      %v1355 = vadd.f32 %v1161, %v1264
      %v1356 = vadd.f32 %v1162, %v1267
      %v1357 = vadd.f32 %v1163, %v1270
      %v1358 = vadd.f32 %v1164, %v1273
      %v1359 = vadd.f32 %v1165, %v1276
      %v1360 = vadd.f32 %v1166, %v1279
      %v1361 = vadd.f32 %v1167, %v1282
      %v1362 = vadd.f32 %v1168, %v1285
      %v1363 = vadd.f32 %v1169, %v1288
      %v1364 = vadd.f32 %v1170, %v1291
      %v1365 = vadd.f32 %v1171, %v1294
      %v1366 = vadd.f32 %v1172, %v1297
      %v1367 = vadd.f32 %v1173, %v1300
      %v1368 = vadd.f32 %v1174, %v1303
      %v1369 = vadd.f32 %v1175, %v1306
      %v1370 = vadd.f32 %v1176, %v1309
      %v1371 = vadd.f32 %v1177, %v1312
      %v1372 = vadd.f32 %v1178, %v1315
      %v1373 = vadd.f32 %v1179, %v1318
      %v1374 = vadd.f32 %v1180, %v1321
      %v1375 = vadd.f32 %v1181, %v1324
      %v1376 = vadd.f32 %v1182, %v1327
      %v1377 = vadd.f32 %v1183, %v1330
      %v1378 = vadd.f32 %v1184, %v1333
      %v1379 = vadd.f32 %v1185, %v1336
      %v1380 = vadd.f32 %v1186, %v1339
      %v1381 = vadd.f32 %v1187, %v1342
      %v1382 = vadd.f32 %v1188, %v1345
      %v1383 = vadd.f32 %v1189, %v1348
      %v1384 = vadd.f32 %v1190, %v1351
      %s1385 = scalar_lea.vmem %s269, 48
      %v1386 = vld [vmem:[%s1385] sm:$0xff]
      %v1387 = vld [vmem:[%s1385 + $0x8] sm:$0xff]
      %v1388 = vld [vmem:[%s1385 + $0x18] sm:$0xff]
      %v1389 = vld [vmem:[%s1385 + $0x20] sm:$0xff]
      %v1390 = vld [vmem:[%s1385 + $0x30] sm:$0xff]
      %v1391 = vld [vmem:[%s1385 + $0x38] sm:$0xff]
      %v1392 = vld [vmem:[%s1385 + $0x48] sm:$0xff]
      %v1393 = vld [vmem:[%s1385 + $0x50] sm:$0xff]
      %v1394 = vld [vmem:[%s1385 + $0x60] sm:$0xff]
      %v1395 = vld [vmem:[%s1385 + $0x68] sm:$0xff]
      %v1396 = vld [vmem:[%s1385 + $0x78] sm:$0xff]
      %v1397 = vld [vmem:[%s1385 + $0x80] sm:$0xff]
      %v1398 = vld [vmem:[%s1385 + $0x90] sm:$0xff]
      %v1399 = vld [vmem:[%s1385 + $0x98] sm:$0xff]
      %v1400 = vld [vmem:[%s1385 + $0xa8] sm:$0xff]
      %v1401 = vld [vmem:[%s1385 + $0xb0] sm:$0xff]
      %v1402 = vld [vmem:[%s1385 + $0xc0] sm:$0xff]
      %v1403 = vld [vmem:[%s1385 + $0xc8] sm:$0xff]
      %v1404 = vld [vmem:[%s1385 + $0xd8] sm:$0xff]
      %v1405 = vld [vmem:[%s1385 + $0xe0] sm:$0xff]
      %v1406 = vld [vmem:[%s1385 + $0xf0] sm:$0xff]
      %v1407 = vld [vmem:[%s1385 + $0xf8] sm:$0xff]
      %v1408 = vld [vmem:[%s1385 + $0x108] sm:$0xff]
      %v1409 = vld [vmem:[%s1385 + $0x110] sm:$0xff]
      %v1410 = vld [vmem:[%s1385 + $0x120] sm:$0xff]
      %v1411 = vld [vmem:[%s1385 + $0x128] sm:$0xff]
      %v1412 = vld [vmem:[%s1385 + $0x138] sm:$0xff]
      %v1413 = vld [vmem:[%s1385 + $0x140] sm:$0xff]
      %v1414 = vld [vmem:[%s1385 + $0x150] sm:$0xff]
      %v1415 = vld [vmem:[%s1385 + $0x158] sm:$0xff]
      %v1416 = vld [vmem:[%s1385 + $0x168] sm:$0xff]
      %v1417 = vld [vmem:[%s1385 + $0x170] sm:$0xff]
      %s1418 = scalar_lea.vmem %s2, 768
      %v1419 = vld [vmem:[%s1418] sm:$0xff]
      %v1420 = vld [vmem:[%s1418 + $0x8] sm:$0xff]
      %v1421 = vld [vmem:[%s1418 + $0x10] sm:$0xff]
      %v1422 = vld [vmem:[%s1418 + $0x18] sm:$0xff]
      %v1423 = vld [vmem:[%s1418 + $0x20] sm:$0xff]
      %v1424 = vld [vmem:[%s1418 + $0x28] sm:$0xff]
      %v1425 = vld [vmem:[%s1418 + $0x30] sm:$0xff]
      %v1426 = vld [vmem:[%s1418 + $0x38] sm:$0xff]
      %v1427 = vld [vmem:[%s1418 + $0x40] sm:$0xff]
      %v1428 = vld [vmem:[%s1418 + $0x48] sm:$0xff]
      %v1429 = vld [vmem:[%s1418 + $0x50] sm:$0xff]
      %v1430 = vld [vmem:[%s1418 + $0x58] sm:$0xff]
      %v1431 = vld [vmem:[%s1418 + $0x60] sm:$0xff]
      %v1432 = vld [vmem:[%s1418 + $0x68] sm:$0xff]
      %v1433 = vld [vmem:[%s1418 + $0x70] sm:$0xff]
      %v1434 = vld [vmem:[%s1418 + $0x78] sm:$0xff]
      %1435 = vmatpush.msra.mxu0 %v1434
      %1436 = vmatpush.msra.mxu0 %v1433
      %1437 = vmatpush.msra.mxu0 %v1432
      %1438 = vmatpush.msra.mxu0 %v1431
      %1439 = vmatpush.msra.mxu0 %v1430
      %1440 = vmatpush.msra.mxu0 %v1429
      %1441 = vmatpush.msra.mxu0 %v1428
      %1442 = vmatpush.msra.mxu0 %v1427
      %1443 = vmatpush.msra.mxu0 %v1426
      %1444 = vmatpush.msra.mxu0 %v1425
      %1445 = vmatpush.msra.mxu0 %v1424
      %1446 = vmatpush.msra.mxu0 %v1423
      %1447 = vmatpush.msra.mxu0 %v1422
      %1448 = vmatpush.msra.mxu0 %v1421
      %1449 = vmatpush.msra.mxu0 %v1420
      %1450 = vmatpush.msra.mxu0 %v1419
      %1451 = vmatmul.f32.gmra.mxu0 %v1386
      %v1452 = vpop.f32.mrf.mxu0
      %v1453 = vadd.f32 0.0, %v1452
      %1454 = vmatmul.f32.gmra.mxu0 %v1387
      %v1455 = vpop.f32.mrf.mxu0
      %v1456 = vadd.f32 0.0, %v1455
      %1457 = vmatmul.f32.gmra.mxu0 %v1388
      %v1458 = vpop.f32.mrf.mxu0
      %v1459 = vadd.f32 0.0, %v1458
      %1460 = vmatmul.f32.gmra.mxu0 %v1389
      %v1461 = vpop.f32.mrf.mxu0
      %v1462 = vadd.f32 0.0, %v1461
      %1463 = vmatmul.f32.gmra.mxu0 %v1390
      %v1464 = vpop.f32.mrf.mxu0
      %v1465 = vadd.f32 0.0, %v1464
      %1466 = vmatmul.f32.gmra.mxu0 %v1391
      %v1467 = vpop.f32.mrf.mxu0
      %v1468 = vadd.f32 0.0, %v1467
      %1469 = vmatmul.f32.gmra.mxu0 %v1392
      %v1470 = vpop.f32.mrf.mxu0
      %v1471 = vadd.f32 0.0, %v1470
      %1472 = vmatmul.f32.gmra.mxu0 %v1393
      %v1473 = vpop.f32.mrf.mxu0
      %v1474 = vadd.f32 0.0, %v1473
      %1475 = vmatmul.f32.gmra.mxu0 %v1394
      %v1476 = vpop.f32.mrf.mxu0
      %v1477 = vadd.f32 0.0, %v1476
      %1478 = vmatmul.f32.gmra.mxu0 %v1395
      %v1479 = vpop.f32.mrf.mxu0
      %v1480 = vadd.f32 0.0, %v1479
      %1481 = vmatmul.f32.gmra.mxu0 %v1396
      %v1482 = vpop.f32.mrf.mxu0
      %v1483 = vadd.f32 0.0, %v1482
      %1484 = vmatmul.f32.gmra.mxu0 %v1397
      %v1485 = vpop.f32.mrf.mxu0
      %v1486 = vadd.f32 0.0, %v1485
      %1487 = vmatmul.f32.gmra.mxu0 %v1398
      %v1488 = vpop.f32.mrf.mxu0
      %v1489 = vadd.f32 0.0, %v1488
      %1490 = vmatmul.f32.gmra.mxu0 %v1399
      %v1491 = vpop.f32.mrf.mxu0
      %v1492 = vadd.f32 0.0, %v1491
      %1493 = vmatmul.f32.gmra.mxu0 %v1400
      %v1494 = vpop.f32.mrf.mxu0
      %v1495 = vadd.f32 0.0, %v1494
      %1496 = vmatmul.f32.gmra.mxu0 %v1401
      %v1497 = vpop.f32.mrf.mxu0
      %v1498 = vadd.f32 0.0, %v1497
      %1499 = vmatmul.f32.gmra.mxu0 %v1402
      %v1500 = vpop.f32.mrf.mxu0
      %v1501 = vadd.f32 0.0, %v1500
      %1502 = vmatmul.f32.gmra.mxu0 %v1403
      %v1503 = vpop.f32.mrf.mxu0
      %v1504 = vadd.f32 0.0, %v1503
      %1505 = vmatmul.f32.gmra.mxu0 %v1404
      %v1506 = vpop.f32.mrf.mxu0
      %v1507 = vadd.f32 0.0, %v1506
      %1508 = vmatmul.f32.gmra.mxu0 %v1405
      %v1509 = vpop.f32.mrf.mxu0
      %v1510 = vadd.f32 0.0, %v1509
      %1511 = vmatmul.f32.gmra.mxu0 %v1406
      %v1512 = vpop.f32.mrf.mxu0
      %v1513 = vadd.f32 0.0, %v1512
      %1514 = vmatmul.f32.gmra.mxu0 %v1407
      %v1515 = vpop.f32.mrf.mxu0
      %v1516 = vadd.f32 0.0, %v1515
      %1517 = vmatmul.f32.gmra.mxu0 %v1408
      %v1518 = vpop.f32.mrf.mxu0
      %v1519 = vadd.f32 0.0, %v1518
      %1520 = vmatmul.f32.gmra.mxu0 %v1409
      %v1521 = vpop.f32.mrf.mxu0
      %v1522 = vadd.f32 0.0, %v1521
      %1523 = vmatmul.f32.gmra.mxu0 %v1410
      %v1524 = vpop.f32.mrf.mxu0
      %v1525 = vadd.f32 0.0, %v1524
      %1526 = vmatmul.f32.gmra.mxu0 %v1411
      %v1527 = vpop.f32.mrf.mxu0
      %v1528 = vadd.f32 0.0, %v1527
      %1529 = vmatmul.f32.gmra.mxu0 %v1412
      %v1530 = vpop.f32.mrf.mxu0
      %v1531 = vadd.f32 0.0, %v1530
      %1532 = vmatmul.f32.gmra.mxu0 %v1413
      %v1533 = vpop.f32.mrf.mxu0
      %v1534 = vadd.f32 0.0, %v1533
      %1535 = vmatmul.f32.gmra.mxu0 %v1414
      %v1536 = vpop.f32.mrf.mxu0
      %v1537 = vadd.f32 0.0, %v1536
      %1538 = vmatmul.f32.gmra.mxu0 %v1415
      %v1539 = vpop.f32.mrf.mxu0
      %v1540 = vadd.f32 0.0, %v1539
      %1541 = vmatmul.f32.gmra.mxu0 %v1416
      %v1542 = vpop.f32.mrf.mxu0
      %v1543 = vadd.f32 0.0, %v1542
      %1544 = vmatmul.f32.gmra.mxu0 %v1417
      %v1545 = vpop.f32.mrf.mxu0
      %v1546 = vadd.f32 0.0, %v1545
      %1547 = vdwg.mxu0
      %v1548 = vadd.f32 %v1353, %v1453
      %v1549 = vadd.f32 %v1354, %v1456
      %v1550 = vadd.f32 %v1355, %v1459
      %v1551 = vadd.f32 %v1356, %v1462
      %v1552 = vadd.f32 %v1357, %v1465
      %v1553 = vadd.f32 %v1358, %v1468
      %v1554 = vadd.f32 %v1359, %v1471
      %v1555 = vadd.f32 %v1360, %v1474
      %v1556 = vadd.f32 %v1361, %v1477
      %v1557 = vadd.f32 %v1362, %v1480
      %v1558 = vadd.f32 %v1363, %v1483
      %v1559 = vadd.f32 %v1364, %v1486
      %v1560 = vadd.f32 %v1365, %v1489
      %v1561 = vadd.f32 %v1366, %v1492
      %v1562 = vadd.f32 %v1367, %v1495
      %v1563 = vadd.f32 %v1368, %v1498
      %v1564 = vadd.f32 %v1369, %v1501
      %v1565 = vadd.f32 %v1370, %v1504
      %v1566 = vadd.f32 %v1371, %v1507
      %v1567 = vadd.f32 %v1372, %v1510
      %v1568 = vadd.f32 %v1373, %v1513
      %v1569 = vadd.f32 %v1374, %v1516
      %v1570 = vadd.f32 %v1375, %v1519
      %v1571 = vadd.f32 %v1376, %v1522
      %v1572 = vadd.f32 %v1377, %v1525
      %v1573 = vadd.f32 %v1378, %v1528
      %v1574 = vadd.f32 %v1379, %v1531
      %v1575 = vadd.f32 %v1380, %v1534
      %v1576 = vadd.f32 %v1381, %v1537
      %v1577 = vadd.f32 %v1382, %v1540
      %v1578 = vadd.f32 %v1383, %v1543
      %v1579 = vadd.f32 %v1384, %v1546
      %v1580 = vld [vmem:[%s1385 + $0x1] sm:$0xff]
      %v1581 = vld [vmem:[%s1385 + $0x9] sm:$0xff]
      %v1582 = vld [vmem:[%s1385 + $0x19] sm:$0xff]
      %v1583 = vld [vmem:[%s1385 + $0x21] sm:$0xff]
      %v1584 = vld [vmem:[%s1385 + $0x31] sm:$0xff]
      %v1585 = vld [vmem:[%s1385 + $0x39] sm:$0xff]
      %v1586 = vld [vmem:[%s1385 + $0x49] sm:$0xff]
      %v1587 = vld [vmem:[%s1385 + $0x51] sm:$0xff]
      %v1588 = vld [vmem:[%s1385 + $0x61] sm:$0xff]
      %v1589 = vld [vmem:[%s1385 + $0x69] sm:$0xff]
      %v1590 = vld [vmem:[%s1385 + $0x79] sm:$0xff]
      %v1591 = vld [vmem:[%s1385 + $0x81] sm:$0xff]
      %v1592 = vld [vmem:[%s1385 + $0x91] sm:$0xff]
      %v1593 = vld [vmem:[%s1385 + $0x99] sm:$0xff]
      %v1594 = vld [vmem:[%s1385 + $0xa9] sm:$0xff]
      %v1595 = vld [vmem:[%s1385 + $0xb1] sm:$0xff]
      %v1596 = vld [vmem:[%s1385 + $0xc1] sm:$0xff]
      %v1597 = vld [vmem:[%s1385 + $0xc9] sm:$0xff]
      %v1598 = vld [vmem:[%s1385 + $0xd9] sm:$0xff]
      %v1599 = vld [vmem:[%s1385 + $0xe1] sm:$0xff]
      %v1600 = vld [vmem:[%s1385 + $0xf1] sm:$0xff]
      %v1601 = vld [vmem:[%s1385 + $0xf9] sm:$0xff]
      %v1602 = vld [vmem:[%s1385 + $0x109] sm:$0xff]
      %v1603 = vld [vmem:[%s1385 + $0x111] sm:$0xff]
      %v1604 = vld [vmem:[%s1385 + $0x121] sm:$0xff]
      %v1605 = vld [vmem:[%s1385 + $0x129] sm:$0xff]
      %v1606 = vld [vmem:[%s1385 + $0x139] sm:$0xff]
      %v1607 = vld [vmem:[%s1385 + $0x141] sm:$0xff]
      %v1608 = vld [vmem:[%s1385 + $0x151] sm:$0xff]
      %v1609 = vld [vmem:[%s1385 + $0x159] sm:$0xff]
      %v1610 = vld [vmem:[%s1385 + $0x169] sm:$0xff]
      %v1611 = vld [vmem:[%s1385 + $0x171] sm:$0xff]
      %s1612 = scalar_lea.vmem %s2, 896
      %v1613 = vld [vmem:[%s1612] sm:$0xff]
      %v1614 = vld [vmem:[%s1612 + $0x8] sm:$0xff]
      %v1615 = vld [vmem:[%s1612 + $0x10] sm:$0xff]
      %v1616 = vld [vmem:[%s1612 + $0x18] sm:$0xff]
      %v1617 = vld [vmem:[%s1612 + $0x20] sm:$0xff]
      %v1618 = vld [vmem:[%s1612 + $0x28] sm:$0xff]
      %v1619 = vld [vmem:[%s1612 + $0x30] sm:$0xff]
      %v1620 = vld [vmem:[%s1612 + $0x38] sm:$0xff]
      %v1621 = vld [vmem:[%s1612 + $0x40] sm:$0xff]
      %v1622 = vld [vmem:[%s1612 + $0x48] sm:$0xff]
      %v1623 = vld [vmem:[%s1612 + $0x50] sm:$0xff]
      %v1624 = vld [vmem:[%s1612 + $0x58] sm:$0xff]
      %v1625 = vld [vmem:[%s1612 + $0x60] sm:$0xff]
      %v1626 = vld [vmem:[%s1612 + $0x68] sm:$0xff]
      %v1627 = vld [vmem:[%s1612 + $0x70] sm:$0xff]
      %v1628 = vld [vmem:[%s1612 + $0x78] sm:$0xff]
      %1629 = vmatpush.msra.mxu0 %v1628
      %1630 = vmatpush.msra.mxu0 %v1627
      %1631 = vmatpush.msra.mxu0 %v1626
      %1632 = vmatpush.msra.mxu0 %v1625
      %1633 = vmatpush.msra.mxu0 %v1624
      %1634 = vmatpush.msra.mxu0 %v1623
      %1635 = vmatpush.msra.mxu0 %v1622
      %1636 = vmatpush.msra.mxu0 %v1621
      %1637 = vmatpush.msra.mxu0 %v1620
      %1638 = vmatpush.msra.mxu0 %v1619
      %1639 = vmatpush.msra.mxu0 %v1618
      %1640 = vmatpush.msra.mxu0 %v1617
      %1641 = vmatpush.msra.mxu0 %v1616
      %1642 = vmatpush.msra.mxu0 %v1615
      %1643 = vmatpush.msra.mxu0 %v1614
      %1644 = vmatpush.msra.mxu0 %v1613
      %1645 = vmatmul.f32.gmra.mxu0 %v1580
      %v1646 = vpop.f32.mrf.mxu0
      %v1647 = vadd.f32 0.0, %v1646
      %1648 = vmatmul.f32.gmra.mxu0 %v1581
      %v1649 = vpop.f32.mrf.mxu0
      %v1650 = vadd.f32 0.0, %v1649
      %1651 = vmatmul.f32.gmra.mxu0 %v1582
      %v1652 = vpop.f32.mrf.mxu0
      %v1653 = vadd.f32 0.0, %v1652
      %1654 = vmatmul.f32.gmra.mxu0 %v1583
      %v1655 = vpop.f32.mrf.mxu0
      %v1656 = vadd.f32 0.0, %v1655
      %1657 = vmatmul.f32.gmra.mxu0 %v1584
      %v1658 = vpop.f32.mrf.mxu0
      %v1659 = vadd.f32 0.0, %v1658
      %1660 = vmatmul.f32.gmra.mxu0 %v1585
      %v1661 = vpop.f32.mrf.mxu0
      %v1662 = vadd.f32 0.0, %v1661
      %1663 = vmatmul.f32.gmra.mxu0 %v1586
      %v1664 = vpop.f32.mrf.mxu0
      %v1665 = vadd.f32 0.0, %v1664
      %1666 = vmatmul.f32.gmra.mxu0 %v1587
      %v1667 = vpop.f32.mrf.mxu0
      %v1668 = vadd.f32 0.0, %v1667
      %1669 = vmatmul.f32.gmra.mxu0 %v1588
      %v1670 = vpop.f32.mrf.mxu0
      %v1671 = vadd.f32 0.0, %v1670
      %1672 = vmatmul.f32.gmra.mxu0 %v1589
      %v1673 = vpop.f32.mrf.mxu0
      %v1674 = vadd.f32 0.0, %v1673
      %1675 = vmatmul.f32.gmra.mxu0 %v1590
      %v1676 = vpop.f32.mrf.mxu0
      %v1677 = vadd.f32 0.0, %v1676
      %1678 = vmatmul.f32.gmra.mxu0 %v1591
      %v1679 = vpop.f32.mrf.mxu0
      %v1680 = vadd.f32 0.0, %v1679
      %1681 = vmatmul.f32.gmra.mxu0 %v1592
      %v1682 = vpop.f32.mrf.mxu0
      %v1683 = vadd.f32 0.0, %v1682
      %1684 = vmatmul.f32.gmra.mxu0 %v1593
      %v1685 = vpop.f32.mrf.mxu0
      %v1686 = vadd.f32 0.0, %v1685
      %1687 = vmatmul.f32.gmra.mxu0 %v1594
      %v1688 = vpop.f32.mrf.mxu0
      %v1689 = vadd.f32 0.0, %v1688
      %1690 = vmatmul.f32.gmra.mxu0 %v1595
      %v1691 = vpop.f32.mrf.mxu0
      %v1692 = vadd.f32 0.0, %v1691
      %1693 = vmatmul.f32.gmra.mxu0 %v1596
      %v1694 = vpop.f32.mrf.mxu0
      %v1695 = vadd.f32 0.0, %v1694
      %1696 = vmatmul.f32.gmra.mxu0 %v1597
      %v1697 = vpop.f32.mrf.mxu0
      %v1698 = vadd.f32 0.0, %v1697
      %1699 = vmatmul.f32.gmra.mxu0 %v1598
      %v1700 = vpop.f32.mrf.mxu0
      %v1701 = vadd.f32 0.0, %v1700
      %1702 = vmatmul.f32.gmra.mxu0 %v1599
      %v1703 = vpop.f32.mrf.mxu0
      %v1704 = vadd.f32 0.0, %v1703
      %1705 = vmatmul.f32.gmra.mxu0 %v1600
      %v1706 = vpop.f32.mrf.mxu0
      %v1707 = vadd.f32 0.0, %v1706
      %1708 = vmatmul.f32.gmra.mxu0 %v1601
      %v1709 = vpop.f32.mrf.mxu0
      %v1710 = vadd.f32 0.0, %v1709
      %1711 = vmatmul.f32.gmra.mxu0 %v1602
      %v1712 = vpop.f32.mrf.mxu0
      %v1713 = vadd.f32 0.0, %v1712
      %1714 = vmatmul.f32.gmra.mxu0 %v1603
      %v1715 = vpop.f32.mrf.mxu0
      %v1716 = vadd.f32 0.0, %v1715
      %1717 = vmatmul.f32.gmra.mxu0 %v1604
      %v1718 = vpop.f32.mrf.mxu0
      %v1719 = vadd.f32 0.0, %v1718
      %1720 = vmatmul.f32.gmra.mxu0 %v1605
      %v1721 = vpop.f32.mrf.mxu0
      %v1722 = vadd.f32 0.0, %v1721
      %1723 = vmatmul.f32.gmra.mxu0 %v1606
      %v1724 = vpop.f32.mrf.mxu0
      %v1725 = vadd.f32 0.0, %v1724
      %1726 = vmatmul.f32.gmra.mxu0 %v1607
      %v1727 = vpop.f32.mrf.mxu0
      %v1728 = vadd.f32 0.0, %v1727
      %1729 = vmatmul.f32.gmra.mxu0 %v1608
      %v1730 = vpop.f32.mrf.mxu0
      %v1731 = vadd.f32 0.0, %v1730
      %1732 = vmatmul.f32.gmra.mxu0 %v1609
      %v1733 = vpop.f32.mrf.mxu0
      %v1734 = vadd.f32 0.0, %v1733
      %1735 = vmatmul.f32.gmra.mxu0 %v1610
      %v1736 = vpop.f32.mrf.mxu0
      %v1737 = vadd.f32 0.0, %v1736
      %1738 = vmatmul.f32.gmra.mxu0 %v1611
      %v1739 = vpop.f32.mrf.mxu0
      %v1740 = vadd.f32 0.0, %v1739
      %1741 = vdwg.mxu0
      %v1742 = vadd.f32 %v1548, %v1647
      %v1743 = vadd.f32 %v1549, %v1650
      %v1744 = vadd.f32 %v1550, %v1653
      %v1745 = vadd.f32 %v1551, %v1656
      %v1746 = vadd.f32 %v1552, %v1659
      %v1747 = vadd.f32 %v1553, %v1662
      %v1748 = vadd.f32 %v1554, %v1665
      %v1749 = vadd.f32 %v1555, %v1668
      %v1750 = vadd.f32 %v1556, %v1671
      %v1751 = vadd.f32 %v1557, %v1674
      %v1752 = vadd.f32 %v1558, %v1677
      %v1753 = vadd.f32 %v1559, %v1680
      %v1754 = vadd.f32 %v1560, %v1683
      %v1755 = vadd.f32 %v1561, %v1686
      %v1756 = vadd.f32 %v1562, %v1689
      %v1757 = vadd.f32 %v1563, %v1692
      %v1758 = vadd.f32 %v1564, %v1695
      %v1759 = vadd.f32 %v1565, %v1698
      %v1760 = vadd.f32 %v1566, %v1701
      %v1761 = vadd.f32 %v1567, %v1704
      %v1762 = vadd.f32 %v1568, %v1707
      %v1763 = vadd.f32 %v1569, %v1710
      %v1764 = vadd.f32 %v1570, %v1713
      %v1765 = vadd.f32 %v1571, %v1716
      %v1766 = vadd.f32 %v1572, %v1719
      %v1767 = vadd.f32 %v1573, %v1722
      %v1768 = vadd.f32 %v1574, %v1725
      %v1769 = vadd.f32 %v1575, %v1728
      %v1770 = vadd.f32 %v1576, %v1731
      %v1771 = vadd.f32 %v1577, %v1734
      %v1772 = vadd.f32 %v1578, %v1737
      %v1773 = vadd.f32 %v1579, %v1740
      %v1774 = vld [vmem:[%s1385 + $0x2] sm:$0xff]
      %v1775 = vld [vmem:[%s1385 + $0xa] sm:$0xff]
      %v1776 = vld [vmem:[%s1385 + $0x1a] sm:$0xff]
      %v1777 = vld [vmem:[%s1385 + $0x22] sm:$0xff]
      %v1778 = vld [vmem:[%s1385 + $0x32] sm:$0xff]
      %v1779 = vld [vmem:[%s1385 + $0x3a] sm:$0xff]
      %v1780 = vld [vmem:[%s1385 + $0x4a] sm:$0xff]
      %v1781 = vld [vmem:[%s1385 + $0x52] sm:$0xff]
      %v1782 = vld [vmem:[%s1385 + $0x62] sm:$0xff]
      %v1783 = vld [vmem:[%s1385 + $0x6a] sm:$0xff]
      %v1784 = vld [vmem:[%s1385 + $0x7a] sm:$0xff]
      %v1785 = vld [vmem:[%s1385 + $0x82] sm:$0xff]
      %v1786 = vld [vmem:[%s1385 + $0x92] sm:$0xff]
      %v1787 = vld [vmem:[%s1385 + $0x9a] sm:$0xff]
      %v1788 = vld [vmem:[%s1385 + $0xaa] sm:$0xff]
      %v1789 = vld [vmem:[%s1385 + $0xb2] sm:$0xff]
      %v1790 = vld [vmem:[%s1385 + $0xc2] sm:$0xff]
      %v1791 = vld [vmem:[%s1385 + $0xca] sm:$0xff]
      %v1792 = vld [vmem:[%s1385 + $0xda] sm:$0xff]
      %v1793 = vld [vmem:[%s1385 + $0xe2] sm:$0xff]
      %v1794 = vld [vmem:[%s1385 + $0xf2] sm:$0xff]
      %v1795 = vld [vmem:[%s1385 + $0xfa] sm:$0xff]
      %v1796 = vld [vmem:[%s1385 + $0x10a] sm:$0xff]
      %v1797 = vld [vmem:[%s1385 + $0x112] sm:$0xff]
      %v1798 = vld [vmem:[%s1385 + $0x122] sm:$0xff]
      %v1799 = vld [vmem:[%s1385 + $0x12a] sm:$0xff]
      %v1800 = vld [vmem:[%s1385 + $0x13a] sm:$0xff]
      %v1801 = vld [vmem:[%s1385 + $0x142] sm:$0xff]
      %v1802 = vld [vmem:[%s1385 + $0x152] sm:$0xff]
      %v1803 = vld [vmem:[%s1385 + $0x15a] sm:$0xff]
      %v1804 = vld [vmem:[%s1385 + $0x16a] sm:$0xff]
      %v1805 = vld [vmem:[%s1385 + $0x172] sm:$0xff]
      %s1806 = scalar_lea.vmem %s2, 1024
      %v1807 = vld [vmem:[%s1806] sm:$0xff]
      %v1808 = vld [vmem:[%s1806 + $0x8] sm:$0xff]
      %v1809 = vld [vmem:[%s1806 + $0x10] sm:$0xff]
      %v1810 = vld [vmem:[%s1806 + $0x18] sm:$0xff]
      %v1811 = vld [vmem:[%s1806 + $0x20] sm:$0xff]
      %v1812 = vld [vmem:[%s1806 + $0x28] sm:$0xff]
      %v1813 = vld [vmem:[%s1806 + $0x30] sm:$0xff]
      %v1814 = vld [vmem:[%s1806 + $0x38] sm:$0xff]
      %v1815 = vld [vmem:[%s1806 + $0x40] sm:$0xff]
      %v1816 = vld [vmem:[%s1806 + $0x48] sm:$0xff]
      %v1817 = vld [vmem:[%s1806 + $0x50] sm:$0xff]
      %v1818 = vld [vmem:[%s1806 + $0x58] sm:$0xff]
      %v1819 = vld [vmem:[%s1806 + $0x60] sm:$0xff]
      %v1820 = vld [vmem:[%s1806 + $0x68] sm:$0xff]
      %v1821 = vld [vmem:[%s1806 + $0x70] sm:$0xff]
      %v1822 = vld [vmem:[%s1806 + $0x78] sm:$0xff]
      %1823 = vmatpush.msra.mxu0 %v1822
      %1824 = vmatpush.msra.mxu0 %v1821
      %1825 = vmatpush.msra.mxu0 %v1820
      %1826 = vmatpush.msra.mxu0 %v1819
      %1827 = vmatpush.msra.mxu0 %v1818
      %1828 = vmatpush.msra.mxu0 %v1817
      %1829 = vmatpush.msra.mxu0 %v1816
      %1830 = vmatpush.msra.mxu0 %v1815
      %1831 = vmatpush.msra.mxu0 %v1814
      %1832 = vmatpush.msra.mxu0 %v1813
      %1833 = vmatpush.msra.mxu0 %v1812
      %1834 = vmatpush.msra.mxu0 %v1811
      %1835 = vmatpush.msra.mxu0 %v1810
      %1836 = vmatpush.msra.mxu0 %v1809
      %1837 = vmatpush.msra.mxu0 %v1808
      %1838 = vmatpush.msra.mxu0 %v1807
      %1839 = vmatmul.f32.gmra.mxu0 %v1774
      %v1840 = vpop.f32.mrf.mxu0
      %v1841 = vadd.f32 0.0, %v1840
      %1842 = vmatmul.f32.gmra.mxu0 %v1775
      %v1843 = vpop.f32.mrf.mxu0
      %v1844 = vadd.f32 0.0, %v1843
      %1845 = vmatmul.f32.gmra.mxu0 %v1776
      %v1846 = vpop.f32.mrf.mxu0
      %v1847 = vadd.f32 0.0, %v1846
      %1848 = vmatmul.f32.gmra.mxu0 %v1777
      %v1849 = vpop.f32.mrf.mxu0
      %v1850 = vadd.f32 0.0, %v1849
      %1851 = vmatmul.f32.gmra.mxu0 %v1778
      %v1852 = vpop.f32.mrf.mxu0
      %v1853 = vadd.f32 0.0, %v1852
      %1854 = vmatmul.f32.gmra.mxu0 %v1779
      %v1855 = vpop.f32.mrf.mxu0
      %v1856 = vadd.f32 0.0, %v1855
      %1857 = vmatmul.f32.gmra.mxu0 %v1780
      %v1858 = vpop.f32.mrf.mxu0
      %v1859 = vadd.f32 0.0, %v1858
      %1860 = vmatmul.f32.gmra.mxu0 %v1781
      %v1861 = vpop.f32.mrf.mxu0
      %v1862 = vadd.f32 0.0, %v1861
      %1863 = vmatmul.f32.gmra.mxu0 %v1782
      %v1864 = vpop.f32.mrf.mxu0
      %v1865 = vadd.f32 0.0, %v1864
      %1866 = vmatmul.f32.gmra.mxu0 %v1783
      %v1867 = vpop.f32.mrf.mxu0
      %v1868 = vadd.f32 0.0, %v1867
      %1869 = vmatmul.f32.gmra.mxu0 %v1784
      %v1870 = vpop.f32.mrf.mxu0
      %v1871 = vadd.f32 0.0, %v1870
      %1872 = vmatmul.f32.gmra.mxu0 %v1785
      %v1873 = vpop.f32.mrf.mxu0
      %v1874 = vadd.f32 0.0, %v1873
      %1875 = vmatmul.f32.gmra.mxu0 %v1786
      %v1876 = vpop.f32.mrf.mxu0
      %v1877 = vadd.f32 0.0, %v1876
      %1878 = vmatmul.f32.gmra.mxu0 %v1787
      %v1879 = vpop.f32.mrf.mxu0
      %v1880 = vadd.f32 0.0, %v1879
      %1881 = vmatmul.f32.gmra.mxu0 %v1788
      %v1882 = vpop.f32.mrf.mxu0
      %v1883 = vadd.f32 0.0, %v1882
      %1884 = vmatmul.f32.gmra.mxu0 %v1789
      %v1885 = vpop.f32.mrf.mxu0
      %v1886 = vadd.f32 0.0, %v1885
      %1887 = vmatmul.f32.gmra.mxu0 %v1790
      %v1888 = vpop.f32.mrf.mxu0
      %v1889 = vadd.f32 0.0, %v1888
      %1890 = vmatmul.f32.gmra.mxu0 %v1791
      %v1891 = vpop.f32.mrf.mxu0
      %v1892 = vadd.f32 0.0, %v1891
      %1893 = vmatmul.f32.gmra.mxu0 %v1792
      %v1894 = vpop.f32.mrf.mxu0
      %v1895 = vadd.f32 0.0, %v1894
      %1896 = vmatmul.f32.gmra.mxu0 %v1793
      %v1897 = vpop.f32.mrf.mxu0
      %v1898 = vadd.f32 0.0, %v1897
      %1899 = vmatmul.f32.gmra.mxu0 %v1794
      %v1900 = vpop.f32.mrf.mxu0
      %v1901 = vadd.f32 0.0, %v1900
      %1902 = vmatmul.f32.gmra.mxu0 %v1795
      %v1903 = vpop.f32.mrf.mxu0
      %v1904 = vadd.f32 0.0, %v1903
      %1905 = vmatmul.f32.gmra.mxu0 %v1796
      %v1906 = vpop.f32.mrf.mxu0
      %v1907 = vadd.f32 0.0, %v1906
      %1908 = vmatmul.f32.gmra.mxu0 %v1797
      %v1909 = vpop.f32.mrf.mxu0
      %v1910 = vadd.f32 0.0, %v1909
      %1911 = vmatmul.f32.gmra.mxu0 %v1798
      %v1912 = vpop.f32.mrf.mxu0
      %v1913 = vadd.f32 0.0, %v1912
      %1914 = vmatmul.f32.gmra.mxu0 %v1799
      %v1915 = vpop.f32.mrf.mxu0
      %v1916 = vadd.f32 0.0, %v1915
      %1917 = vmatmul.f32.gmra.mxu0 %v1800
      %v1918 = vpop.f32.mrf.mxu0
      %v1919 = vadd.f32 0.0, %v1918
      %1920 = vmatmul.f32.gmra.mxu0 %v1801
      %v1921 = vpop.f32.mrf.mxu0
      %v1922 = vadd.f32 0.0, %v1921
      %1923 = vmatmul.f32.gmra.mxu0 %v1802
      %v1924 = vpop.f32.mrf.mxu0
      %v1925 = vadd.f32 0.0, %v1924
      %1926 = vmatmul.f32.gmra.mxu0 %v1803
      %v1927 = vpop.f32.mrf.mxu0
      %v1928 = vadd.f32 0.0, %v1927
      %1929 = vmatmul.f32.gmra.mxu0 %v1804
      %v1930 = vpop.f32.mrf.mxu0
      %v1931 = vadd.f32 0.0, %v1930
      %1932 = vmatmul.f32.gmra.mxu0 %v1805
      %v1933 = vpop.f32.mrf.mxu0
      %v1934 = vadd.f32 0.0, %v1933
      %1935 = vdwg.mxu0
      %v1936 = vadd.f32 %v1742, %v1841
      %v1937 = vadd.f32 %v1743, %v1844
      %v1938 = vadd.f32 %v1744, %v1847
      %v1939 = vadd.f32 %v1745, %v1850
      %v1940 = vadd.f32 %v1746, %v1853
      %v1941 = vadd.f32 %v1747, %v1856
      %v1942 = vadd.f32 %v1748, %v1859
      %v1943 = vadd.f32 %v1749, %v1862
      %v1944 = vadd.f32 %v1750, %v1865
      %v1945 = vadd.f32 %v1751, %v1868
      %v1946 = vadd.f32 %v1752, %v1871
      %v1947 = vadd.f32 %v1753, %v1874
      %v1948 = vadd.f32 %v1754, %v1877
      %v1949 = vadd.f32 %v1755, %v1880
      %v1950 = vadd.f32 %v1756, %v1883
      %v1951 = vadd.f32 %v1757, %v1886
      %v1952 = vadd.f32 %v1758, %v1889
      %v1953 = vadd.f32 %v1759, %v1892
      %v1954 = vadd.f32 %v1760, %v1895
      %v1955 = vadd.f32 %v1761, %v1898
      %v1956 = vadd.f32 %v1762, %v1901
      %v1957 = vadd.f32 %v1763, %v1904
      %v1958 = vadd.f32 %v1764, %v1907
      %v1959 = vadd.f32 %v1765, %v1910
      %v1960 = vadd.f32 %v1766, %v1913
      %v1961 = vadd.f32 %v1767, %v1916
      %v1962 = vadd.f32 %v1768, %v1919
      %v1963 = vadd.f32 %v1769, %v1922
      %v1964 = vadd.f32 %v1770, %v1925
      %v1965 = vadd.f32 %v1771, %v1928
      %v1966 = vadd.f32 %v1772, %v1931
      %v1967 = vadd.f32 %v1773, %v1934
      %v1968 = vld [vmem:[%s3] sm:$0x1]
      %v1970 = vperm.slane %v1968, 0
      %v1972 = vadd.f32 %v1936, %v1970
      %v1973 = vadd.f32 %v1937, %v1970
      %v1974 = vadd.f32 %v1938, %v1970
      %v1975 = vadd.f32 %v1939, %v1970
      %v1976 = vadd.f32 %v1940, %v1970
      %v1977 = vadd.f32 %v1941, %v1970
      %v1978 = vadd.f32 %v1942, %v1970
      %v1979 = vadd.f32 %v1943, %v1970
      %v1980 = vadd.f32 %v1944, %v1970
      %v1981 = vadd.f32 %v1945, %v1970
      %v1982 = vadd.f32 %v1946, %v1970
      %v1983 = vadd.f32 %v1947, %v1970
      %v1984 = vadd.f32 %v1948, %v1970
      %v1985 = vadd.f32 %v1949, %v1970
      %v1986 = vadd.f32 %v1950, %v1970
      %v1987 = vadd.f32 %v1951, %v1970
      %v1988 = vadd.f32 %v1952, %v1970
      %v1989 = vadd.f32 %v1953, %v1970
      %v1990 = vadd.f32 %v1954, %v1970
      %v1991 = vadd.f32 %v1955, %v1970
      %v1992 = vadd.f32 %v1956, %v1970
      %v1993 = vadd.f32 %v1957, %v1970
      %v1994 = vadd.f32 %v1958, %v1970
      %v1995 = vadd.f32 %v1959, %v1970
      %v1996 = vadd.f32 %v1960, %v1970
      %v1997 = vadd.f32 %v1961, %v1970
      %v1998 = vadd.f32 %v1962, %v1970
      %v1999 = vadd.f32 %v1963, %v1970
      %v2000 = vadd.f32 %v1964, %v1970
      %v2001 = vadd.f32 %v1965, %v1970
      %v2002 = vadd.f32 %v1966, %v1970
      %v2003 = vadd.f32 %v1967, %v1970
      %v2004 = vld [vmem:[%s274] sm:$0xff]
      %v2005 = vld [vmem:[%s274 + $0x8] sm:$0xff]
      %v2006 = vld [vmem:[%s274 + $0x10] sm:$0xff]
      %v2007 = vld [vmem:[%s274 + $0x18] sm:$0xff]
      %v2008 = vld [vmem:[%s274 + $0x20] sm:$0xff]
      %v2009 = vld [vmem:[%s274 + $0x28] sm:$0xff]
      %v2010 = vld [vmem:[%s274 + $0x30] sm:$0xff]
      %v2011 = vld [vmem:[%s274 + $0x38] sm:$0xff]
      %v2012 = vld [vmem:[%s274 + $0x40] sm:$0xff]
      %v2013 = vld [vmem:[%s274 + $0x48] sm:$0xff]
      %v2014 = vld [vmem:[%s274 + $0x50] sm:$0xff]
      %v2015 = vld [vmem:[%s274 + $0x58] sm:$0xff]
      %v2016 = vld [vmem:[%s274 + $0x60] sm:$0xff]
      %v2017 = vld [vmem:[%s274 + $0x68] sm:$0xff]
      %v2018 = vld [vmem:[%s274 + $0x70] sm:$0xff]
      %v2019 = vld [vmem:[%s274 + $0x78] sm:$0xff]
      %v2020 = vld [vmem:[%s274 + $0x80] sm:$0xff]
      %v2021 = vld [vmem:[%s274 + $0x88] sm:$0xff]
      %v2022 = vld [vmem:[%s274 + $0x90] sm:$0xff]
      %v2023 = vld [vmem:[%s274 + $0x98] sm:$0xff]
      %v2024 = vld [vmem:[%s274 + $0xa0] sm:$0xff]
      %v2025 = vld [vmem:[%s274 + $0xa8] sm:$0xff]
      %v2026 = vld [vmem:[%s274 + $0xb0] sm:$0xff]
      %v2027 = vld [vmem:[%s274 + $0xb8] sm:$0xff]
      %v2028 = vld [vmem:[%s274 + $0xc0] sm:$0xff]
      %v2029 = vld [vmem:[%s274 + $0xc8] sm:$0xff]
      %v2030 = vld [vmem:[%s274 + $0xd0] sm:$0xff]
      %v2031 = vld [vmem:[%s274 + $0xd8] sm:$0xff]
      %v2032 = vld [vmem:[%s274 + $0xe0] sm:$0xff]
      %v2033 = vld [vmem:[%s274 + $0xe8] sm:$0xff]
      %v2034 = vld [vmem:[%s274 + $0xf0] sm:$0xff]
      %v2035 = vld [vmem:[%s274 + $0xf8] sm:$0xff]
      %v2036 = vld [vmem:[%s4] sm:$0xff]
      %v2037 = vld [vmem:[%s4 + $0x8] sm:$0xff]
      %v2038 = vld [vmem:[%s4 + $0x10] sm:$0xff]
      %v2039 = vld [vmem:[%s4 + $0x18] sm:$0xff]
      %v2040 = vld [vmem:[%s4 + $0x20] sm:$0xff]
      %v2041 = vld [vmem:[%s4 + $0x28] sm:$0xff]
      %v2042 = vld [vmem:[%s4 + $0x30] sm:$0xff]
      %v2043 = vld [vmem:[%s4 + $0x38] sm:$0xff]
      %v2044 = vld [vmem:[%s4 + $0x40] sm:$0xff]
      %v2045 = vld [vmem:[%s4 + $0x48] sm:$0xff]
      %v2046 = vld [vmem:[%s4 + $0x50] sm:$0xff]
      %v2047 = vld [vmem:[%s4 + $0x58] sm:$0xff]
      %v2048 = vld [vmem:[%s4 + $0x60] sm:$0xff]
      %v2049 = vld [vmem:[%s4 + $0x68] sm:$0xff]
      %v2050 = vld [vmem:[%s4 + $0x70] sm:$0xff]
      %v2051 = vld [vmem:[%s4 + $0x78] sm:$0xff]
      %v2052 = vld [vmem:[%s4 + $0x80] sm:$0xff]
      %v2053 = vld [vmem:[%s4 + $0x88] sm:$0xff]
      %v2054 = vld [vmem:[%s4 + $0x90] sm:$0xff]
      %v2055 = vld [vmem:[%s4 + $0x98] sm:$0xff]
      %v2056 = vld [vmem:[%s4 + $0xa0] sm:$0xff]
      %v2057 = vld [vmem:[%s4 + $0xa8] sm:$0xff]
      %v2058 = vld [vmem:[%s4 + $0xb0] sm:$0xff]
      %v2059 = vld [vmem:[%s4 + $0xb8] sm:$0xff]
      %v2060 = vld [vmem:[%s4 + $0xc0] sm:$0xff]
      %v2061 = vld [vmem:[%s4 + $0xc8] sm:$0xff]
      %v2062 = vld [vmem:[%s4 + $0xd0] sm:$0xff]
      %v2063 = vld [vmem:[%s4 + $0xd8] sm:$0xff]
      %v2064 = vld [vmem:[%s4 + $0xe0] sm:$0xff]
      %v2065 = vld [vmem:[%s4 + $0xe8] sm:$0xff]
      %v2066 = vld [vmem:[%s4 + $0xf0] sm:$0xff]
      %v2067 = vld [vmem:[%s4 + $0xf8] sm:$0xff]
      %s2068 = scalar_lea.vmem %s4, 256
      %v2069 = vld [vmem:[%s2068] sm:$0xff]
      %v2070 = vld [vmem:[%s2068 + $0x8] sm:$0xff]
      %v2071 = vld [vmem:[%s2068 + $0x10] sm:$0xff]
      %v2072 = vld [vmem:[%s2068 + $0x18] sm:$0xff]
      %v2073 = vld [vmem:[%s2068 + $0x20] sm:$0xff]
      %v2074 = vld [vmem:[%s2068 + $0x28] sm:$0xff]
      %v2075 = vld [vmem:[%s2068 + $0x30] sm:$0xff]
      %v2076 = vld [vmem:[%s2068 + $0x38] sm:$0xff]
      %v2077 = vld [vmem:[%s2068 + $0x40] sm:$0xff]
      %v2078 = vld [vmem:[%s2068 + $0x48] sm:$0xff]
      %v2079 = vld [vmem:[%s2068 + $0x50] sm:$0xff]
      %v2080 = vld [vmem:[%s2068 + $0x58] sm:$0xff]
      %v2081 = vld [vmem:[%s2068 + $0x60] sm:$0xff]
      %v2082 = vld [vmem:[%s2068 + $0x68] sm:$0xff]
      %v2083 = vld [vmem:[%s2068 + $0x70] sm:$0xff]
      %v2084 = vld [vmem:[%s2068 + $0x78] sm:$0xff]
      %v2085 = vld [vmem:[%s2068 + $0x80] sm:$0xff]
      %v2086 = vld [vmem:[%s2068 + $0x88] sm:$0xff]
      %v2087 = vld [vmem:[%s2068 + $0x90] sm:$0xff]
      %v2088 = vld [vmem:[%s2068 + $0x98] sm:$0xff]
      %v2089 = vld [vmem:[%s2068 + $0xa0] sm:$0xff]
      %v2090 = vld [vmem:[%s2068 + $0xa8] sm:$0xff]
      %v2091 = vld [vmem:[%s2068 + $0xb0] sm:$0xff]
      %v2092 = vld [vmem:[%s2068 + $0xb8] sm:$0xff]
      %v2093 = vld [vmem:[%s2068 + $0xc0] sm:$0xff]
      %v2094 = vld [vmem:[%s2068 + $0xc8] sm:$0xff]
      %v2095 = vld [vmem:[%s2068 + $0xd0] sm:$0xff]
      %v2096 = vld [vmem:[%s2068 + $0xd8] sm:$0xff]
      %v2097 = vld [vmem:[%s2068 + $0xe0] sm:$0xff]
      %v2098 = vld [vmem:[%s2068 + $0xe8] sm:$0xff]
      %v2099 = vld [vmem:[%s2068 + $0xf0] sm:$0xff]
      %v2100 = vld [vmem:[%s2068 + $0xf8] sm:$0xff]
      %s2101 = scalar_lea.vmem %s4, 512
      %v2102 = vld [vmem:[%s2101] sm:$0xff]
      %v2103 = vld [vmem:[%s2101 + $0x8] sm:$0xff]
      %v2104 = vld [vmem:[%s2101 + $0x10] sm:$0xff]
      %v2105 = vld [vmem:[%s2101 + $0x18] sm:$0xff]
      %v2106 = vld [vmem:[%s2101 + $0x20] sm:$0xff]
      %v2107 = vld [vmem:[%s2101 + $0x28] sm:$0xff]
      %v2108 = vld [vmem:[%s2101 + $0x30] sm:$0xff]
      %v2109 = vld [vmem:[%s2101 + $0x38] sm:$0xff]
      %v2110 = vld [vmem:[%s2101 + $0x40] sm:$0xff]
      %v2111 = vld [vmem:[%s2101 + $0x48] sm:$0xff]
      %v2112 = vld [vmem:[%s2101 + $0x50] sm:$0xff]
      %v2113 = vld [vmem:[%s2101 + $0x58] sm:$0xff]
      %v2114 = vld [vmem:[%s2101 + $0x60] sm:$0xff]
      %v2115 = vld [vmem:[%s2101 + $0x68] sm:$0xff]
      %v2116 = vld [vmem:[%s2101 + $0x70] sm:$0xff]
      %v2117 = vld [vmem:[%s2101 + $0x78] sm:$0xff]
      %v2118 = vld [vmem:[%s2101 + $0x80] sm:$0xff]
      %v2119 = vld [vmem:[%s2101 + $0x88] sm:$0xff]
      %v2120 = vld [vmem:[%s2101 + $0x90] sm:$0xff]
      %v2121 = vld [vmem:[%s2101 + $0x98] sm:$0xff]
      %v2122 = vld [vmem:[%s2101 + $0xa0] sm:$0xff]
      %v2123 = vld [vmem:[%s2101 + $0xa8] sm:$0xff]
      %v2124 = vld [vmem:[%s2101 + $0xb0] sm:$0xff]
      %v2125 = vld [vmem:[%s2101 + $0xb8] sm:$0xff]
      %v2126 = vld [vmem:[%s2101 + $0xc0] sm:$0xff]
      %v2127 = vld [vmem:[%s2101 + $0xc8] sm:$0xff]
      %v2128 = vld [vmem:[%s2101 + $0xd0] sm:$0xff]
      %v2129 = vld [vmem:[%s2101 + $0xd8] sm:$0xff]
      %v2130 = vld [vmem:[%s2101 + $0xe0] sm:$0xff]
      %v2131 = vld [vmem:[%s2101 + $0xe8] sm:$0xff]
      %v2132 = vld [vmem:[%s2101 + $0xf0] sm:$0xff]
      %v2133 = vld [vmem:[%s2101 + $0xf8] sm:$0xff]
      %v2134 = vmul.f32 %v2036, %v2004
      %v2135 = vmul.f32 %v2037, %v2005
      %v2136 = vmul.f32 %v2038, %v2006
      %v2137 = vmul.f32 %v2039, %v2007
      %v2138 = vmul.f32 %v2040, %v2008
      %v2139 = vmul.f32 %v2041, %v2009
      %v2140 = vmul.f32 %v2042, %v2010
      %v2141 = vmul.f32 %v2043, %v2011
      %v2142 = vmul.f32 %v2044, %v2012
      %v2143 = vmul.f32 %v2045, %v2013
      %v2144 = vmul.f32 %v2046, %v2014
      %v2145 = vmul.f32 %v2047, %v2015
      %v2146 = vmul.f32 %v2048, %v2016
      %v2147 = vmul.f32 %v2049, %v2017
      %v2148 = vmul.f32 %v2050, %v2018
      %v2149 = vmul.f32 %v2051, %v2019
      %v2150 = vmul.f32 %v2052, %v2020
      %v2151 = vmul.f32 %v2053, %v2021
      %v2152 = vmul.f32 %v2054, %v2022
      %v2153 = vmul.f32 %v2055, %v2023
      %v2154 = vmul.f32 %v2056, %v2024
      %v2155 = vmul.f32 %v2057, %v2025
      %v2156 = vmul.f32 %v2058, %v2026
      %v2157 = vmul.f32 %v2059, %v2027
      %v2158 = vmul.f32 %v2060, %v2028
      %v2159 = vmul.f32 %v2061, %v2029
      %v2160 = vmul.f32 %v2062, %v2030
      %v2161 = vmul.f32 %v2063, %v2031
      %v2162 = vmul.f32 %v2064, %v2032
      %v2163 = vmul.f32 %v2065, %v2033
      %v2164 = vmul.f32 %v2066, %v2034
      %v2165 = vmul.f32 %v2067, %v2035
      %v2166 = vadd.f32 %v1972, %v2134
      %v2167 = vadd.f32 %v1973, %v2135
      %v2168 = vadd.f32 %v1974, %v2136
      %v2169 = vadd.f32 %v1975, %v2137
      %v2170 = vadd.f32 %v1976, %v2138
      %v2171 = vadd.f32 %v1977, %v2139
      %v2172 = vadd.f32 %v1978, %v2140
      %v2173 = vadd.f32 %v1979, %v2141
      %v2174 = vadd.f32 %v1980, %v2142
      %v2175 = vadd.f32 %v1981, %v2143
      %v2176 = vadd.f32 %v1982, %v2144
      %v2177 = vadd.f32 %v1983, %v2145
      %v2178 = vadd.f32 %v1984, %v2146
      %v2179 = vadd.f32 %v1985, %v2147
      %v2180 = vadd.f32 %v1986, %v2148
      %v2181 = vadd.f32 %v1987, %v2149
      %v2182 = vadd.f32 %v1988, %v2150
      %v2183 = vadd.f32 %v1989, %v2151
      %v2184 = vadd.f32 %v1990, %v2152
      %v2185 = vadd.f32 %v1991, %v2153
      %v2186 = vadd.f32 %v1992, %v2154
      %v2187 = vadd.f32 %v1993, %v2155
      %v2188 = vadd.f32 %v1994, %v2156
      %v2189 = vadd.f32 %v1995, %v2157
      %v2190 = vadd.f32 %v1996, %v2158
      %v2191 = vadd.f32 %v1997, %v2159
      %v2192 = vadd.f32 %v1998, %v2160
      %v2193 = vadd.f32 %v1999, %v2161
      %v2194 = vadd.f32 %v2000, %v2162
      %v2195 = vadd.f32 %v2001, %v2163
      %v2196 = vadd.f32 %v2002, %v2164
      %v2197 = vadd.f32 %v2003, %v2165
      %v2198 = vmul.f32 %v2166, 0.2
      %v2199 = vmul.f32 %v2167, 0.2
      %v2200 = vmul.f32 %v2168, 0.2
      %v2201 = vmul.f32 %v2169, 0.2
      %v2202 = vmul.f32 %v2170, 0.2
      %v2203 = vmul.f32 %v2171, 0.2
      %v2204 = vmul.f32 %v2172, 0.2
      %v2205 = vmul.f32 %v2173, 0.2
      %v2206 = vmul.f32 %v2174, 0.2
      %v2207 = vmul.f32 %v2175, 0.2
      %v2208 = vmul.f32 %v2176, 0.2
      %v2209 = vmul.f32 %v2177, 0.2
      %v2210 = vmul.f32 %v2178, 0.2
      %v2211 = vmul.f32 %v2179, 0.2
      %v2212 = vmul.f32 %v2180, 0.2
      %v2213 = vmul.f32 %v2181, 0.2
      %v2214 = vmul.f32 %v2182, 0.2
      %v2215 = vmul.f32 %v2183, 0.2
      %v2216 = vmul.f32 %v2184, 0.2
      %v2217 = vmul.f32 %v2185, 0.2
      %v2218 = vmul.f32 %v2186, 0.2
      %v2219 = vmul.f32 %v2187, 0.2
      %v2220 = vmul.f32 %v2188, 0.2
      %v2221 = vmul.f32 %v2189, 0.2
      %v2222 = vmul.f32 %v2190, 0.2
      %v2223 = vmul.f32 %v2191, 0.2
      %v2224 = vmul.f32 %v2192, 0.2
      %v2225 = vmul.f32 %v2193, 0.2
      %v2226 = vmul.f32 %v2194, 0.2
      %v2227 = vmul.f32 %v2195, 0.2
      %v2228 = vmul.f32 %v2196, 0.2
      %v2229 = vmul.f32 %v2197, 0.2
      %v2230 = vadd.f32 %v2198, 0.5
      %v2231 = vadd.f32 %v2199, 0.5
      %v2232 = vadd.f32 %v2200, 0.5
      %v2233 = vadd.f32 %v2201, 0.5
      %v2234 = vadd.f32 %v2202, 0.5
      %v2235 = vadd.f32 %v2203, 0.5
      %v2236 = vadd.f32 %v2204, 0.5
      %v2237 = vadd.f32 %v2205, 0.5
      %v2238 = vadd.f32 %v2206, 0.5
      %v2239 = vadd.f32 %v2207, 0.5
      %v2240 = vadd.f32 %v2208, 0.5
      %v2241 = vadd.f32 %v2209, 0.5
      %v2242 = vadd.f32 %v2210, 0.5
      %v2243 = vadd.f32 %v2211, 0.5
      %v2244 = vadd.f32 %v2212, 0.5
      %v2245 = vadd.f32 %v2213, 0.5
      %v2246 = vadd.f32 %v2214, 0.5
      %v2247 = vadd.f32 %v2215, 0.5
      %v2248 = vadd.f32 %v2216, 0.5
      %v2249 = vadd.f32 %v2217, 0.5
      %v2250 = vadd.f32 %v2218, 0.5
      %v2251 = vadd.f32 %v2219, 0.5
      %v2252 = vadd.f32 %v2220, 0.5
      %v2253 = vadd.f32 %v2221, 0.5
      %v2254 = vadd.f32 %v2222, 0.5
      %v2255 = vadd.f32 %v2223, 0.5
      %v2256 = vadd.f32 %v2224, 0.5
      %v2257 = vadd.f32 %v2225, 0.5
      %v2258 = vadd.f32 %v2226, 0.5
      %v2259 = vadd.f32 %v2227, 0.5
      %v2260 = vadd.f32 %v2228, 0.5
      %v2261 = vadd.f32 %v2229, 0.5
      %v2262 = vmin.f32 %v2230, 1.0
      %v2263 = vmin.f32 %v2231, 1.0
      %v2264 = vmin.f32 %v2232, 1.0
      %v2265 = vmin.f32 %v2233, 1.0
      %v2266 = vmin.f32 %v2234, 1.0
      %v2267 = vmin.f32 %v2235, 1.0
      %v2268 = vmin.f32 %v2236, 1.0
      %v2269 = vmin.f32 %v2237, 1.0
      %v2270 = vmin.f32 %v2238, 1.0
      %v2271 = vmin.f32 %v2239, 1.0
      %v2272 = vmin.f32 %v2240, 1.0
      %v2273 = vmin.f32 %v2241, 1.0
      %v2274 = vmin.f32 %v2242, 1.0
      %v2275 = vmin.f32 %v2243, 1.0
      %v2276 = vmin.f32 %v2244, 1.0
      %v2277 = vmin.f32 %v2245, 1.0
      %v2278 = vmin.f32 %v2246, 1.0
      %v2279 = vmin.f32 %v2247, 1.0
      %v2280 = vmin.f32 %v2248, 1.0
      %v2281 = vmin.f32 %v2249, 1.0
      %v2282 = vmin.f32 %v2250, 1.0
      %v2283 = vmin.f32 %v2251, 1.0
      %v2284 = vmin.f32 %v2252, 1.0
      %v2285 = vmin.f32 %v2253, 1.0
      %v2286 = vmin.f32 %v2254, 1.0
      %v2287 = vmin.f32 %v2255, 1.0
      %v2288 = vmin.f32 %v2256, 1.0
      %v2289 = vmin.f32 %v2257, 1.0
      %v2290 = vmin.f32 %v2258, 1.0
      %v2291 = vmin.f32 %v2259, 1.0
      %v2292 = vmin.f32 %v2260, 1.0
      %v2293 = vmin.f32 %v2261, 1.0
      %v2294 = vmax.f32 %v2262, 0.0
      %v2295 = vmax.f32 %v2263, 0.0
      %v2296 = vmax.f32 %v2264, 0.0
      %v2297 = vmax.f32 %v2265, 0.0
      %v2298 = vmax.f32 %v2266, 0.0
      %v2299 = vmax.f32 %v2267, 0.0
      %v2300 = vmax.f32 %v2268, 0.0
      %v2301 = vmax.f32 %v2269, 0.0
      %v2302 = vmax.f32 %v2270, 0.0
      %v2303 = vmax.f32 %v2271, 0.0
      %v2304 = vmax.f32 %v2272, 0.0
      %v2305 = vmax.f32 %v2273, 0.0
      %v2306 = vmax.f32 %v2274, 0.0
      %v2307 = vmax.f32 %v2275, 0.0
      %v2308 = vmax.f32 %v2276, 0.0
      %v2309 = vmax.f32 %v2277, 0.0
      %v2310 = vmax.f32 %v2278, 0.0
      %v2311 = vmax.f32 %v2279, 0.0
      %v2312 = vmax.f32 %v2280, 0.0
      %v2313 = vmax.f32 %v2281, 0.0
      %v2314 = vmax.f32 %v2282, 0.0
      %v2315 = vmax.f32 %v2283, 0.0
      %v2316 = vmax.f32 %v2284, 0.0
      %v2317 = vmax.f32 %v2285, 0.0
      %v2318 = vmax.f32 %v2286, 0.0
      %v2319 = vmax.f32 %v2287, 0.0
      %v2320 = vmax.f32 %v2288, 0.0
      %v2321 = vmax.f32 %v2289, 0.0
      %v2322 = vmax.f32 %v2290, 0.0
      %v2323 = vmax.f32 %v2291, 0.0
      %v2324 = vmax.f32 %v2292, 0.0
      %v2325 = vmax.f32 %v2293, 0.0
      %v2326 = vmul.f32 %v2069, %v2004
      %v2327 = vmul.f32 %v2070, %v2005
      %v2328 = vmul.f32 %v2071, %v2006
      %v2329 = vmul.f32 %v2072, %v2007
      %v2330 = vmul.f32 %v2073, %v2008
      %v2331 = vmul.f32 %v2074, %v2009
      %v2332 = vmul.f32 %v2075, %v2010
      %v2333 = vmul.f32 %v2076, %v2011
      %v2334 = vmul.f32 %v2077, %v2012
      %v2335 = vmul.f32 %v2078, %v2013
      %v2336 = vmul.f32 %v2079, %v2014
      %v2337 = vmul.f32 %v2080, %v2015
      %v2338 = vmul.f32 %v2081, %v2016
      %v2339 = vmul.f32 %v2082, %v2017
      %v2340 = vmul.f32 %v2083, %v2018
      %v2341 = vmul.f32 %v2084, %v2019
      %v2342 = vmul.f32 %v2085, %v2020
      %v2343 = vmul.f32 %v2086, %v2021
      %v2344 = vmul.f32 %v2087, %v2022
      %v2345 = vmul.f32 %v2088, %v2023
      %v2346 = vmul.f32 %v2089, %v2024
      %v2347 = vmul.f32 %v2090, %v2025
      %v2348 = vmul.f32 %v2091, %v2026
      %v2349 = vmul.f32 %v2092, %v2027
      %v2350 = vmul.f32 %v2093, %v2028
      %v2351 = vmul.f32 %v2094, %v2029
      %v2352 = vmul.f32 %v2095, %v2030
      %v2353 = vmul.f32 %v2096, %v2031
      %v2354 = vmul.f32 %v2097, %v2032
      %v2355 = vmul.f32 %v2098, %v2033
      %v2356 = vmul.f32 %v2099, %v2034
      %v2357 = vmul.f32 %v2100, %v2035
      %2390 = vrot.lane.b32.xlu0 %v2326, 32
      %v2391 = vpop.permute.xlu0 %2390
      %2392 = vrot.lane.b32.xlu0 %v2327, 32
      %v2393 = vpop.permute.xlu0 %2392
      %2394 = vrot.lane.b32.xlu0 %v2328, 32
      %v2395 = vpop.permute.xlu0 %2394
      %2396 = vrot.lane.b32.xlu0 %v2329, 32
      %v2397 = vpop.permute.xlu0 %2396
      %2398 = vrot.lane.b32.xlu0 %v2330, 32
      %v2399 = vpop.permute.xlu0 %2398
      %2400 = vrot.lane.b32.xlu0 %v2331, 32
      %v2401 = vpop.permute.xlu0 %2400
      %2402 = vrot.lane.b32.xlu0 %v2332, 32
      %v2403 = vpop.permute.xlu0 %2402
      %2404 = vrot.lane.b32.xlu0 %v2333, 32
      %v2405 = vpop.permute.xlu0 %2404
      %2406 = vrot.lane.b32.xlu0 %v2334, 32
      %v2407 = vpop.permute.xlu0 %2406
      %2408 = vrot.lane.b32.xlu0 %v2335, 32
      %v2409 = vpop.permute.xlu0 %2408
      %2410 = vrot.lane.b32.xlu0 %v2336, 32
      %v2411 = vpop.permute.xlu0 %2410
      %2412 = vrot.lane.b32.xlu0 %v2337, 32
      %v2413 = vpop.permute.xlu0 %2412
      %2414 = vrot.lane.b32.xlu0 %v2338, 32
      %v2415 = vpop.permute.xlu0 %2414
      %2416 = vrot.lane.b32.xlu0 %v2339, 32
      %v2417 = vpop.permute.xlu0 %2416
      %2418 = vrot.lane.b32.xlu0 %v2340, 32
      %v2419 = vpop.permute.xlu0 %2418
      %2420 = vrot.lane.b32.xlu0 %v2341, 32
      %v2421 = vpop.permute.xlu0 %2420
      %2422 = vrot.lane.b32.xlu0 %v2342, 32
      %v2423 = vpop.permute.xlu0 %2422
      %2424 = vrot.lane.b32.xlu0 %v2343, 32
      %v2425 = vpop.permute.xlu0 %2424
      %2426 = vrot.lane.b32.xlu0 %v2344, 32
      %v2427 = vpop.permute.xlu0 %2426
      %2428 = vrot.lane.b32.xlu0 %v2345, 32
      %v2429 = vpop.permute.xlu0 %2428
      %2430 = vrot.lane.b32.xlu0 %v2346, 32
      %v2431 = vpop.permute.xlu0 %2430
      %2432 = vrot.lane.b32.xlu0 %v2347, 32
      %v2433 = vpop.permute.xlu0 %2432
      %2434 = vrot.lane.b32.xlu0 %v2348, 32
      %v2435 = vpop.permute.xlu0 %2434
      %2436 = vrot.lane.b32.xlu0 %v2349, 32
      %v2437 = vpop.permute.xlu0 %2436
      %2438 = vrot.lane.b32.xlu0 %v2350, 32
      %v2439 = vpop.permute.xlu0 %2438
      %2440 = vrot.lane.b32.xlu0 %v2351, 32
      %v2441 = vpop.permute.xlu0 %2440
      %2442 = vrot.lane.b32.xlu0 %v2352, 32
      %v2443 = vpop.permute.xlu0 %2442
      %2444 = vrot.lane.b32.xlu0 %v2353, 32
      %v2445 = vpop.permute.xlu0 %2444
      %2446 = vrot.lane.b32.xlu0 %v2354, 32
      %v2447 = vpop.permute.xlu0 %2446
      %2448 = vrot.lane.b32.xlu0 %v2355, 32
      %v2449 = vpop.permute.xlu0 %2448
      %2450 = vrot.lane.b32.xlu0 %v2356, 32
      %v2451 = vpop.permute.xlu0 %2450
      %2452 = vrot.lane.b32.xlu0 %v2357, 32
      %v2453 = vpop.permute.xlu0 %2452
      %v2486 = vadd.f32 %v1972, %v2391
      %v2487 = vadd.f32 %v1973, %v2393
      %v2488 = vadd.f32 %v1974, %v2395
      %v2489 = vadd.f32 %v1975, %v2397
      %v2490 = vadd.f32 %v1976, %v2399
      %v2491 = vadd.f32 %v1977, %v2401
      %v2492 = vadd.f32 %v1978, %v2403
      %v2493 = vadd.f32 %v1979, %v2405
      %v2494 = vadd.f32 %v1980, %v2407
      %v2495 = vadd.f32 %v1981, %v2409
      %v2496 = vadd.f32 %v1982, %v2411
      %v2497 = vadd.f32 %v1983, %v2413
      %v2498 = vadd.f32 %v1984, %v2415
      %v2499 = vadd.f32 %v1985, %v2417
      %v2500 = vadd.f32 %v1986, %v2419
      %v2501 = vadd.f32 %v1987, %v2421
      %v2502 = vadd.f32 %v1988, %v2423
      %v2503 = vadd.f32 %v1989, %v2425
      %v2504 = vadd.f32 %v1990, %v2427
      %v2505 = vadd.f32 %v1991, %v2429
      %v2506 = vadd.f32 %v1992, %v2431
      %v2507 = vadd.f32 %v1993, %v2433
      %v2508 = vadd.f32 %v1994, %v2435
      %v2509 = vadd.f32 %v1995, %v2437
      %v2510 = vadd.f32 %v1996, %v2439
      %v2511 = vadd.f32 %v1997, %v2441
      %v2512 = vadd.f32 %v1998, %v2443
      %v2513 = vadd.f32 %v1999, %v2445
      %v2514 = vadd.f32 %v2000, %v2447
      %v2515 = vadd.f32 %v2001, %v2449
      %v2516 = vadd.f32 %v2002, %v2451
      %v2517 = vadd.f32 %v2003, %v2453
      %v2518 = vmul.f32 %v2486, 0.2
      %v2519 = vmul.f32 %v2487, 0.2
      %v2520 = vmul.f32 %v2488, 0.2
      %v2521 = vmul.f32 %v2489, 0.2
      %v2522 = vmul.f32 %v2490, 0.2
      %v2523 = vmul.f32 %v2491, 0.2
      %v2524 = vmul.f32 %v2492, 0.2
      %v2525 = vmul.f32 %v2493, 0.2
      %v2526 = vmul.f32 %v2494, 0.2
      %v2527 = vmul.f32 %v2495, 0.2
      %v2528 = vmul.f32 %v2496, 0.2
      %v2529 = vmul.f32 %v2497, 0.2
      %v2530 = vmul.f32 %v2498, 0.2
      %v2531 = vmul.f32 %v2499, 0.2
      %v2532 = vmul.f32 %v2500, 0.2
      %v2533 = vmul.f32 %v2501, 0.2
      %v2534 = vmul.f32 %v2502, 0.2
      %v2535 = vmul.f32 %v2503, 0.2
      %v2536 = vmul.f32 %v2504, 0.2
      %v2537 = vmul.f32 %v2505, 0.2
      %v2538 = vmul.f32 %v2506, 0.2
      %v2539 = vmul.f32 %v2507, 0.2
      %v2540 = vmul.f32 %v2508, 0.2
      %v2541 = vmul.f32 %v2509, 0.2
      %v2542 = vmul.f32 %v2510, 0.2
      %v2543 = vmul.f32 %v2511, 0.2
      %v2544 = vmul.f32 %v2512, 0.2
      %v2545 = vmul.f32 %v2513, 0.2
      %v2546 = vmul.f32 %v2514, 0.2
      %v2547 = vmul.f32 %v2515, 0.2
      %v2548 = vmul.f32 %v2516, 0.2
      %v2549 = vmul.f32 %v2517, 0.2
      %v2550 = vadd.f32 %v2518, 0.5
      %v2551 = vadd.f32 %v2519, 0.5
      %v2552 = vadd.f32 %v2520, 0.5
      %v2553 = vadd.f32 %v2521, 0.5
      %v2554 = vadd.f32 %v2522, 0.5
      %v2555 = vadd.f32 %v2523, 0.5
      %v2556 = vadd.f32 %v2524, 0.5
      %v2557 = vadd.f32 %v2525, 0.5
      %v2558 = vadd.f32 %v2526, 0.5
      %v2559 = vadd.f32 %v2527, 0.5
      %v2560 = vadd.f32 %v2528, 0.5
      %v2561 = vadd.f32 %v2529, 0.5
      %v2562 = vadd.f32 %v2530, 0.5
      %v2563 = vadd.f32 %v2531, 0.5
      %v2564 = vadd.f32 %v2532, 0.5
      %v2565 = vadd.f32 %v2533, 0.5
      %v2566 = vadd.f32 %v2534, 0.5
      %v2567 = vadd.f32 %v2535, 0.5
      %v2568 = vadd.f32 %v2536, 0.5
      %v2569 = vadd.f32 %v2537, 0.5
      %v2570 = vadd.f32 %v2538, 0.5
      %v2571 = vadd.f32 %v2539, 0.5
      %v2572 = vadd.f32 %v2540, 0.5
      %v2573 = vadd.f32 %v2541, 0.5
      %v2574 = vadd.f32 %v2542, 0.5
      %v2575 = vadd.f32 %v2543, 0.5
      %v2576 = vadd.f32 %v2544, 0.5
      %v2577 = vadd.f32 %v2545, 0.5
      %v2578 = vadd.f32 %v2546, 0.5
      %v2579 = vadd.f32 %v2547, 0.5
      %v2580 = vadd.f32 %v2548, 0.5
      %v2581 = vadd.f32 %v2549, 0.5
      %v2582 = vmin.f32 %v2550, 1.0
      %v2583 = vmin.f32 %v2551, 1.0
      %v2584 = vmin.f32 %v2552, 1.0
      %v2585 = vmin.f32 %v2553, 1.0
      %v2586 = vmin.f32 %v2554, 1.0
      %v2587 = vmin.f32 %v2555, 1.0
      %v2588 = vmin.f32 %v2556, 1.0
      %v2589 = vmin.f32 %v2557, 1.0
      %v2590 = vmin.f32 %v2558, 1.0
      %v2591 = vmin.f32 %v2559, 1.0
      %v2592 = vmin.f32 %v2560, 1.0
      %v2593 = vmin.f32 %v2561, 1.0
      %v2594 = vmin.f32 %v2562, 1.0
      %v2595 = vmin.f32 %v2563, 1.0
      %v2596 = vmin.f32 %v2564, 1.0
      %v2597 = vmin.f32 %v2565, 1.0
      %v2598 = vmin.f32 %v2566, 1.0
      %v2599 = vmin.f32 %v2567, 1.0
      %v2600 = vmin.f32 %v2568, 1.0
      %v2601 = vmin.f32 %v2569, 1.0
      %v2602 = vmin.f32 %v2570, 1.0
      %v2603 = vmin.f32 %v2571, 1.0
      %v2604 = vmin.f32 %v2572, 1.0
      %v2605 = vmin.f32 %v2573, 1.0
      %v2606 = vmin.f32 %v2574, 1.0
      %v2607 = vmin.f32 %v2575, 1.0
      %v2608 = vmin.f32 %v2576, 1.0
      %v2609 = vmin.f32 %v2577, 1.0
      %v2610 = vmin.f32 %v2578, 1.0
      %v2611 = vmin.f32 %v2579, 1.0
      %v2612 = vmin.f32 %v2580, 1.0
      %v2613 = vmin.f32 %v2581, 1.0
      %v2614 = vmax.f32 %v2582, 0.0
      %v2615 = vmax.f32 %v2583, 0.0
      %v2616 = vmax.f32 %v2584, 0.0
      %v2617 = vmax.f32 %v2585, 0.0
      %v2618 = vmax.f32 %v2586, 0.0
      %v2619 = vmax.f32 %v2587, 0.0
      %v2620 = vmax.f32 %v2588, 0.0
      %v2621 = vmax.f32 %v2589, 0.0
      %v2622 = vmax.f32 %v2590, 0.0
      %v2623 = vmax.f32 %v2591, 0.0
      %v2624 = vmax.f32 %v2592, 0.0
      %v2625 = vmax.f32 %v2593, 0.0
      %v2626 = vmax.f32 %v2594, 0.0
      %v2627 = vmax.f32 %v2595, 0.0
      %v2628 = vmax.f32 %v2596, 0.0
      %v2629 = vmax.f32 %v2597, 0.0
      %v2630 = vmax.f32 %v2598, 0.0
      %v2631 = vmax.f32 %v2599, 0.0
      %v2632 = vmax.f32 %v2600, 0.0
      %v2633 = vmax.f32 %v2601, 0.0
      %v2634 = vmax.f32 %v2602, 0.0
      %v2635 = vmax.f32 %v2603, 0.0
      %v2636 = vmax.f32 %v2604, 0.0
      %v2637 = vmax.f32 %v2605, 0.0
      %v2638 = vmax.f32 %v2606, 0.0
      %v2639 = vmax.f32 %v2607, 0.0
      %v2640 = vmax.f32 %v2608, 0.0
      %v2641 = vmax.f32 %v2609, 0.0
      %v2642 = vmax.f32 %v2610, 0.0
      %v2643 = vmax.f32 %v2611, 0.0
      %v2644 = vmax.f32 %v2612, 0.0
      %v2645 = vmax.f32 %v2613, 0.0
      %v2646 = vtanh.pop %v1972
      %v2647 = vtanh.pop %v1973
      %v2648 = vtanh.pop %v1974
      %v2649 = vtanh.pop %v1975
      %v2650 = vtanh.pop %v1976
      %v2651 = vtanh.pop %v1977
      %v2652 = vtanh.pop %v1978
      %v2653 = vtanh.pop %v1979
      %v2654 = vtanh.pop %v1980
      %v2655 = vtanh.pop %v1981
      %v2656 = vtanh.pop %v1982
      %v2657 = vtanh.pop %v1983
      %v2658 = vtanh.pop %v1984
      %v2659 = vtanh.pop %v1985
      %v2660 = vtanh.pop %v1986
      %v2661 = vtanh.pop %v1987
      %v2662 = vtanh.pop %v1988
      %v2663 = vtanh.pop %v1989
      %v2664 = vtanh.pop %v1990
      %v2665 = vtanh.pop %v1991
      %v2666 = vtanh.pop %v1992
      %v2667 = vtanh.pop %v1993
      %v2668 = vtanh.pop %v1994
      %v2669 = vtanh.pop %v1995
      %v2670 = vtanh.pop %v1996
      %v2671 = vtanh.pop %v1997
      %v2672 = vtanh.pop %v1998
      %v2673 = vtanh.pop %v1999
      %v2674 = vtanh.pop %v2000
      %v2675 = vtanh.pop %v2001
      %v2676 = vtanh.pop %v2002
      %v2677 = vtanh.pop %v2003
      %2710 = vrot.lane.b32.xlu0 %v2004, 32
      %v2711 = vpop.permute.xlu0 %2710
      %2712 = vrot.lane.b32.xlu0 %v2005, 32
      %v2713 = vpop.permute.xlu0 %2712
      %2714 = vrot.lane.b32.xlu0 %v2006, 32
      %v2715 = vpop.permute.xlu0 %2714
      %2716 = vrot.lane.b32.xlu0 %v2007, 32
      %v2717 = vpop.permute.xlu0 %2716
      %2718 = vrot.lane.b32.xlu0 %v2008, 32
      %v2719 = vpop.permute.xlu0 %2718
      %2720 = vrot.lane.b32.xlu0 %v2009, 32
      %v2721 = vpop.permute.xlu0 %2720
      %2722 = vrot.lane.b32.xlu0 %v2010, 32
      %v2723 = vpop.permute.xlu0 %2722
      %2724 = vrot.lane.b32.xlu0 %v2011, 32
      %v2725 = vpop.permute.xlu0 %2724
      %2726 = vrot.lane.b32.xlu0 %v2012, 32
      %v2727 = vpop.permute.xlu0 %2726
      %2728 = vrot.lane.b32.xlu0 %v2013, 32
      %v2729 = vpop.permute.xlu0 %2728
      %2730 = vrot.lane.b32.xlu0 %v2014, 32
      %v2731 = vpop.permute.xlu0 %2730
      %2732 = vrot.lane.b32.xlu0 %v2015, 32
      %v2733 = vpop.permute.xlu0 %2732
      %2734 = vrot.lane.b32.xlu0 %v2016, 32
      %v2735 = vpop.permute.xlu0 %2734
      %2736 = vrot.lane.b32.xlu0 %v2017, 32
      %v2737 = vpop.permute.xlu0 %2736
      %2738 = vrot.lane.b32.xlu0 %v2018, 32
      %v2739 = vpop.permute.xlu0 %2738
      %2740 = vrot.lane.b32.xlu0 %v2019, 32
      %v2741 = vpop.permute.xlu0 %2740
      %2742 = vrot.lane.b32.xlu0 %v2020, 32
      %v2743 = vpop.permute.xlu0 %2742
      %2744 = vrot.lane.b32.xlu0 %v2021, 32
      %v2745 = vpop.permute.xlu0 %2744
      %2746 = vrot.lane.b32.xlu0 %v2022, 32
      %v2747 = vpop.permute.xlu0 %2746
      %2748 = vrot.lane.b32.xlu0 %v2023, 32
      %v2749 = vpop.permute.xlu0 %2748
      %2750 = vrot.lane.b32.xlu0 %v2024, 32
      %v2751 = vpop.permute.xlu0 %2750
      %2752 = vrot.lane.b32.xlu0 %v2025, 32
      %v2753 = vpop.permute.xlu0 %2752
      %2754 = vrot.lane.b32.xlu0 %v2026, 32
      %v2755 = vpop.permute.xlu0 %2754
      %2756 = vrot.lane.b32.xlu0 %v2027, 32
      %v2757 = vpop.permute.xlu0 %2756
      %2758 = vrot.lane.b32.xlu0 %v2028, 32
      %v2759 = vpop.permute.xlu0 %2758
      %2760 = vrot.lane.b32.xlu0 %v2029, 32
      %v2761 = vpop.permute.xlu0 %2760
      %2762 = vrot.lane.b32.xlu0 %v2030, 32
      %v2763 = vpop.permute.xlu0 %2762
      %2764 = vrot.lane.b32.xlu0 %v2031, 32
      %v2765 = vpop.permute.xlu0 %2764
      %2766 = vrot.lane.b32.xlu0 %v2032, 32
      %v2767 = vpop.permute.xlu0 %2766
      %2768 = vrot.lane.b32.xlu0 %v2033, 32
      %v2769 = vpop.permute.xlu0 %2768
      %2770 = vrot.lane.b32.xlu0 %v2034, 32
      %v2771 = vpop.permute.xlu0 %2770
      %2772 = vrot.lane.b32.xlu0 %v2035, 32
      %v2773 = vpop.permute.xlu0 %2772
      %v2806 = vmul.f32 %v2614, %v2711
      %v2807 = vmul.f32 %v2615, %v2713
      %v2808 = vmul.f32 %v2616, %v2715
      %v2809 = vmul.f32 %v2617, %v2717
      %v2810 = vmul.f32 %v2618, %v2719
      %v2811 = vmul.f32 %v2619, %v2721
      %v2812 = vmul.f32 %v2620, %v2723
      %v2813 = vmul.f32 %v2621, %v2725
      %v2814 = vmul.f32 %v2622, %v2727
      %v2815 = vmul.f32 %v2623, %v2729
      %v2816 = vmul.f32 %v2624, %v2731
      %v2817 = vmul.f32 %v2625, %v2733
      %v2818 = vmul.f32 %v2626, %v2735
      %v2819 = vmul.f32 %v2627, %v2737
      %v2820 = vmul.f32 %v2628, %v2739
      %v2821 = vmul.f32 %v2629, %v2741
      %v2822 = vmul.f32 %v2630, %v2743
      %v2823 = vmul.f32 %v2631, %v2745
      %v2824 = vmul.f32 %v2632, %v2747
      %v2825 = vmul.f32 %v2633, %v2749
      %v2826 = vmul.f32 %v2634, %v2751
      %v2827 = vmul.f32 %v2635, %v2753
      %v2828 = vmul.f32 %v2636, %v2755
      %v2829 = vmul.f32 %v2637, %v2757
      %v2830 = vmul.f32 %v2638, %v2759
      %v2831 = vmul.f32 %v2639, %v2761
      %v2832 = vmul.f32 %v2640, %v2763
      %v2833 = vmul.f32 %v2641, %v2765
      %v2834 = vmul.f32 %v2642, %v2767
      %v2835 = vmul.f32 %v2643, %v2769
      %v2836 = vmul.f32 %v2644, %v2771
      %v2837 = vmul.f32 %v2645, %v2773
      %2870 = vrot.lane.b32.xlu0 %v2646, 64
      %v2871 = vpop.permute.xlu0 %2870
      %2872 = vrot.lane.b32.xlu0 %v2647, 64
      %v2873 = vpop.permute.xlu0 %2872
      %2874 = vrot.lane.b32.xlu0 %v2648, 64
      %v2875 = vpop.permute.xlu0 %2874
      %2876 = vrot.lane.b32.xlu0 %v2649, 64
      %v2877 = vpop.permute.xlu0 %2876
      %2878 = vrot.lane.b32.xlu0 %v2650, 64
      %v2879 = vpop.permute.xlu0 %2878
      %2880 = vrot.lane.b32.xlu0 %v2651, 64
      %v2881 = vpop.permute.xlu0 %2880
      %2882 = vrot.lane.b32.xlu0 %v2652, 64
      %v2883 = vpop.permute.xlu0 %2882
      %2884 = vrot.lane.b32.xlu0 %v2653, 64
      %v2885 = vpop.permute.xlu0 %2884
      %2886 = vrot.lane.b32.xlu0 %v2654, 64
      %v2887 = vpop.permute.xlu0 %2886
      %2888 = vrot.lane.b32.xlu0 %v2655, 64
      %v2889 = vpop.permute.xlu0 %2888
      %2890 = vrot.lane.b32.xlu0 %v2656, 64
      %v2891 = vpop.permute.xlu0 %2890
      %2892 = vrot.lane.b32.xlu0 %v2657, 64
      %v2893 = vpop.permute.xlu0 %2892
      %2894 = vrot.lane.b32.xlu0 %v2658, 64
      %v2895 = vpop.permute.xlu0 %2894
      %2896 = vrot.lane.b32.xlu0 %v2659, 64
      %v2897 = vpop.permute.xlu0 %2896
      %2898 = vrot.lane.b32.xlu0 %v2660, 64
      %v2899 = vpop.permute.xlu0 %2898
      %2900 = vrot.lane.b32.xlu0 %v2661, 64
      %v2901 = vpop.permute.xlu0 %2900
      %2902 = vrot.lane.b32.xlu0 %v2662, 64
      %v2903 = vpop.permute.xlu0 %2902
      %2904 = vrot.lane.b32.xlu0 %v2663, 64
      %v2905 = vpop.permute.xlu0 %2904
      %2906 = vrot.lane.b32.xlu0 %v2664, 64
      %v2907 = vpop.permute.xlu0 %2906
      %2908 = vrot.lane.b32.xlu0 %v2665, 64
      %v2909 = vpop.permute.xlu0 %2908
      %2910 = vrot.lane.b32.xlu0 %v2666, 64
      %v2911 = vpop.permute.xlu0 %2910
      %2912 = vrot.lane.b32.xlu0 %v2667, 64
      %v2913 = vpop.permute.xlu0 %2912
      %2914 = vrot.lane.b32.xlu0 %v2668, 64
      %v2915 = vpop.permute.xlu0 %2914
      %2916 = vrot.lane.b32.xlu0 %v2669, 64
      %v2917 = vpop.permute.xlu0 %2916
      %2918 = vrot.lane.b32.xlu0 %v2670, 64
      %v2919 = vpop.permute.xlu0 %2918
      %2920 = vrot.lane.b32.xlu0 %v2671, 64
      %v2921 = vpop.permute.xlu0 %2920
      %2922 = vrot.lane.b32.xlu0 %v2672, 64
      %v2923 = vpop.permute.xlu0 %2922
      %2924 = vrot.lane.b32.xlu0 %v2673, 64
      %v2925 = vpop.permute.xlu0 %2924
      %2926 = vrot.lane.b32.xlu0 %v2674, 64
      %v2927 = vpop.permute.xlu0 %2926
      %2928 = vrot.lane.b32.xlu0 %v2675, 64
      %v2929 = vpop.permute.xlu0 %2928
      %2930 = vrot.lane.b32.xlu0 %v2676, 64
      %v2931 = vpop.permute.xlu0 %2930
      %2932 = vrot.lane.b32.xlu0 %v2677, 64
      %v2933 = vpop.permute.xlu0 %2932
      %v2966 = vmul.f32 %v2294, %v2871
      %v2967 = vmul.f32 %v2295, %v2873
      %v2968 = vmul.f32 %v2296, %v2875
      %v2969 = vmul.f32 %v2297, %v2877
      %v2970 = vmul.f32 %v2298, %v2879
      %v2971 = vmul.f32 %v2299, %v2881
      %v2972 = vmul.f32 %v2300, %v2883
      %v2973 = vmul.f32 %v2301, %v2885
      %v2974 = vmul.f32 %v2302, %v2887
      %v2975 = vmul.f32 %v2303, %v2889
      %v2976 = vmul.f32 %v2304, %v2891
      %v2977 = vmul.f32 %v2305, %v2893
      %v2978 = vmul.f32 %v2306, %v2895
      %v2979 = vmul.f32 %v2307, %v2897
      %v2980 = vmul.f32 %v2308, %v2899
      %v2981 = vmul.f32 %v2309, %v2901
      %v2982 = vmul.f32 %v2310, %v2903
      %v2983 = vmul.f32 %v2311, %v2905
      %v2984 = vmul.f32 %v2312, %v2907
      %v2985 = vmul.f32 %v2313, %v2909
      %v2986 = vmul.f32 %v2314, %v2911
      %v2987 = vmul.f32 %v2315, %v2913
      %v2988 = vmul.f32 %v2316, %v2915
      %v2989 = vmul.f32 %v2317, %v2917
      %v2990 = vmul.f32 %v2318, %v2919
      %v2991 = vmul.f32 %v2319, %v2921
      %v2992 = vmul.f32 %v2320, %v2923
      %v2993 = vmul.f32 %v2321, %v2925
      %v2994 = vmul.f32 %v2322, %v2927
      %v2995 = vmul.f32 %v2323, %v2929
      %v2996 = vmul.f32 %v2324, %v2931
      %v2997 = vmul.f32 %v2325, %v2933
      %3030 = vrot.lane.b32.xlu0 %v2966, 32
      %v3031 = vpop.permute.xlu0 %3030
      %3032 = vrot.lane.b32.xlu0 %v2967, 32
      %v3033 = vpop.permute.xlu0 %3032
      %3034 = vrot.lane.b32.xlu0 %v2968, 32
      %v3035 = vpop.permute.xlu0 %3034
      %3036 = vrot.lane.b32.xlu0 %v2969, 32
      %v3037 = vpop.permute.xlu0 %3036
      %3038 = vrot.lane.b32.xlu0 %v2970, 32
      %v3039 = vpop.permute.xlu0 %3038
      %3040 = vrot.lane.b32.xlu0 %v2971, 32
      %v3041 = vpop.permute.xlu0 %3040
      %3042 = vrot.lane.b32.xlu0 %v2972, 32
      %v3043 = vpop.permute.xlu0 %3042
      %3044 = vrot.lane.b32.xlu0 %v2973, 32
      %v3045 = vpop.permute.xlu0 %3044
      %3046 = vrot.lane.b32.xlu0 %v2974, 32
      %v3047 = vpop.permute.xlu0 %3046
      %3048 = vrot.lane.b32.xlu0 %v2975, 32
      %v3049 = vpop.permute.xlu0 %3048
      %3050 = vrot.lane.b32.xlu0 %v2976, 32
      %v3051 = vpop.permute.xlu0 %3050
      %3052 = vrot.lane.b32.xlu0 %v2977, 32
      %v3053 = vpop.permute.xlu0 %3052
      %3054 = vrot.lane.b32.xlu0 %v2978, 32
      %v3055 = vpop.permute.xlu0 %3054
      %3056 = vrot.lane.b32.xlu0 %v2979, 32
      %v3057 = vpop.permute.xlu0 %3056
      %3058 = vrot.lane.b32.xlu0 %v2980, 32
      %v3059 = vpop.permute.xlu0 %3058
      %3060 = vrot.lane.b32.xlu0 %v2981, 32
      %v3061 = vpop.permute.xlu0 %3060
      %3062 = vrot.lane.b32.xlu0 %v2982, 32
      %v3063 = vpop.permute.xlu0 %3062
      %3064 = vrot.lane.b32.xlu0 %v2983, 32
      %v3065 = vpop.permute.xlu0 %3064
      %3066 = vrot.lane.b32.xlu0 %v2984, 32
      %v3067 = vpop.permute.xlu0 %3066
      %3068 = vrot.lane.b32.xlu0 %v2985, 32
      %v3069 = vpop.permute.xlu0 %3068
      %3070 = vrot.lane.b32.xlu0 %v2986, 32
      %v3071 = vpop.permute.xlu0 %3070
      %3072 = vrot.lane.b32.xlu0 %v2987, 32
      %v3073 = vpop.permute.xlu0 %3072
      %3074 = vrot.lane.b32.xlu0 %v2988, 32
      %v3075 = vpop.permute.xlu0 %3074
      %3076 = vrot.lane.b32.xlu0 %v2989, 32
      %v3077 = vpop.permute.xlu0 %3076
      %3078 = vrot.lane.b32.xlu0 %v2990, 32
      %v3079 = vpop.permute.xlu0 %3078
      %3080 = vrot.lane.b32.xlu0 %v2991, 32
      %v3081 = vpop.permute.xlu0 %3080
      %3082 = vrot.lane.b32.xlu0 %v2992, 32
      %v3083 = vpop.permute.xlu0 %3082
      %3084 = vrot.lane.b32.xlu0 %v2993, 32
      %v3085 = vpop.permute.xlu0 %3084
      %3086 = vrot.lane.b32.xlu0 %v2994, 32
      %v3087 = vpop.permute.xlu0 %3086
      %3088 = vrot.lane.b32.xlu0 %v2995, 32
      %v3089 = vpop.permute.xlu0 %3088
      %3090 = vrot.lane.b32.xlu0 %v2996, 32
      %v3091 = vpop.permute.xlu0 %3090
      %3092 = vrot.lane.b32.xlu0 %v2997, 32
      %v3093 = vpop.permute.xlu0 %3092
      %v3126 = vadd.f32 %v2806, %v3031
      %v3127 = vadd.f32 %v2807, %v3033
      %v3128 = vadd.f32 %v2808, %v3035
      %v3129 = vadd.f32 %v2809, %v3037
      %v3130 = vadd.f32 %v2810, %v3039
      %v3131 = vadd.f32 %v2811, %v3041
      %v3132 = vadd.f32 %v2812, %v3043
      %v3133 = vadd.f32 %v2813, %v3045
      %v3134 = vadd.f32 %v2814, %v3047
      %v3135 = vadd.f32 %v2815, %v3049
      %v3136 = vadd.f32 %v2816, %v3051
      %v3137 = vadd.f32 %v2817, %v3053
      %v3138 = vadd.f32 %v2818, %v3055
      %v3139 = vadd.f32 %v2819, %v3057
      %v3140 = vadd.f32 %v2820, %v3059
      %v3141 = vadd.f32 %v2821, %v3061
      %v3142 = vadd.f32 %v2822, %v3063
      %v3143 = vadd.f32 %v2823, %v3065
      %v3144 = vadd.f32 %v2824, %v3067
      %v3145 = vadd.f32 %v2825, %v3069
      %v3146 = vadd.f32 %v2826, %v3071
      %v3147 = vadd.f32 %v2827, %v3073
      %v3148 = vadd.f32 %v2828, %v3075
      %v3149 = vadd.f32 %v2829, %v3077
      %v3150 = vadd.f32 %v2830, %v3079
      %v3151 = vadd.f32 %v2831, %v3081
      %v3152 = vadd.f32 %v2832, %v3083
      %v3153 = vadd.f32 %v2833, %v3085
      %v3154 = vadd.f32 %v2834, %v3087
      %v3155 = vadd.f32 %v2835, %v3089
      %v3156 = vadd.f32 %v2836, %v3091
      %v3157 = vadd.f32 %v2837, %v3093
      %3190 = vrot.lane.b32.xlu0 %v3126, 96
      %v3191 = vpop.permute.xlu0 %3190
      %3192 = vrot.lane.b32.xlu0 %v3127, 96
      %v3193 = vpop.permute.xlu0 %3192
      %3194 = vrot.lane.b32.xlu0 %v3128, 96
      %v3195 = vpop.permute.xlu0 %3194
      %3196 = vrot.lane.b32.xlu0 %v3129, 96
      %v3197 = vpop.permute.xlu0 %3196
      %3198 = vrot.lane.b32.xlu0 %v3130, 96
      %v3199 = vpop.permute.xlu0 %3198
      %3200 = vrot.lane.b32.xlu0 %v3131, 96
      %v3201 = vpop.permute.xlu0 %3200
      %3202 = vrot.lane.b32.xlu0 %v3132, 96
      %v3203 = vpop.permute.xlu0 %3202
      %3204 = vrot.lane.b32.xlu0 %v3133, 96
      %v3205 = vpop.permute.xlu0 %3204
      %3206 = vrot.lane.b32.xlu0 %v3134, 96
      %v3207 = vpop.permute.xlu0 %3206
      %3208 = vrot.lane.b32.xlu0 %v3135, 96
      %v3209 = vpop.permute.xlu0 %3208
      %3210 = vrot.lane.b32.xlu0 %v3136, 96
      %v3211 = vpop.permute.xlu0 %3210
      %3212 = vrot.lane.b32.xlu0 %v3137, 96
      %v3213 = vpop.permute.xlu0 %3212
      %3214 = vrot.lane.b32.xlu0 %v3138, 96
      %v3215 = vpop.permute.xlu0 %3214
      %3216 = vrot.lane.b32.xlu0 %v3139, 96
      %v3217 = vpop.permute.xlu0 %3216
      %3218 = vrot.lane.b32.xlu0 %v3140, 96
      %v3219 = vpop.permute.xlu0 %3218
      %3220 = vrot.lane.b32.xlu0 %v3141, 96
      %v3221 = vpop.permute.xlu0 %3220
      %3222 = vrot.lane.b32.xlu0 %v3142, 96
      %v3223 = vpop.permute.xlu0 %3222
      %3224 = vrot.lane.b32.xlu0 %v3143, 96
      %v3225 = vpop.permute.xlu0 %3224
      %3226 = vrot.lane.b32.xlu0 %v3144, 96
      %v3227 = vpop.permute.xlu0 %3226
      %3228 = vrot.lane.b32.xlu0 %v3145, 96
      %v3229 = vpop.permute.xlu0 %3228
      %3230 = vrot.lane.b32.xlu0 %v3146, 96
      %v3231 = vpop.permute.xlu0 %3230
      %3232 = vrot.lane.b32.xlu0 %v3147, 96
      %v3233 = vpop.permute.xlu0 %3232
      %3234 = vrot.lane.b32.xlu0 %v3148, 96
      %v3235 = vpop.permute.xlu0 %3234
      %3236 = vrot.lane.b32.xlu0 %v3149, 96
      %v3237 = vpop.permute.xlu0 %3236
      %3238 = vrot.lane.b32.xlu0 %v3150, 96
      %v3239 = vpop.permute.xlu0 %3238
      %3240 = vrot.lane.b32.xlu0 %v3151, 96
      %v3241 = vpop.permute.xlu0 %3240
      %3242 = vrot.lane.b32.xlu0 %v3152, 96
      %v3243 = vpop.permute.xlu0 %3242
      %3244 = vrot.lane.b32.xlu0 %v3153, 96
      %v3245 = vpop.permute.xlu0 %3244
      %3246 = vrot.lane.b32.xlu0 %v3154, 96
      %v3247 = vpop.permute.xlu0 %3246
      %3248 = vrot.lane.b32.xlu0 %v3155, 96
      %v3249 = vpop.permute.xlu0 %3248
      %3250 = vrot.lane.b32.xlu0 %v3156, 96
      %v3251 = vpop.permute.xlu0 %3250
      %3252 = vrot.lane.b32.xlu0 %v3157, 96
      %v3253 = vpop.permute.xlu0 %3252
      %v3286 = vmul.f32 %v2102, %v3191
      %v3287 = vmul.f32 %v2103, %v3193
      %v3288 = vmul.f32 %v2104, %v3195
      %v3289 = vmul.f32 %v2105, %v3197
      %v3290 = vmul.f32 %v2106, %v3199
      %v3291 = vmul.f32 %v2107, %v3201
      %v3292 = vmul.f32 %v2108, %v3203
      %v3293 = vmul.f32 %v2109, %v3205
      %v3294 = vmul.f32 %v2110, %v3207
      %v3295 = vmul.f32 %v2111, %v3209
      %v3296 = vmul.f32 %v2112, %v3211
      %v3297 = vmul.f32 %v2113, %v3213
      %v3298 = vmul.f32 %v2114, %v3215
      %v3299 = vmul.f32 %v2115, %v3217
      %v3300 = vmul.f32 %v2116, %v3219
      %v3301 = vmul.f32 %v2117, %v3221
      %v3302 = vmul.f32 %v2118, %v3223
      %v3303 = vmul.f32 %v2119, %v3225
      %v3304 = vmul.f32 %v2120, %v3227
      %v3305 = vmul.f32 %v2121, %v3229
      %v3306 = vmul.f32 %v2122, %v3231
      %v3307 = vmul.f32 %v2123, %v3233
      %v3308 = vmul.f32 %v2124, %v3235
      %v3309 = vmul.f32 %v2125, %v3237
      %v3310 = vmul.f32 %v2126, %v3239
      %v3311 = vmul.f32 %v2127, %v3241
      %v3312 = vmul.f32 %v2128, %v3243
      %v3313 = vmul.f32 %v2129, %v3245
      %v3314 = vmul.f32 %v2130, %v3247
      %v3315 = vmul.f32 %v2131, %v3249
      %v3316 = vmul.f32 %v2132, %v3251
      %v3317 = vmul.f32 %v2133, %v3253
      %3350 = vrot.lane.b32.xlu0 %v3286, 96
      %v3351 = vpop.permute.xlu0 %3350
      %3352 = vrot.lane.b32.xlu0 %v3287, 96
      %v3353 = vpop.permute.xlu0 %3352
      %3354 = vrot.lane.b32.xlu0 %v3288, 96
      %v3355 = vpop.permute.xlu0 %3354
      %3356 = vrot.lane.b32.xlu0 %v3289, 96
      %v3357 = vpop.permute.xlu0 %3356
      %3358 = vrot.lane.b32.xlu0 %v3290, 96
      %v3359 = vpop.permute.xlu0 %3358
      %3360 = vrot.lane.b32.xlu0 %v3291, 96
      %v3361 = vpop.permute.xlu0 %3360
      %3362 = vrot.lane.b32.xlu0 %v3292, 96
      %v3363 = vpop.permute.xlu0 %3362
      %3364 = vrot.lane.b32.xlu0 %v3293, 96
      %v3365 = vpop.permute.xlu0 %3364
      %3366 = vrot.lane.b32.xlu0 %v3294, 96
      %v3367 = vpop.permute.xlu0 %3366
      %3368 = vrot.lane.b32.xlu0 %v3295, 96
      %v3369 = vpop.permute.xlu0 %3368
      %3370 = vrot.lane.b32.xlu0 %v3296, 96
      %v3371 = vpop.permute.xlu0 %3370
      %3372 = vrot.lane.b32.xlu0 %v3297, 96
      %v3373 = vpop.permute.xlu0 %3372
      %3374 = vrot.lane.b32.xlu0 %v3298, 96
      %v3375 = vpop.permute.xlu0 %3374
      %3376 = vrot.lane.b32.xlu0 %v3299, 96
      %v3377 = vpop.permute.xlu0 %3376
      %3378 = vrot.lane.b32.xlu0 %v3300, 96
      %v3379 = vpop.permute.xlu0 %3378
      %3380 = vrot.lane.b32.xlu0 %v3301, 96
      %v3381 = vpop.permute.xlu0 %3380
      %3382 = vrot.lane.b32.xlu0 %v3302, 96
      %v3383 = vpop.permute.xlu0 %3382
      %3384 = vrot.lane.b32.xlu0 %v3303, 96
      %v3385 = vpop.permute.xlu0 %3384
      %3386 = vrot.lane.b32.xlu0 %v3304, 96
      %v3387 = vpop.permute.xlu0 %3386
      %3388 = vrot.lane.b32.xlu0 %v3305, 96
      %v3389 = vpop.permute.xlu0 %3388
      %3390 = vrot.lane.b32.xlu0 %v3306, 96
      %v3391 = vpop.permute.xlu0 %3390
      %3392 = vrot.lane.b32.xlu0 %v3307, 96
      %v3393 = vpop.permute.xlu0 %3392
      %3394 = vrot.lane.b32.xlu0 %v3308, 96
      %v3395 = vpop.permute.xlu0 %3394
      %3396 = vrot.lane.b32.xlu0 %v3309, 96
      %v3397 = vpop.permute.xlu0 %3396
      %3398 = vrot.lane.b32.xlu0 %v3310, 96
      %v3399 = vpop.permute.xlu0 %3398
      %3400 = vrot.lane.b32.xlu0 %v3311, 96
      %v3401 = vpop.permute.xlu0 %3400
      %3402 = vrot.lane.b32.xlu0 %v3312, 96
      %v3403 = vpop.permute.xlu0 %3402
      %3404 = vrot.lane.b32.xlu0 %v3313, 96
      %v3405 = vpop.permute.xlu0 %3404
      %3406 = vrot.lane.b32.xlu0 %v3314, 96
      %v3407 = vpop.permute.xlu0 %3406
      %3408 = vrot.lane.b32.xlu0 %v3315, 96
      %v3409 = vpop.permute.xlu0 %3408
      %3410 = vrot.lane.b32.xlu0 %v3316, 96
      %v3411 = vpop.permute.xlu0 %3410
      %3412 = vrot.lane.b32.xlu0 %v3317, 96
      %v3413 = vpop.permute.xlu0 %3412
      %v3446 = vadd.f32 %v1972, %v3351
      %v3447 = vadd.f32 %v1973, %v3353
      %v3448 = vadd.f32 %v1974, %v3355
      %v3449 = vadd.f32 %v1975, %v3357
      %v3450 = vadd.f32 %v1976, %v3359
      %v3451 = vadd.f32 %v1977, %v3361
      %v3452 = vadd.f32 %v1978, %v3363
      %v3453 = vadd.f32 %v1979, %v3365
      %v3454 = vadd.f32 %v1980, %v3367
      %v3455 = vadd.f32 %v1981, %v3369
      %v3456 = vadd.f32 %v1982, %v3371
      %v3457 = vadd.f32 %v1983, %v3373
      %v3458 = vadd.f32 %v1984, %v3375
      %v3459 = vadd.f32 %v1985, %v3377
      %v3460 = vadd.f32 %v1986, %v3379
      %v3461 = vadd.f32 %v1987, %v3381
      %v3462 = vadd.f32 %v1988, %v3383
      %v3463 = vadd.f32 %v1989, %v3385
      %v3464 = vadd.f32 %v1990, %v3387
      %v3465 = vadd.f32 %v1991, %v3389
      %v3466 = vadd.f32 %v1992, %v3391
      %v3467 = vadd.f32 %v1993, %v3393
      %v3468 = vadd.f32 %v1994, %v3395
      %v3469 = vadd.f32 %v1995, %v3397
      %v3470 = vadd.f32 %v1996, %v3399
      %v3471 = vadd.f32 %v1997, %v3401
      %v3472 = vadd.f32 %v1998, %v3403
      %v3473 = vadd.f32 %v1999, %v3405
      %v3474 = vadd.f32 %v2000, %v3407
      %v3475 = vadd.f32 %v2001, %v3409
      %v3476 = vadd.f32 %v2002, %v3411
      %v3477 = vadd.f32 %v2003, %v3413
      %v3478 = vmul.f32 %v3446, 0.2
      %v3479 = vmul.f32 %v3447, 0.2
      %v3480 = vmul.f32 %v3448, 0.2
      %v3481 = vmul.f32 %v3449, 0.2
      %v3482 = vmul.f32 %v3450, 0.2
      %v3483 = vmul.f32 %v3451, 0.2
      %v3484 = vmul.f32 %v3452, 0.2
      %v3485 = vmul.f32 %v3453, 0.2
      %v3486 = vmul.f32 %v3454, 0.2
      %v3487 = vmul.f32 %v3455, 0.2
      %v3488 = vmul.f32 %v3456, 0.2
      %v3489 = vmul.f32 %v3457, 0.2
      %v3490 = vmul.f32 %v3458, 0.2
      %v3491 = vmul.f32 %v3459, 0.2
      %v3492 = vmul.f32 %v3460, 0.2
      %v3493 = vmul.f32 %v3461, 0.2
      %v3494 = vmul.f32 %v3462, 0.2
      %v3495 = vmul.f32 %v3463, 0.2
      %v3496 = vmul.f32 %v3464, 0.2
      %v3497 = vmul.f32 %v3465, 0.2
      %v3498 = vmul.f32 %v3466, 0.2
      %v3499 = vmul.f32 %v3467, 0.2
      %v3500 = vmul.f32 %v3468, 0.2
      %v3501 = vmul.f32 %v3469, 0.2
      %v3502 = vmul.f32 %v3470, 0.2
      %v3503 = vmul.f32 %v3471, 0.2
      %v3504 = vmul.f32 %v3472, 0.2
      %v3505 = vmul.f32 %v3473, 0.2
      %v3506 = vmul.f32 %v3474, 0.2
      %v3507 = vmul.f32 %v3475, 0.2
      %v3508 = vmul.f32 %v3476, 0.2
      %v3509 = vmul.f32 %v3477, 0.2
      %v3510 = vadd.f32 %v3478, 0.5
      %v3511 = vadd.f32 %v3479, 0.5
      %v3512 = vadd.f32 %v3480, 0.5
      %v3513 = vadd.f32 %v3481, 0.5
      %v3514 = vadd.f32 %v3482, 0.5
      %v3515 = vadd.f32 %v3483, 0.5
      %v3516 = vadd.f32 %v3484, 0.5
      %v3517 = vadd.f32 %v3485, 0.5
      %v3518 = vadd.f32 %v3486, 0.5
      %v3519 = vadd.f32 %v3487, 0.5
      %v3520 = vadd.f32 %v3488, 0.5
      %v3521 = vadd.f32 %v3489, 0.5
      %v3522 = vadd.f32 %v3490, 0.5
      %v3523 = vadd.f32 %v3491, 0.5
      %v3524 = vadd.f32 %v3492, 0.5
      %v3525 = vadd.f32 %v3493, 0.5
      %v3526 = vadd.f32 %v3494, 0.5
      %v3527 = vadd.f32 %v3495, 0.5
      %v3528 = vadd.f32 %v3496, 0.5
      %v3529 = vadd.f32 %v3497, 0.5
      %v3530 = vadd.f32 %v3498, 0.5
      %v3531 = vadd.f32 %v3499, 0.5
      %v3532 = vadd.f32 %v3500, 0.5
      %v3533 = vadd.f32 %v3501, 0.5
      %v3534 = vadd.f32 %v3502, 0.5
      %v3535 = vadd.f32 %v3503, 0.5
      %v3536 = vadd.f32 %v3504, 0.5
      %v3537 = vadd.f32 %v3505, 0.5
      %v3538 = vadd.f32 %v3506, 0.5
      %v3539 = vadd.f32 %v3507, 0.5
      %v3540 = vadd.f32 %v3508, 0.5
      %v3541 = vadd.f32 %v3509, 0.5
      %v3542 = vmin.f32 %v3510, 1.0
      %v3543 = vmin.f32 %v3511, 1.0
      %v3544 = vmin.f32 %v3512, 1.0
      %v3545 = vmin.f32 %v3513, 1.0
      %v3546 = vmin.f32 %v3514, 1.0
      %v3547 = vmin.f32 %v3515, 1.0
      %v3548 = vmin.f32 %v3516, 1.0
      %v3549 = vmin.f32 %v3517, 1.0
      %v3550 = vmin.f32 %v3518, 1.0
      %v3551 = vmin.f32 %v3519, 1.0
      %v3552 = vmin.f32 %v3520, 1.0
      %v3553 = vmin.f32 %v3521, 1.0
      %v3554 = vmin.f32 %v3522, 1.0
      %v3555 = vmin.f32 %v3523, 1.0
      %v3556 = vmin.f32 %v3524, 1.0
      %v3557 = vmin.f32 %v3525, 1.0
      %v3558 = vmin.f32 %v3526, 1.0
      %v3559 = vmin.f32 %v3527, 1.0
      %v3560 = vmin.f32 %v3528, 1.0
      %v3561 = vmin.f32 %v3529, 1.0
      %v3562 = vmin.f32 %v3530, 1.0
      %v3563 = vmin.f32 %v3531, 1.0
      %v3564 = vmin.f32 %v3532, 1.0
      %v3565 = vmin.f32 %v3533, 1.0
      %v3566 = vmin.f32 %v3534, 1.0
      %v3567 = vmin.f32 %v3535, 1.0
      %v3568 = vmin.f32 %v3536, 1.0
      %v3569 = vmin.f32 %v3537, 1.0
      %v3570 = vmin.f32 %v3538, 1.0
      %v3571 = vmin.f32 %v3539, 1.0
      %v3572 = vmin.f32 %v3540, 1.0
      %v3573 = vmin.f32 %v3541, 1.0
      %v3574 = vmax.f32 %v3542, 0.0
      %v3575 = vmax.f32 %v3543, 0.0
      %v3576 = vmax.f32 %v3544, 0.0
      %v3577 = vmax.f32 %v3545, 0.0
      %v3578 = vmax.f32 %v3546, 0.0
      %v3579 = vmax.f32 %v3547, 0.0
      %v3580 = vmax.f32 %v3548, 0.0
      %v3581 = vmax.f32 %v3549, 0.0
      %v3582 = vmax.f32 %v3550, 0.0
      %v3583 = vmax.f32 %v3551, 0.0
      %v3584 = vmax.f32 %v3552, 0.0
      %v3585 = vmax.f32 %v3553, 0.0
      %v3586 = vmax.f32 %v3554, 0.0
      %v3587 = vmax.f32 %v3555, 0.0
      %v3588 = vmax.f32 %v3556, 0.0
      %v3589 = vmax.f32 %v3557, 0.0
      %v3590 = vmax.f32 %v3558, 0.0
      %v3591 = vmax.f32 %v3559, 0.0
      %v3592 = vmax.f32 %v3560, 0.0
      %v3593 = vmax.f32 %v3561, 0.0
      %v3594 = vmax.f32 %v3562, 0.0
      %v3595 = vmax.f32 %v3563, 0.0
      %v3596 = vmax.f32 %v3564, 0.0
      %v3597 = vmax.f32 %v3565, 0.0
      %v3598 = vmax.f32 %v3566, 0.0
      %v3599 = vmax.f32 %v3567, 0.0
      %v3600 = vmax.f32 %v3568, 0.0
      %v3601 = vmax.f32 %v3569, 0.0
      %v3602 = vmax.f32 %v3570, 0.0
      %v3603 = vmax.f32 %v3571, 0.0
      %v3604 = vmax.f32 %v3572, 0.0
      %v3605 = vmax.f32 %v3573, 0.0
      %v3606 = vtanh.pop %v3126
      %v3607 = vtanh.pop %v3127
      %v3608 = vtanh.pop %v3128
      %v3609 = vtanh.pop %v3129
      %v3610 = vtanh.pop %v3130
      %v3611 = vtanh.pop %v3131
      %v3612 = vtanh.pop %v3132
      %v3613 = vtanh.pop %v3133
      %v3614 = vtanh.pop %v3134
      %v3615 = vtanh.pop %v3135
      %v3616 = vtanh.pop %v3136
      %v3617 = vtanh.pop %v3137
      %v3618 = vtanh.pop %v3138
      %v3619 = vtanh.pop %v3139
      %v3620 = vtanh.pop %v3140
      %v3621 = vtanh.pop %v3141
      %v3622 = vtanh.pop %v3142
      %v3623 = vtanh.pop %v3143
      %v3624 = vtanh.pop %v3144
      %v3625 = vtanh.pop %v3145
      %v3626 = vtanh.pop %v3146
      %v3627 = vtanh.pop %v3147
      %v3628 = vtanh.pop %v3148
      %v3629 = vtanh.pop %v3149
      %v3630 = vtanh.pop %v3150
      %v3631 = vtanh.pop %v3151
      %v3632 = vtanh.pop %v3152
      %v3633 = vtanh.pop %v3153
      %v3634 = vtanh.pop %v3154
      %v3635 = vtanh.pop %v3155
      %v3636 = vtanh.pop %v3156
      %v3637 = vtanh.pop %v3157
      %3670 = vrot.lane.b32.xlu0 %v3606, 64
      %v3671 = vpop.permute.xlu0 %3670
      %3672 = vrot.lane.b32.xlu0 %v3607, 64
      %v3673 = vpop.permute.xlu0 %3672
      %3674 = vrot.lane.b32.xlu0 %v3608, 64
      %v3675 = vpop.permute.xlu0 %3674
      %3676 = vrot.lane.b32.xlu0 %v3609, 64
      %v3677 = vpop.permute.xlu0 %3676
      %3678 = vrot.lane.b32.xlu0 %v3610, 64
      %v3679 = vpop.permute.xlu0 %3678
      %3680 = vrot.lane.b32.xlu0 %v3611, 64
      %v3681 = vpop.permute.xlu0 %3680
      %3682 = vrot.lane.b32.xlu0 %v3612, 64
      %v3683 = vpop.permute.xlu0 %3682
      %3684 = vrot.lane.b32.xlu0 %v3613, 64
      %v3685 = vpop.permute.xlu0 %3684
      %3686 = vrot.lane.b32.xlu0 %v3614, 64
      %v3687 = vpop.permute.xlu0 %3686
      %3688 = vrot.lane.b32.xlu0 %v3615, 64
      %v3689 = vpop.permute.xlu0 %3688
      %3690 = vrot.lane.b32.xlu0 %v3616, 64
      %v3691 = vpop.permute.xlu0 %3690
      %3692 = vrot.lane.b32.xlu0 %v3617, 64
      %v3693 = vpop.permute.xlu0 %3692
      %3694 = vrot.lane.b32.xlu0 %v3618, 64
      %v3695 = vpop.permute.xlu0 %3694
      %3696 = vrot.lane.b32.xlu0 %v3619, 64
      %v3697 = vpop.permute.xlu0 %3696
      %3698 = vrot.lane.b32.xlu0 %v3620, 64
      %v3699 = vpop.permute.xlu0 %3698
      %3700 = vrot.lane.b32.xlu0 %v3621, 64
      %v3701 = vpop.permute.xlu0 %3700
      %3702 = vrot.lane.b32.xlu0 %v3622, 64
      %v3703 = vpop.permute.xlu0 %3702
      %3704 = vrot.lane.b32.xlu0 %v3623, 64
      %v3705 = vpop.permute.xlu0 %3704
      %3706 = vrot.lane.b32.xlu0 %v3624, 64
      %v3707 = vpop.permute.xlu0 %3706
      %3708 = vrot.lane.b32.xlu0 %v3625, 64
      %v3709 = vpop.permute.xlu0 %3708
      %3710 = vrot.lane.b32.xlu0 %v3626, 64
      %v3711 = vpop.permute.xlu0 %3710
      %3712 = vrot.lane.b32.xlu0 %v3627, 64
      %v3713 = vpop.permute.xlu0 %3712
      %3714 = vrot.lane.b32.xlu0 %v3628, 64
      %v3715 = vpop.permute.xlu0 %3714
      %3716 = vrot.lane.b32.xlu0 %v3629, 64
      %v3717 = vpop.permute.xlu0 %3716
      %3718 = vrot.lane.b32.xlu0 %v3630, 64
      %v3719 = vpop.permute.xlu0 %3718
      %3720 = vrot.lane.b32.xlu0 %v3631, 64
      %v3721 = vpop.permute.xlu0 %3720
      %3722 = vrot.lane.b32.xlu0 %v3632, 64
      %v3723 = vpop.permute.xlu0 %3722
      %3724 = vrot.lane.b32.xlu0 %v3633, 64
      %v3725 = vpop.permute.xlu0 %3724
      %3726 = vrot.lane.b32.xlu0 %v3634, 64
      %v3727 = vpop.permute.xlu0 %3726
      %3728 = vrot.lane.b32.xlu0 %v3635, 64
      %v3729 = vpop.permute.xlu0 %3728
      %3730 = vrot.lane.b32.xlu0 %v3636, 64
      %v3731 = vpop.permute.xlu0 %3730
      %3732 = vrot.lane.b32.xlu0 %v3637, 64
      %v3733 = vpop.permute.xlu0 %3732
      %v3766 = vmul.f32 %v3574, %v3671
      %v3767 = vmul.f32 %v3575, %v3673
      %v3768 = vmul.f32 %v3576, %v3675
      %v3769 = vmul.f32 %v3577, %v3677
      %v3770 = vmul.f32 %v3578, %v3679
      %v3771 = vmul.f32 %v3579, %v3681
      %v3772 = vmul.f32 %v3580, %v3683
      %v3773 = vmul.f32 %v3581, %v3685
      %v3774 = vmul.f32 %v3582, %v3687
      %v3775 = vmul.f32 %v3583, %v3689
      %v3776 = vmul.f32 %v3584, %v3691
      %v3777 = vmul.f32 %v3585, %v3693
      %v3778 = vmul.f32 %v3586, %v3695
      %v3779 = vmul.f32 %v3587, %v3697
      %v3780 = vmul.f32 %v3588, %v3699
      %v3781 = vmul.f32 %v3589, %v3701
      %v3782 = vmul.f32 %v3590, %v3703
      %v3783 = vmul.f32 %v3591, %v3705
      %v3784 = vmul.f32 %v3592, %v3707
      %v3785 = vmul.f32 %v3593, %v3709
      %v3786 = vmul.f32 %v3594, %v3711
      %v3787 = vmul.f32 %v3595, %v3713
      %v3788 = vmul.f32 %v3596, %v3715
      %v3789 = vmul.f32 %v3597, %v3717
      %v3790 = vmul.f32 %v3598, %v3719
      %v3791 = vmul.f32 %v3599, %v3721
      %v3792 = vmul.f32 %v3600, %v3723
      %v3793 = vmul.f32 %v3601, %v3725
      %v3794 = vmul.f32 %v3602, %v3727
      %v3795 = vmul.f32 %v3603, %v3729
      %v3796 = vmul.f32 %v3604, %v3731
      %v3797 = vmul.f32 %v3605, %v3733
      %3830 = vrot.lane.b32.xlu0 %v3766, 32
      %v3831 = vpop.permute.xlu0 %3830
      %3832 = vrot.lane.b32.xlu0 %v3767, 32
      %v3833 = vpop.permute.xlu0 %3832
      %3834 = vrot.lane.b32.xlu0 %v3768, 32
      %v3835 = vpop.permute.xlu0 %3834
      %3836 = vrot.lane.b32.xlu0 %v3769, 32
      %v3837 = vpop.permute.xlu0 %3836
      %3838 = vrot.lane.b32.xlu0 %v3770, 32
      %v3839 = vpop.permute.xlu0 %3838
      %3840 = vrot.lane.b32.xlu0 %v3771, 32
      %v3841 = vpop.permute.xlu0 %3840
      %3842 = vrot.lane.b32.xlu0 %v3772, 32
      %v3843 = vpop.permute.xlu0 %3842
      %3844 = vrot.lane.b32.xlu0 %v3773, 32
      %v3845 = vpop.permute.xlu0 %3844
      %3846 = vrot.lane.b32.xlu0 %v3774, 32
      %v3847 = vpop.permute.xlu0 %3846
      %3848 = vrot.lane.b32.xlu0 %v3775, 32
      %v3849 = vpop.permute.xlu0 %3848
      %3850 = vrot.lane.b32.xlu0 %v3776, 32
      %v3851 = vpop.permute.xlu0 %3850
      %3852 = vrot.lane.b32.xlu0 %v3777, 32
      %v3853 = vpop.permute.xlu0 %3852
      %3854 = vrot.lane.b32.xlu0 %v3778, 32
      %v3855 = vpop.permute.xlu0 %3854
      %3856 = vrot.lane.b32.xlu0 %v3779, 32
      %v3857 = vpop.permute.xlu0 %3856
      %3858 = vrot.lane.b32.xlu0 %v3780, 32
      %v3859 = vpop.permute.xlu0 %3858
      %3860 = vrot.lane.b32.xlu0 %v3781, 32
      %v3861 = vpop.permute.xlu0 %3860
      %3862 = vrot.lane.b32.xlu0 %v3782, 32
      %v3863 = vpop.permute.xlu0 %3862
      %3864 = vrot.lane.b32.xlu0 %v3783, 32
      %v3865 = vpop.permute.xlu0 %3864
      %3866 = vrot.lane.b32.xlu0 %v3784, 32
      %v3867 = vpop.permute.xlu0 %3866
      %3868 = vrot.lane.b32.xlu0 %v3785, 32
      %v3869 = vpop.permute.xlu0 %3868
      %3870 = vrot.lane.b32.xlu0 %v3786, 32
      %v3871 = vpop.permute.xlu0 %3870
      %3872 = vrot.lane.b32.xlu0 %v3787, 32
      %v3873 = vpop.permute.xlu0 %3872
      %3874 = vrot.lane.b32.xlu0 %v3788, 32
      %v3875 = vpop.permute.xlu0 %3874
      %3876 = vrot.lane.b32.xlu0 %v3789, 32
      %v3877 = vpop.permute.xlu0 %3876
      %3878 = vrot.lane.b32.xlu0 %v3790, 32
      %v3879 = vpop.permute.xlu0 %3878
      %3880 = vrot.lane.b32.xlu0 %v3791, 32
      %v3881 = vpop.permute.xlu0 %3880
      %3882 = vrot.lane.b32.xlu0 %v3792, 32
      %v3883 = vpop.permute.xlu0 %3882
      %3884 = vrot.lane.b32.xlu0 %v3793, 32
      %v3885 = vpop.permute.xlu0 %3884
      %3886 = vrot.lane.b32.xlu0 %v3794, 32
      %v3887 = vpop.permute.xlu0 %3886
      %3888 = vrot.lane.b32.xlu0 %v3795, 32
      %v3889 = vpop.permute.xlu0 %3888
      %3890 = vrot.lane.b32.xlu0 %v3796, 32
      %v3891 = vpop.permute.xlu0 %3890
      %3892 = vrot.lane.b32.xlu0 %v3797, 32
      %v3893 = vpop.permute.xlu0 %3892
      %vm3926 = vcmask 261120
      %3927 = vst.msk [vmem:[%s279] sm:$0xff] %vm3926, %v3831
      %3928 = vst.msk [vmem:[%s279 + $0x8] sm:$0xff] %vm3926, %v3833
      %3929 = vst.msk [vmem:[%s279 + $0x10] sm:$0xff] %vm3926, %v3835
      %3930 = vst.msk [vmem:[%s279 + $0x18] sm:$0xff] %vm3926, %v3837
      %3931 = vst.msk [vmem:[%s279 + $0x20] sm:$0xff] %vm3926, %v3839
      %3932 = vst.msk [vmem:[%s279 + $0x28] sm:$0xff] %vm3926, %v3841
      %3933 = vst.msk [vmem:[%s279 + $0x30] sm:$0xff] %vm3926, %v3843
      %3934 = vst.msk [vmem:[%s279 + $0x38] sm:$0xff] %vm3926, %v3845
      %3935 = vst.msk [vmem:[%s279 + $0x40] sm:$0xff] %vm3926, %v3847
      %3936 = vst.msk [vmem:[%s279 + $0x48] sm:$0xff] %vm3926, %v3849
      %3937 = vst.msk [vmem:[%s279 + $0x50] sm:$0xff] %vm3926, %v3851
      %3938 = vst.msk [vmem:[%s279 + $0x58] sm:$0xff] %vm3926, %v3853
      %3939 = vst.msk [vmem:[%s279 + $0x60] sm:$0xff] %vm3926, %v3855
      %3940 = vst.msk [vmem:[%s279 + $0x68] sm:$0xff] %vm3926, %v3857
      %3941 = vst.msk [vmem:[%s279 + $0x70] sm:$0xff] %vm3926, %v3859
      %3942 = vst.msk [vmem:[%s279 + $0x78] sm:$0xff] %vm3926, %v3861
      %3943 = vst.msk [vmem:[%s279 + $0x80] sm:$0xff] %vm3926, %v3863
      %3944 = vst.msk [vmem:[%s279 + $0x88] sm:$0xff] %vm3926, %v3865
      %3945 = vst.msk [vmem:[%s279 + $0x90] sm:$0xff] %vm3926, %v3867
      %3946 = vst.msk [vmem:[%s279 + $0x98] sm:$0xff] %vm3926, %v3869
      %3947 = vst.msk [vmem:[%s279 + $0xa0] sm:$0xff] %vm3926, %v3871
      %3948 = vst.msk [vmem:[%s279 + $0xa8] sm:$0xff] %vm3926, %v3873
      %3949 = vst.msk [vmem:[%s279 + $0xb0] sm:$0xff] %vm3926, %v3875
      %3950 = vst.msk [vmem:[%s279 + $0xb8] sm:$0xff] %vm3926, %v3877
      %3951 = vst.msk [vmem:[%s279 + $0xc0] sm:$0xff] %vm3926, %v3879
      %3952 = vst.msk [vmem:[%s279 + $0xc8] sm:$0xff] %vm3926, %v3881
      %3953 = vst.msk [vmem:[%s279 + $0xd0] sm:$0xff] %vm3926, %v3883
      %3954 = vst.msk [vmem:[%s279 + $0xd8] sm:$0xff] %vm3926, %v3885
      %3955 = vst.msk [vmem:[%s279 + $0xe0] sm:$0xff] %vm3926, %v3887
      %3956 = vst.msk [vmem:[%s279 + $0xe8] sm:$0xff] %vm3926, %v3889
      %3957 = vst.msk [vmem:[%s279 + $0xf0] sm:$0xff] %vm3926, %v3891
      %3958 = vst.msk [vmem:[%s279 + $0xf8] sm:$0xff] %vm3926, %v3893
      %3959 = vst.msk [vmem:[%s284] sm:$0xff] %vm3926, %v3191
      %3960 = vst.msk [vmem:[%s284 + $0x8] sm:$0xff] %vm3926, %v3193
      %3961 = vst.msk [vmem:[%s284 + $0x10] sm:$0xff] %vm3926, %v3195
      %3962 = vst.msk [vmem:[%s284 + $0x18] sm:$0xff] %vm3926, %v3197
      %3963 = vst.msk [vmem:[%s284 + $0x20] sm:$0xff] %vm3926, %v3199
      %3964 = vst.msk [vmem:[%s284 + $0x28] sm:$0xff] %vm3926, %v3201
      %3965 = vst.msk [vmem:[%s284 + $0x30] sm:$0xff] %vm3926, %v3203
      %3966 = vst.msk [vmem:[%s284 + $0x38] sm:$0xff] %vm3926, %v3205
      %3967 = vst.msk [vmem:[%s284 + $0x40] sm:$0xff] %vm3926, %v3207
      %3968 = vst.msk [vmem:[%s284 + $0x48] sm:$0xff] %vm3926, %v3209
      %3969 = vst.msk [vmem:[%s284 + $0x50] sm:$0xff] %vm3926, %v3211
      %3970 = vst.msk [vmem:[%s284 + $0x58] sm:$0xff] %vm3926, %v3213
      %3971 = vst.msk [vmem:[%s284 + $0x60] sm:$0xff] %vm3926, %v3215
      %3972 = vst.msk [vmem:[%s284 + $0x68] sm:$0xff] %vm3926, %v3217
      %3973 = vst.msk [vmem:[%s284 + $0x70] sm:$0xff] %vm3926, %v3219
      %3974 = vst.msk [vmem:[%s284 + $0x78] sm:$0xff] %vm3926, %v3221
      %3975 = vst.msk [vmem:[%s284 + $0x80] sm:$0xff] %vm3926, %v3223
      %3976 = vst.msk [vmem:[%s284 + $0x88] sm:$0xff] %vm3926, %v3225
      %3977 = vst.msk [vmem:[%s284 + $0x90] sm:$0xff] %vm3926, %v3227
      %3978 = vst.msk [vmem:[%s284 + $0x98] sm:$0xff] %vm3926, %v3229
      %3979 = vst.msk [vmem:[%s284 + $0xa0] sm:$0xff] %vm3926, %v3231
      %3980 = vst.msk [vmem:[%s284 + $0xa8] sm:$0xff] %vm3926, %v3233
      %3981 = vst.msk [vmem:[%s284 + $0xb0] sm:$0xff] %vm3926, %v3235
      %3982 = vst.msk [vmem:[%s284 + $0xb8] sm:$0xff] %vm3926, %v3237
      %3983 = vst.msk [vmem:[%s284 + $0xc0] sm:$0xff] %vm3926, %v3239
      %3984 = vst.msk [vmem:[%s284 + $0xc8] sm:$0xff] %vm3926, %v3241
      %3985 = vst.msk [vmem:[%s284 + $0xd0] sm:$0xff] %vm3926, %v3243
      %3986 = vst.msk [vmem:[%s284 + $0xd8] sm:$0xff] %vm3926, %v3245
      %3987 = vst.msk [vmem:[%s284 + $0xe0] sm:$0xff] %vm3926, %v3247
      %3988 = vst.msk [vmem:[%s284 + $0xe8] sm:$0xff] %vm3926, %v3249
      %3989 = vst.msk [vmem:[%s284 + $0xf0] sm:$0xff] %vm3926, %v3251
      %3990 = vst.msk [vmem:[%s284 + $0xf8] sm:$0xff] %vm3926, %v3253
      %p3991 = scmp.lt.s32.totalorder %s18, 1
      %s3992 = scalar_select %p3991, %s18, 1
      %s3993 = smul.addr %s3992, 32
      %s3994 = smul.addr %s3993, 8
      %s3995 = scalar_lea.vmem %s5, %s3994
      %p3996 = scmp.lt.s32.totalorder %s18, 1
      %s3997 = scalar_select %p3996, %s18, 1
      %s3998 = smul.addr %s3997, 32
      %s3999 = smul.addr %s3998, 8
      %s4000 = scalar_lea.vmem %s6, %s3999
      // Predicated region
      $region41: #{tpu_custom_call.1} parent=39 // pred_check
        %p4001 = pneg %p151
      $region42: #{tpu_custom_call.1} parent=39 // pred_check_branch
        %4003 = sbr.rel (%p4001) target = $region44
      $region43: #{tpu_custom_call.1} parent=39 // pred_region
        _
      $region44: #{tpu_custom_call.1} parent=39 // pred_fallthru
        _
      // Predicated region
      $region45: #{tpu_custom_call.1} parent=39 // pred_check
        %p4004 = pneg %p177
      $region46: #{tpu_custom_call.1} parent=39 // pred_check_branch
        %4006 = sbr.rel (%p4004) target = $region48
      $region47: #{tpu_custom_call.1} parent=39 // pred_region
        _
      $region48: #{tpu_custom_call.1} parent=39 // pred_fallthru
        _
    $region40: #{tpu_custom_call.1} parent=5 // pred_fallthru
      _
    %p4007 = scmp.le.s32.totalorder 2, %s13
    // Predicated region
    $region49: #{tpu_custom_call.1} parent=5 // pred_check
      %p4008 = pneg %p4007
    $region50: #{tpu_custom_call.1} parent=5 // pred_check_branch
      %4010 = sbr.rel (%p4008) target = $region52
    $region51: #{tpu_custom_call.1} parent=5 // pred_region
      %s4011 = ssub.s32 %s13, 2
      // Predicated region
      $region53: #{tpu_custom_call.1} parent=51 // pred_check
        %p4012 = pneg %p157
      $region54: #{tpu_custom_call.1} parent=51 // pred_check_branch
        %4014 = sbr.rel (%p4012) target = $region56
      $region55: #{tpu_custom_call.1} parent=51 // pred_region
        %p4015 = scmp.lt.s32.totalorder %s19, 1
        %s4016 = scalar_select %p4015, %s19, 1
        %s4017 = smul.addr %s4016, 32
        %s4018 = smul.addr %s4017, 8
        %s4019 = scalar_lea.vmem %s5, %s4018
      $region56: #{tpu_custom_call.1} parent=51 // pred_fallthru
        _
      // Predicated region
      $region57: #{tpu_custom_call.1} parent=51 // pred_check
        %p4020 = pneg %p183
      $region58: #{tpu_custom_call.1} parent=51 // pred_check_branch
        %4022 = sbr.rel (%p4020) target = $region60
      $region59: #{tpu_custom_call.1} parent=51 // pred_region
        %p4023 = scmp.lt.s32.totalorder %s19, 1
        %s4024 = scalar_select %p4023, %s19, 1
        %s4025 = smul.addr %s4024, 32
        %s4026 = smul.addr %s4025, 8
        %s4027 = scalar_lea.vmem %s6, %s4026
      $region60: #{tpu_custom_call.1} parent=51 // pred_fallthru
        _
    $region52: #{tpu_custom_call.1} parent=5 // pred_fallthru
      _
  $region6: #{tpu_custom_call.1} parent=0 // loop_footer
    %s17 = sadd.s32 1, %s13
  $region7: #{tpu_custom_call.1} parent=0 // loop_footer_branch
    %12 = sbr.rel target = $region3
  $region8: #{tpu_custom_call.1} parent=0 // loop_exit
    _

</llo_original>
